<compile_context>
chip_gen: v7x
topology: tpu7x:2x2x1
jax: 0.10.0
libtpu: 0.0.40
codegen_flags: <defaults>
</compile_context>

<pallas_src>
import jax
import jax.numpy as jnp
from jax.experimental import pallas as pl
from jax.experimental.pallas import tpu as pltpu


def _make_upconv_kernel(c_in, c_out, stack, wp, tn):
    """3x3 conv on the flattened, padded, upsampled image (VPU, sublane-packed)."""
    halo = wp + 1                      # max |column shift| of a 3x3 tap
    rows = stack * c_out               # output sublanes used per step (8 when c_out=4)
    cols_per_step = stack * tn         # flattened output columns per grid step
    sub_win = tn + 2 * halo            # per-sub-tile input window (tile + halo)

    def kernel(x_ref, w_ref, b_ref, o_ref):
        # x_ref: (c_in, Mp) resident padded image (VMEM, constant block)
        # w_ref: (rows, c_in*9) f32 VMEM; column (ci*3+ki)*3+kj, row j*c_out+co
        # b_ref: (rows, 1) f32 VMEM
        # o_ref: (rows, tn) output tile; row j*c_out+co = channel co of sub-tile j
        i = pl.program_id(0)
        w_all = w_ref[...]                                   # hoisted, ~1 vreg
        acc = jnp.zeros((rows, tn), jnp.float32)
        for ci in range(c_in):
            # Build the per-channel stacked slab once: rows [j*c_out,(j+1)*c_out)
            # replicate sub-tile j's window -> full 8/8 sublane occupancy.
            parts = []
            for j in range(stack):
                start = pl.multiple_of(i * cols_per_step + j * tn, tn)
                row = x_ref[ci:ci + 1, pl.ds(start, sub_win)].astype(jnp.float32)
                parts.append(jnp.broadcast_to(row, (c_out, sub_win)))
            slab = parts[0] if stack == 1 else jnp.concatenate(parts, axis=0)
            # 9 taps = 9 lane-shifted slices of the packed slab + 9 slab FMAs.
            for ki in range(3):
                for kj in range(3):
                    s = halo + (ki - 1) * wp + (kj - 1)       # static, in [0, 2*halo]
                    idx = (ci * 3 + ki) * 3 + kj
                    w_col = w_all[:, idx:idx + 1]             # (rows, 1)
                    acc = acc + w_col * slab[:, s:s + tn]
        o_ref[...] = (acc + b_ref[...]).astype(o_ref.dtype)

    return kernel


def upsample_forward(x, weight, bias, *, tn=2048):
    """Upsample forward: nearest x2 then Conv2d(C, C_out, 3, padding=1).

    x:      (B, C, H, W)  NCHW
    weight: (C_out, C, 3, 3)  PyTorch Conv2d layout
    bias:   (C_out,)
    returns (B, C_out, 2H, 2W)
    """
    assert tn % 128 == 0
    b, c, h, w = x.shape
    c_out = weight.shape[0]
    assert weight.shape == (c_out, c, 3, 3)
    h2, w2 = 2 * h, 2 * w
    hp, wp = h2 + 2, w2 + 2                       # zero-padded (conv padding=1)
    halo = wp + 1

    # Sub-tile stacking factor: fill all 8 sublanes when c_out divides 8.
    stack = 8 // c_out if (c_out <= 8 and 8 % c_out == 0) else 1
    rows = stack * c_out
    cols_per_step = stack * tn

    # Fused XLA producer: transpose the *small* input, nearest-upsample, pad,
    # flatten -> one HBM write of the (C, B*Hp*Wp) padded image.
    xt = x.transpose(1, 0, 2, 3)                                    # (C,B,H,W)
    up = jnp.broadcast_to(xt[:, :, :, None, :, None],
                          (c, b, h, 2, w, 2)).reshape(c, b, h2, w2)
    up = jnp.pad(up, ((0, 0), (0, 0), (1, 1), (1, 1)))              # (C,B,Hp,Wp)
    m_total = b * hp * wp
    x_flat = up.reshape(c, m_total)

    # Lane padding: `halo` zeros in front (tap starts stay >= 0) and enough at
    # the back to cover the rounded-up grid plus the right halo.
    num_steps = pl.cdiv(m_total, cols_per_step)
    n_pad = num_steps * cols_per_step
    mp = n_pad + 2 * halo
    x_k = jnp.pad(x_flat, ((0, 0), (halo, mp - halo - m_total)))

    # Pre-arranged weight/bias arraylets (hoisted splats, review item 11):
    #   w_arr[j*c_out+co, (ci*3+ki)*3+kj] = weight[co, ci, ki, kj]
    wt = weight.astype(jnp.float32).transpose(1, 2, 3, 0).reshape(c * 9, c_out)
    w_arr = jnp.tile(wt, (1, stack)).T                              # (rows, c*9)
    b_arr = jnp.tile(bias.astype(jnp.float32), stack).reshape(rows, 1)

    kernel = _make_upconv_kernel(c, c_out, stack, wp, tn)

    y8 = pl.pallas_call(
        kernel,
        out_shape=jax.ShapeDtypeStruct((rows, num_steps * tn), x.dtype),
        grid_spec=pltpu.PrefetchScalarGridSpec(
            num_scalar_prefetch=0,
            grid=(num_steps,),
            in_specs=[
                # Whole padded image; constant block index -> fetched once.
                pl.BlockSpec((c, mp), lambda i: (0, 0)),
                pl.BlockSpec((rows, c * 9), lambda i: (0, 0)),      # weight cols
                pl.BlockSpec((rows, 1), lambda i: (0, 0)),          # bias col
            ],
            out_specs=pl.BlockSpec((rows, tn), lambda i: (0, i)),
        ),
        compiler_params=pltpu.CompilerParams(
            dimension_semantics=("parallel",),
            vmem_limit_bytes=64 * 1024 * 1024,
        ),
    )(x_k, w_arr, b_arr)

    # Undo the sub-tile stacking, crop the padded ring / rounding tail, return
    # NCHW.  All of this fuses into a single XLA copy/transpose pass.
    y_t = (y8.reshape(stack, c_out, num_steps, tn)
             .transpose(1, 2, 0, 3)
             .reshape(c_out, n_pad))
    y_full = y_t[:, :m_total].reshape(c_out, b, hp, wp)
    y = y_full[:, :, 1:1 + h2, 1:1 + w2].transpose(1, 0, 2, 3)
    return y


def upsample_ref(x, weight, bias):
    """Pure-JAX reference of the PyTorch forward (for verification)."""
    b, c, h, w = x.shape
    up = jnp.broadcast_to(x[:, :, :, None, :, None],
                          (b, c, h, 2, w, 2)).reshape(b, c, 2 * h, 2 * w)
    y = jax.lax.conv_general_dilated(
        up, weight, window_strides=(1, 1), padding=((1, 1), (1, 1)),
        dimension_numbers=("NCHW", "OIHW", "NCHW"))
    return y + bias[None, :, None, None]


if __name__ == "__main__":
    # Module config: dim=4, dim_out defaults to dim.
    dim = 4
    dim_out = dim
    B, H, W = 2, 16, 16

    key = jax.random.PRNGKey(0)
    kx, kw, kb = jax.random.split(key, 3)

    x = jax.random.normal(kx, (B, dim, H, W), dtype=jnp.float32)
    # Deterministic synthetic Conv2d(dim, dim_out, 3, padding=1) parameters.
    fan_in = dim * 3 * 3
    bound = 1.0 / (fan_in ** 0.5)
    weight = jax.random.uniform(kw, (dim_out, dim, 3, 3),
                                minval=-bound, maxval=bound, dtype=jnp.float32)
    bias = jax.random.uniform(kb, (dim_out,),
                              minval=-bound, maxval=bound, dtype=jnp.float32)

    y = jax.block_until_ready(upsample_forward(x, weight, bias))
    y_ref = upsample_ref(x, weight, bias)

    assert y.shape == (B, dim_out, 2 * H, 2 * W), y.shape
    assert jnp.allclose(y, y_ref, atol=1e-4, rtol=1e-4), "mismatch vs reference"
    print("KERNEL_OK")
</pallas_src>

<mosaic_0001>
module attributes {stable_mosaic.version = 11 : i64} {
  func.func @kernel(%arg0: i32, %arg1: memref<4x4166xf32, #tpu.memory_space<vmem>>, %arg2: memref<8x36xf32, #tpu.memory_space<vmem>>, %arg3: memref<8x1xf32, #tpu.memory_space<vmem>>, %arg4: memref<8x2048xf32, #tpu.memory_space<vmem>>) attributes {dimension_semantics = [#tpu.dimension_semantics<parallel>], iteration_bounds = array<i64: 1>, scalar_prefetch = 0 : i64, scratch_operands = 0 : i64, tpu.core_type = #tpu.core_type<tc>, window_params = [{pipeline_mode = #tpu.pipeline_mode<synchronous>, transform_indices = @transform_0, window_bounds = array<i64: 4, 4166>}, {pipeline_mode = #tpu.pipeline_mode<synchronous>, transform_indices = @transform_1, window_bounds = array<i64: 8, 36>}, {pipeline_mode = #tpu.pipeline_mode<synchronous>, transform_indices = @transform_2, window_bounds = array<i64: 8, 1>}, {transform_indices = @transform_3, window_bounds = array<i64: 8, 2048>}]} {
    %c0 = arith.constant 0 : index
    %c0_0 = arith.constant 0 : index
    %0 = vector.load %arg2[%c0, %c0_0] : memref<8x36xf32, #tpu.memory_space<vmem>>, vector<8x36xf32>
    %cst = arith.constant 0.000000e+00 : f32
    %1 = vector.broadcast %cst : f32 to vector<8x2048xf32>
    %c4096_i32 = arith.constant 4096 : i32
    %2 = arith.muli %arg0, %c4096_i32 : i32
    %c0_i32 = arith.constant 0 : i32
    %3 = arith.addi %2, %c0_i32 : i32
    %4 = tpu.assume_multiple %3, 2048 : i32
    %c0_1 = arith.constant 0 : index
    %5 = arith.index_cast %4 : i32 to index
    %6 = vector.load %arg1[%c0_1, %5] : memref<4x4166xf32, #tpu.memory_space<vmem>>, vector<1x2118xf32>
    %7 = vector.shape_cast %6 : vector<1x2118xf32> to vector<1x2118xf32>
    %8 = vector.broadcast %7 : vector<1x2118xf32> to vector<4x2118xf32>
    %c4096_i32_2 = arith.constant 4096 : i32
    %9 = arith.muli %arg0, %c4096_i32_2 : i32
    %c2048_i32 = arith.constant 2048 : i32
    %10 = arith.addi %9, %c2048_i32 : i32
    %11 = tpu.assume_multiple %10, 2048 : i32
    %c0_3 = arith.constant 0 : index
    %12 = arith.index_cast %11 : i32 to index
    %13 = vector.load %arg1[%c0_3, %12] : memref<4x4166xf32, #tpu.memory_space<vmem>>, vector<1x2118xf32>
    %14 = vector.shape_cast %13 : vector<1x2118xf32> to vector<1x2118xf32>
    %15 = vector.broadcast %14 : vector<1x2118xf32> to vector<4x2118xf32>
    %16 = tpu.concatenate %8, %15 in 0 : vector<4x2118xf32>, vector<4x2118xf32> -> vector<8x2118xf32>
    %17 = vector.extract_strided_slice %0 {offsets = [0, 0], sizes = [8, 1], strides = [1, 1]} : vector<8x36xf32> to vector<8x1xf32>
    %18 = vector.extract_strided_slice %16 {offsets = [0, 0], sizes = [8, 2048], strides = [1, 1]} : vector<8x2118xf32> to vector<8x2048xf32>
    %19 = vector.broadcast %17 : vector<8x1xf32> to vector<8x2048xf32>
    %20 = arith.mulf %19, %18 : vector<8x2048xf32>
    %21 = arith.addf %1, %20 : vector<8x2048xf32>
    %22 = vector.extract_strided_slice %0 {offsets = [0, 1], sizes = [8, 1], strides = [1, 1]} : vector<8x36xf32> to vector<8x1xf32>
    %23 = vector.extract_strided_slice %16 {offsets = [0, 1], sizes = [8, 2048], strides = [1, 1]} : vector<8x2118xf32> to vector<8x2048xf32>
    %24 = vector.broadcast %22 : vector<8x1xf32> to vector<8x2048xf32>
    %25 = arith.mulf %24, %23 : vector<8x2048xf32>
    %26 = arith.addf %21, %25 : vector<8x2048xf32>
    %27 = vector.extract_strided_slice %0 {offsets = [0, 2], sizes = [8, 1], strides = [1, 1]} : vector<8x36xf32> to vector<8x1xf32>
    %28 = vector.extract_strided_slice %16 {offsets = [0, 2], sizes = [8, 2048], strides = [1, 1]} : vector<8x2118xf32> to vector<8x2048xf32>
    %29 = vector.broadcast %27 : vector<8x1xf32> to vector<8x2048xf32>
    %30 = arith.mulf %29, %28 : vector<8x2048xf32>
    %31 = arith.addf %26, %30 : vector<8x2048xf32>
    %32 = vector.extract_strided_slice %0 {offsets = [0, 3], sizes = [8, 1], strides = [1, 1]} : vector<8x36xf32> to vector<8x1xf32>
    %33 = vector.extract_strided_slice %16 {offsets = [0, 34], sizes = [8, 2048], strides = [1, 1]} : vector<8x2118xf32> to vector<8x2048xf32>
    %34 = vector.broadcast %32 : vector<8x1xf32> to vector<8x2048xf32>
    %35 = arith.mulf %34, %33 : vector<8x2048xf32>
    %36 = arith.addf %31, %35 : vector<8x2048xf32>
    %37 = vector.extract_strided_slice %0 {offsets = [0, 4], sizes = [8, 1], strides = [1, 1]} : vector<8x36xf32> to vector<8x1xf32>
    %38 = vector.extract_strided_slice %16 {offsets = [0, 35], sizes = [8, 2048], strides = [1, 1]} : vector<8x2118xf32> to vector<8x2048xf32>
    %39 = vector.broadcast %37 : vector<8x1xf32> to vector<8x2048xf32>
    %40 = arith.mulf %39, %38 : vector<8x2048xf32>
    %41 = arith.addf %36, %40 : vector<8x2048xf32>
    %42 = vector.extract_strided_slice %0 {offsets = [0, 5], sizes = [8, 1], strides = [1, 1]} : vector<8x36xf32> to vector<8x1xf32>
    %43 = vector.extract_strided_slice %16 {offsets = [0, 36], sizes = [8, 2048], strides = [1, 1]} : vector<8x2118xf32> to vector<8x2048xf32>
    %44 = vector.broadcast %42 : vector<8x1xf32> to vector<8x2048xf32>
    %45 = arith.mulf %44, %43 : vector<8x2048xf32>
    %46 = arith.addf %41, %45 : vector<8x2048xf32>
    %47 = vector.extract_strided_slice %0 {offsets = [0, 6], sizes = [8, 1], strides = [1, 1]} : vector<8x36xf32> to vector<8x1xf32>
    %48 = vector.extract_strided_slice %16 {offsets = [0, 68], sizes = [8, 2048], strides = [1, 1]} : vector<8x2118xf32> to vector<8x2048xf32>
    %49 = vector.broadcast %47 : vector<8x1xf32> to vector<8x2048xf32>
    %50 = arith.mulf %49, %48 : vector<8x2048xf32>
    %51 = arith.addf %46, %50 : vector<8x2048xf32>
    %52 = vector.extract_strided_slice %0 {offsets = [0, 7], sizes = [8, 1], strides = [1, 1]} : vector<8x36xf32> to vector<8x1xf32>
    %53 = vector.extract_strided_slice %16 {offsets = [0, 69], sizes = [8, 2048], strides = [1, 1]} : vector<8x2118xf32> to vector<8x2048xf32>
    %54 = vector.broadcast %52 : vector<8x1xf32> to vector<8x2048xf32>
    %55 = arith.mulf %54, %53 : vector<8x2048xf32>
    %56 = arith.addf %51, %55 : vector<8x2048xf32>
    %57 = vector.extract_strided_slice %0 {offsets = [0, 8], sizes = [8, 1], strides = [1, 1]} : vector<8x36xf32> to vector<8x1xf32>
    %58 = vector.extract_strided_slice %16 {offsets = [0, 70], sizes = [8, 2048], strides = [1, 1]} : vector<8x2118xf32> to vector<8x2048xf32>
    %59 = vector.broadcast %57 : vector<8x1xf32> to vector<8x2048xf32>
    %60 = arith.mulf %59, %58 : vector<8x2048xf32>
    %61 = arith.addf %56, %60 : vector<8x2048xf32>
    %c4096_i32_4 = arith.constant 4096 : i32
    %62 = arith.muli %arg0, %c4096_i32_4 : i32
    %c0_i32_5 = arith.constant 0 : i32
    %63 = arith.addi %62, %c0_i32_5 : i32
    %64 = tpu.assume_multiple %63, 2048 : i32
    %c1 = arith.constant 1 : index
    %65 = arith.index_cast %64 : i32 to index
    %66 = vector.load %arg1[%c1, %65] : memref<4x4166xf32, #tpu.memory_space<vmem>>, vector<1x2118xf32>
    %67 = vector.shape_cast %66 : vector<1x2118xf32> to vector<1x2118xf32>
    %68 = vector.broadcast %67 : vector<1x2118xf32> to vector<4x2118xf32>
    %c4096_i32_6 = arith.constant 4096 : i32
    %69 = arith.muli %arg0, %c4096_i32_6 : i32
    %c2048_i32_7 = arith.constant 2048 : i32
    %70 = arith.addi %69, %c2048_i32_7 : i32
    %71 = tpu.assume_multiple %70, 2048 : i32
    %c1_8 = arith.constant 1 : index
    %72 = arith.index_cast %71 : i32 to index
    %73 = vector.load %arg1[%c1_8, %72] : memref<4x4166xf32, #tpu.memory_space<vmem>>, vector<1x2118xf32>
    %74 = vector.shape_cast %73 : vector<1x2118xf32> to vector<1x2118xf32>
    %75 = vector.broadcast %74 : vector<1x2118xf32> to vector<4x2118xf32>
    %76 = tpu.concatenate %68, %75 in 0 : vector<4x2118xf32>, vector<4x2118xf32> -> vector<8x2118xf32>
    %77 = vector.extract_strided_slice %0 {offsets = [0, 9], sizes = [8, 1], strides = [1, 1]} : vector<8x36xf32> to vector<8x1xf32>
    %78 = vector.extract_strided_slice %76 {offsets = [0, 0], sizes = [8, 2048], strides = [1, 1]} : vector<8x2118xf32> to vector<8x2048xf32>
    %79 = vector.broadcast %77 : vector<8x1xf32> to vector<8x2048xf32>
    %80 = arith.mulf %79, %78 : vector<8x2048xf32>
    %81 = arith.addf %61, %80 : vector<8x2048xf32>
    %82 = vector.extract_strided_slice %0 {offsets = [0, 10], sizes = [8, 1], strides = [1, 1]} : vector<8x36xf32> to vector<8x1xf32>
    %83 = vector.extract_strided_slice %76 {offsets = [0, 1], sizes = [8, 2048], strides = [1, 1]} : vector<8x2118xf32> to vector<8x2048xf32>
    %84 = vector.broadcast %82 : vector<8x1xf32> to vector<8x2048xf32>
    %85 = arith.mulf %84, %83 : vector<8x2048xf32>
    %86 = arith.addf %81, %85 : vector<8x2048xf32>
    %87 = vector.extract_strided_slice %0 {offsets = [0, 11], sizes = [8, 1], strides = [1, 1]} : vector<8x36xf32> to vector<8x1xf32>
    %88 = vector.extract_strided_slice %76 {offsets = [0, 2], sizes = [8, 2048], strides = [1, 1]} : vector<8x2118xf32> to vector<8x2048xf32>
    %89 = vector.broadcast %87 : vector<8x1xf32> to vector<8x2048xf32>
    %90 = arith.mulf %89, %88 : vector<8x2048xf32>
    %91 = arith.addf %86, %90 : vector<8x2048xf32>
    %92 = vector.extract_strided_slice %0 {offsets = [0, 12], sizes = [8, 1], strides = [1, 1]} : vector<8x36xf32> to vector<8x1xf32>
    %93 = vector.extract_strided_slice %76 {offsets = [0, 34], sizes = [8, 2048], strides = [1, 1]} : vector<8x2118xf32> to vector<8x2048xf32>
    %94 = vector.broadcast %92 : vector<8x1xf32> to vector<8x2048xf32>
    %95 = arith.mulf %94, %93 : vector<8x2048xf32>
    %96 = arith.addf %91, %95 : vector<8x2048xf32>
    %97 = vector.extract_strided_slice %0 {offsets = [0, 13], sizes = [8, 1], strides = [1, 1]} : vector<8x36xf32> to vector<8x1xf32>
    %98 = vector.extract_strided_slice %76 {offsets = [0, 35], sizes = [8, 2048], strides = [1, 1]} : vector<8x2118xf32> to vector<8x2048xf32>
    %99 = vector.broadcast %97 : vector<8x1xf32> to vector<8x2048xf32>
    %100 = arith.mulf %99, %98 : vector<8x2048xf32>
    %101 = arith.addf %96, %100 : vector<8x2048xf32>
    %102 = vector.extract_strided_slice %0 {offsets = [0, 14], sizes = [8, 1], strides = [1, 1]} : vector<8x36xf32> to vector<8x1xf32>
    %103 = vector.extract_strided_slice %76 {offsets = [0, 36], sizes = [8, 2048], strides = [1, 1]} : vector<8x2118xf32> to vector<8x2048xf32>
    %104 = vector.broadcast %102 : vector<8x1xf32> to vector<8x2048xf32>
    %105 = arith.mulf %104, %103 : vector<8x2048xf32>
    %106 = arith.addf %101, %105 : vector<8x2048xf32>
    %107 = vector.extract_strided_slice %0 {offsets = [0, 15], sizes = [8, 1], strides = [1, 1]} : vector<8x36xf32> to vector<8x1xf32>
    %108 = vector.extract_strided_slice %76 {offsets = [0, 68], sizes = [8, 2048], strides = [1, 1]} : vector<8x2118xf32> to vector<8x2048xf32>
    %109 = vector.broadcast %107 : vector<8x1xf32> to vector<8x2048xf32>
    %110 = arith.mulf %109, %108 : vector<8x2048xf32>
    %111 = arith.addf %106, %110 : vector<8x2048xf32>
    %112 = vector.extract_strided_slice %0 {offsets = [0, 16], sizes = [8, 1], strides = [1, 1]} : vector<8x36xf32> to vector<8x1xf32>
    %113 = vector.extract_strided_slice %76 {offsets = [0, 69], sizes = [8, 2048], strides = [1, 1]} : vector<8x2118xf32> to vector<8x2048xf32>
    %114 = vector.broadcast %112 : vector<8x1xf32> to vector<8x2048xf32>
    %115 = arith.mulf %114, %113 : vector<8x2048xf32>
    %116 = arith.addf %111, %115 : vector<8x2048xf32>
    %117 = vector.extract_strided_slice %0 {offsets = [0, 17], sizes = [8, 1], strides = [1, 1]} : vector<8x36xf32> to vector<8x1xf32>
    %118 = vector.extract_strided_slice %76 {offsets = [0, 70], sizes = [8, 2048], strides = [1, 1]} : vector<8x2118xf32> to vector<8x2048xf32>
    %119 = vector.broadcast %117 : vector<8x1xf32> to vector<8x2048xf32>
    %120 = arith.mulf %119, %118 : vector<8x2048xf32>
    %121 = arith.addf %116, %120 : vector<8x2048xf32>
    %c4096_i32_9 = arith.constant 4096 : i32
    %122 = arith.muli %arg0, %c4096_i32_9 : i32
    %c0_i32_10 = arith.constant 0 : i32
    %123 = arith.addi %122, %c0_i32_10 : i32
    %124 = tpu.assume_multiple %123, 2048 : i32
    %c2 = arith.constant 2 : index
    %125 = arith.index_cast %124 : i32 to index
    %126 = vector.load %arg1[%c2, %125] : memref<4x4166xf32, #tpu.memory_space<vmem>>, vector<1x2118xf32>
    %127 = vector.shape_cast %126 : vector<1x2118xf32> to vector<1x2118xf32>
    %128 = vector.broadcast %127 : vector<1x2118xf32> to vector<4x2118xf32>
    %c4096_i32_11 = arith.constant 4096 : i32
    %129 = arith.muli %arg0, %c4096_i32_11 : i32
    %c2048_i32_12 = arith.constant 2048 : i32
    %130 = arith.addi %129, %c2048_i32_12 : i32
    %131 = tpu.assume_multiple %130, 2048 : i32
    %c2_13 = arith.constant 2 : index
    %132 = arith.index_cast %131 : i32 to index
    %133 = vector.load %arg1[%c2_13, %132] : memref<4x4166xf32, #tpu.memory_space<vmem>>, vector<1x2118xf32>
    %134 = vector.shape_cast %133 : vector<1x2118xf32> to vector<1x2118xf32>
    %135 = vector.broadcast %134 : vector<1x2118xf32> to vector<4x2118xf32>
    %136 = tpu.concatenate %128, %135 in 0 : vector<4x2118xf32>, vector<4x2118xf32> -> vector<8x2118xf32>
    %137 = vector.extract_strided_slice %0 {offsets = [0, 18], sizes = [8, 1], strides = [1, 1]} : vector<8x36xf32> to vector<8x1xf32>
    %138 = vector.extract_strided_slice %136 {offsets = [0, 0], sizes = [8, 2048], strides = [1, 1]} : vector<8x2118xf32> to vector<8x2048xf32>
    %139 = vector.broadcast %137 : vector<8x1xf32> to vector<8x2048xf32>
    %140 = arith.mulf %139, %138 : vector<8x2048xf32>
    %141 = arith.addf %121, %140 : vector<8x2048xf32>
    %142 = vector.extract_strided_slice %0 {offsets = [0, 19], sizes = [8, 1], strides = [1, 1]} : vector<8x36xf32> to vector<8x1xf32>
    %143 = vector.extract_strided_slice %136 {offsets = [0, 1], sizes = [8, 2048], strides = [1, 1]} : vector<8x2118xf32> to vector<8x2048xf32>
    %144 = vector.broadcast %142 : vector<8x1xf32> to vector<8x2048xf32>
    %145 = arith.mulf %144, %143 : vector<8x2048xf32>
    %146 = arith.addf %141, %145 : vector<8x2048xf32>
    %147 = vector.extract_strided_slice %0 {offsets = [0, 20], sizes = [8, 1], strides = [1, 1]} : vector<8x36xf32> to vector<8x1xf32>
    %148 = vector.extract_strided_slice %136 {offsets = [0, 2], sizes = [8, 2048], strides = [1, 1]} : vector<8x2118xf32> to vector<8x2048xf32>
    %149 = vector.broadcast %147 : vector<8x1xf32> to vector<8x2048xf32>
    %150 = arith.mulf %149, %148 : vector<8x2048xf32>
    %151 = arith.addf %146, %150 : vector<8x2048xf32>
    %152 = vector.extract_strided_slice %0 {offsets = [0, 21], sizes = [8, 1], strides = [1, 1]} : vector<8x36xf32> to vector<8x1xf32>
    %153 = vector.extract_strided_slice %136 {offsets = [0, 34], sizes = [8, 2048], strides = [1, 1]} : vector<8x2118xf32> to vector<8x2048xf32>
    %154 = vector.broadcast %152 : vector<8x1xf32> to vector<8x2048xf32>
    %155 = arith.mulf %154, %153 : vector<8x2048xf32>
    %156 = arith.addf %151, %155 : vector<8x2048xf32>
    %157 = vector.extract_strided_slice %0 {offsets = [0, 22], sizes = [8, 1], strides = [1, 1]} : vector<8x36xf32> to vector<8x1xf32>
    %158 = vector.extract_strided_slice %136 {offsets = [0, 35], sizes = [8, 2048], strides = [1, 1]} : vector<8x2118xf32> to vector<8x2048xf32>
    %159 = vector.broadcast %157 : vector<8x1xf32> to vector<8x2048xf32>
    %160 = arith.mulf %159, %158 : vector<8x2048xf32>
    %161 = arith.addf %156, %160 : vector<8x2048xf32>
    %162 = vector.extract_strided_slice %0 {offsets = [0, 23], sizes = [8, 1], strides = [1, 1]} : vector<8x36xf32> to vector<8x1xf32>
    %163 = vector.extract_strided_slice %136 {offsets = [0, 36], sizes = [8, 2048], strides = [1, 1]} : vector<8x2118xf32> to vector<8x2048xf32>
    %164 = vector.broadcast %162 : vector<8x1xf32> to vector<8x2048xf32>
    %165 = arith.mulf %164, %163 : vector<8x2048xf32>
    %166 = arith.addf %161, %165 : vector<8x2048xf32>
    %167 = vector.extract_strided_slice %0 {offsets = [0, 24], sizes = [8, 1], strides = [1, 1]} : vector<8x36xf32> to vector<8x1xf32>
    %168 = vector.extract_strided_slice %136 {offsets = [0, 68], sizes = [8, 2048], strides = [1, 1]} : vector<8x2118xf32> to vector<8x2048xf32>
    %169 = vector.broadcast %167 : vector<8x1xf32> to vector<8x2048xf32>
    %170 = arith.mulf %169, %168 : vector<8x2048xf32>
    %171 = arith.addf %166, %170 : vector<8x2048xf32>
    %172 = vector.extract_strided_slice %0 {offsets = [0, 25], sizes = [8, 1], strides = [1, 1]} : vector<8x36xf32> to vector<8x1xf32>
    %173 = vector.extract_strided_slice %136 {offsets = [0, 69], sizes = [8, 2048], strides = [1, 1]} : vector<8x2118xf32> to vector<8x2048xf32>
    %174 = vector.broadcast %172 : vector<8x1xf32> to vector<8x2048xf32>
    %175 = arith.mulf %174, %173 : vector<8x2048xf32>
    %176 = arith.addf %171, %175 : vector<8x2048xf32>
    %177 = vector.extract_strided_slice %0 {offsets = [0, 26], sizes = [8, 1], strides = [1, 1]} : vector<8x36xf32> to vector<8x1xf32>
    %178 = vector.extract_strided_slice %136 {offsets = [0, 70], sizes = [8, 2048], strides = [1, 1]} : vector<8x2118xf32> to vector<8x2048xf32>
    %179 = vector.broadcast %177 : vector<8x1xf32> to vector<8x2048xf32>
    %180 = arith.mulf %179, %178 : vector<8x2048xf32>
    %181 = arith.addf %176, %180 : vector<8x2048xf32>
    %c4096_i32_14 = arith.constant 4096 : i32
    %182 = arith.muli %arg0, %c4096_i32_14 : i32
    %c0_i32_15 = arith.constant 0 : i32
    %183 = arith.addi %182, %c0_i32_15 : i32
    %184 = tpu.assume_multiple %183, 2048 : i32
    %c3 = arith.constant 3 : index
    %185 = arith.index_cast %184 : i32 to index
    %186 = vector.load %arg1[%c3, %185] : memref<4x4166xf32, #tpu.memory_space<vmem>>, vector<1x2118xf32>
    %187 = vector.shape_cast %186 : vector<1x2118xf32> to vector<1x2118xf32>
    %188 = vector.broadcast %187 : vector<1x2118xf32> to vector<4x2118xf32>
    %c4096_i32_16 = arith.constant 4096 : i32
    %189 = arith.muli %arg0, %c4096_i32_16 : i32
    %c2048_i32_17 = arith.constant 2048 : i32
    %190 = arith.addi %189, %c2048_i32_17 : i32
    %191 = tpu.assume_multiple %190, 2048 : i32
    %c3_18 = arith.constant 3 : index
    %192 = arith.index_cast %191 : i32 to index
    %193 = vector.load %arg1[%c3_18, %192] : memref<4x4166xf32, #tpu.memory_space<vmem>>, vector<1x2118xf32>
    %194 = vector.shape_cast %193 : vector<1x2118xf32> to vector<1x2118xf32>
    %195 = vector.broadcast %194 : vector<1x2118xf32> to vector<4x2118xf32>
    %196 = tpu.concatenate %188, %195 in 0 : vector<4x2118xf32>, vector<4x2118xf32> -> vector<8x2118xf32>
    %197 = vector.extract_strided_slice %0 {offsets = [0, 27], sizes = [8, 1], strides = [1, 1]} : vector<8x36xf32> to vector<8x1xf32>
    %198 = vector.extract_strided_slice %196 {offsets = [0, 0], sizes = [8, 2048], strides = [1, 1]} : vector<8x2118xf32> to vector<8x2048xf32>
    %199 = vector.broadcast %197 : vector<8x1xf32> to vector<8x2048xf32>
    %200 = arith.mulf %199, %198 : vector<8x2048xf32>
    %201 = arith.addf %181, %200 : vector<8x2048xf32>
    %202 = vector.extract_strided_slice %0 {offsets = [0, 28], sizes = [8, 1], strides = [1, 1]} : vector<8x36xf32> to vector<8x1xf32>
    %203 = vector.extract_strided_slice %196 {offsets = [0, 1], sizes = [8, 2048], strides = [1, 1]} : vector<8x2118xf32> to vector<8x2048xf32>
    %204 = vector.broadcast %202 : vector<8x1xf32> to vector<8x2048xf32>
    %205 = arith.mulf %204, %203 : vector<8x2048xf32>
    %206 = arith.addf %201, %205 : vector<8x2048xf32>
    %207 = vector.extract_strided_slice %0 {offsets = [0, 29], sizes = [8, 1], strides = [1, 1]} : vector<8x36xf32> to vector<8x1xf32>
    %208 = vector.extract_strided_slice %196 {offsets = [0, 2], sizes = [8, 2048], strides = [1, 1]} : vector<8x2118xf32> to vector<8x2048xf32>
    %209 = vector.broadcast %207 : vector<8x1xf32> to vector<8x2048xf32>
    %210 = arith.mulf %209, %208 : vector<8x2048xf32>
    %211 = arith.addf %206, %210 : vector<8x2048xf32>
    %212 = vector.extract_strided_slice %0 {offsets = [0, 30], sizes = [8, 1], strides = [1, 1]} : vector<8x36xf32> to vector<8x1xf32>
    %213 = vector.extract_strided_slice %196 {offsets = [0, 34], sizes = [8, 2048], strides = [1, 1]} : vector<8x2118xf32> to vector<8x2048xf32>
    %214 = vector.broadcast %212 : vector<8x1xf32> to vector<8x2048xf32>
    %215 = arith.mulf %214, %213 : vector<8x2048xf32>
    %216 = arith.addf %211, %215 : vector<8x2048xf32>
    %217 = vector.extract_strided_slice %0 {offsets = [0, 31], sizes = [8, 1], strides = [1, 1]} : vector<8x36xf32> to vector<8x1xf32>
    %218 = vector.extract_strided_slice %196 {offsets = [0, 35], sizes = [8, 2048], strides = [1, 1]} : vector<8x2118xf32> to vector<8x2048xf32>
    %219 = vector.broadcast %217 : vector<8x1xf32> to vector<8x2048xf32>
    %220 = arith.mulf %219, %218 : vector<8x2048xf32>
    %221 = arith.addf %216, %220 : vector<8x2048xf32>
    %222 = vector.extract_strided_slice %0 {offsets = [0, 32], sizes = [8, 1], strides = [1, 1]} : vector<8x36xf32> to vector<8x1xf32>
    %223 = vector.extract_strided_slice %196 {offsets = [0, 36], sizes = [8, 2048], strides = [1, 1]} : vector<8x2118xf32> to vector<8x2048xf32>
    %224 = vector.broadcast %222 : vector<8x1xf32> to vector<8x2048xf32>
    %225 = arith.mulf %224, %223 : vector<8x2048xf32>
    %226 = arith.addf %221, %225 : vector<8x2048xf32>
    %227 = vector.extract_strided_slice %0 {offsets = [0, 33], sizes = [8, 1], strides = [1, 1]} : vector<8x36xf32> to vector<8x1xf32>
    %228 = vector.extract_strided_slice %196 {offsets = [0, 68], sizes = [8, 2048], strides = [1, 1]} : vector<8x2118xf32> to vector<8x2048xf32>
    %229 = vector.broadcast %227 : vector<8x1xf32> to vector<8x2048xf32>
    %230 = arith.mulf %229, %228 : vector<8x2048xf32>
    %231 = arith.addf %226, %230 : vector<8x2048xf32>
    %232 = vector.extract_strided_slice %0 {offsets = [0, 34], sizes = [8, 1], strides = [1, 1]} : vector<8x36xf32> to vector<8x1xf32>
    %233 = vector.extract_strided_slice %196 {offsets = [0, 69], sizes = [8, 2048], strides = [1, 1]} : vector<8x2118xf32> to vector<8x2048xf32>
    %234 = vector.broadcast %232 : vector<8x1xf32> to vector<8x2048xf32>
    %235 = arith.mulf %234, %233 : vector<8x2048xf32>
    %236 = arith.addf %231, %235 : vector<8x2048xf32>
    %237 = vector.extract_strided_slice %0 {offsets = [0, 35], sizes = [8, 1], strides = [1, 1]} : vector<8x36xf32> to vector<8x1xf32>
    %238 = vector.extract_strided_slice %196 {offsets = [0, 70], sizes = [8, 2048], strides = [1, 1]} : vector<8x2118xf32> to vector<8x2048xf32>
    %239 = vector.broadcast %237 : vector<8x1xf32> to vector<8x2048xf32>
    %240 = arith.mulf %239, %238 : vector<8x2048xf32>
    %241 = arith.addf %236, %240 : vector<8x2048xf32>
    %c0_19 = arith.constant 0 : index
    %c0_20 = arith.constant 0 : index
    %242 = vector.load %arg3[%c0_19, %c0_20] : memref<8x1xf32, #tpu.memory_space<vmem>>, vector<8x1xf32>
    %243 = vector.broadcast %242 : vector<8x1xf32> to vector<8x2048xf32>
    %244 = arith.addf %241, %243 : vector<8x2048xf32>
    %c0_21 = arith.constant 0 : index
    %c0_22 = arith.constant 0 : index
    %245 = vector.load %arg4[%c0_21, %c0_22] : memref<8x2048xf32, #tpu.memory_space<vmem>>, vector<8x2048xf32>
    tpu.vector_store %arg4[%c0_21, %c0_22], %244 {strides = array<i32>} : memref<8x2048xf32, #tpu.memory_space<vmem>>, vector<8x2048xf32>,
    return
  }
  func.func @transform_0(%arg0: i32) -> (i32, i32) {
    %c0_i32 = arith.constant 0 : i32
    %c0_i32_0 = arith.constant 0 : i32
    %c0_i32_1 = arith.constant 0 : i32
    return %c0_i32, %c0_i32_0 : i32, i32
  }
  func.func @transform_1(%arg0: i32) -> (i32, i32) {
    %c0_i32 = arith.constant 0 : i32
    %c0_i32_0 = arith.constant 0 : i32
    %c0_i32_1 = arith.constant 0 : i32
    return %c0_i32, %c0_i32_0 : i32, i32
  }
  func.func @transform_2(%arg0: i32) -> (i32, i32) {
    %c0_i32 = arith.constant 0 : i32
    %c0_i32_0 = arith.constant 0 : i32
    %c0_i32_1 = arith.constant 0 : i32
    return %c0_i32, %c0_i32_0 : i32, i32
  }
  func.func @transform_3(%arg0: i32) -> (i32, i32) {
    %c0_i32 = arith.constant 0 : i32
    %c0_i32_0 = arith.constant 0 : i32
    return %c0_i32, %arg0 : i32, i32
  }
}

</mosaic_0001>

<llo_original>
// kernel: tpu_custom_call.1
$region0: #{tpu_custom_call.1}
  #allocation0 [shape = 'u32[]', space=smem, size = 0x4, offset = 0x4, fixed_abs, tag = 'smem constant byte address 0x4 - core index']
  #allocation1 [shape = 'u32[144,128]{1,0:T(1,128)}', space=vmem, size = 0x12000, scoped, tag = 'internal scratch']
  %s0 = inlined_call_operand.hbm [shape: f32[4,4166], index: 0, kind: input, shape index: {}]
  %s1 = inlined_call_operand.hbm [shape: f32[8,36], index: 1, kind: input, shape index: {}]
  %s2 = inlined_call_operand.hbm [shape: f32[8,1], index: 2, kind: input, shape index: {}]
  %s3 = inlined_call_operand.hbm [shape: f32[8,2048], index: 3, kind: output, shape index: {}]
  %s4 = sld [smem:[#allocation0]]
  $region34: #{tpu_custom_call.1} parent=0
    _
  %s6 = ssub.s32 1, %s4
  %s7 = scalar_select 0, %s6, %s4
  $region1: #{tpu_custom_call.1} parent=0
    #allocation2 [shape = 'u8[67584]{0}', space=vmem, size = 0x10800, scoped, tag = 'input window, operand 0, single buffered']
    #allocation3 [shape = 's32[1]{0}', space=sflag, size = 0x4, scoped, tag = 'scoped memory for tpu_custom_call.1']
    #allocation4 [shape = 's32[1]{0}', space=sflag, size = 0x4, scoped, tag = 'scoped memory for tpu_custom_call.1']
    #allocation5 [shape = 'u8[4096]{0}', space=vmem, size = 0x1000, scoped, tag = 'input window, operand 1, single buffered']
    #allocation6 [shape = 's32[1]{0}', space=sflag, size = 0x4, scoped, tag = 'scoped memory for tpu_custom_call.1']
    #allocation7 [shape = 'u8[4096]{0}', space=vmem, size = 0x1000, scoped, tag = 'input window, operand 2, single buffered']
    #allocation8 [shape = 'u8[65536]{0}', space=vmem, size = 0x10000, scoped, tag = 'output window, operand 0, single buffered']
    %8 = vsyncpa [#allocation3], 0
    %9 = vsyncpa [#allocation6], 0
    %10 = vsyncpa [#allocation4], 0
    // Predicated region
    $region2: #{tpu_custom_call.1} parent=1 // pred_check
      _
    $region3: #{tpu_custom_call.1} parent=1 // pred_check_branch
      %12 = sbr.rel (0) target = $region5
    $region4: #{tpu_custom_call.1} parent=1 // pred_region
      %s14 = ssub.s32 2112, 2112
      %15 = vsyncadd [#allocation3], %s14
      %s17 = sshll.u32 [#allocation2], 4
      %s18 = int_to_ptr.vmem [resolvable:$true] %s17
      %20 = dma.hbm_to_vmem [thread:$0]  %s0, 2112, %s18, [#allocation3]
    $region5: #{tpu_custom_call.1} parent=1 // pred_fallthru
      _
    // Predicated region
    $region6: #{tpu_custom_call.1} parent=1 // pred_check
      _
    $region7: #{tpu_custom_call.1} parent=1 // pred_check_branch
      %22 = sbr.rel (0) target = $region9
    $region8: #{tpu_custom_call.1} parent=1 // pred_region
      %s24 = ssub.s32 128, 128
      %25 = vsyncadd [#allocation6], %s24
      %s27 = sshll.u32 [#allocation5], 4
      %s28 = int_to_ptr.vmem [resolvable:$true] %s27
      %30 = dma.hbm_to_vmem [thread:$0]  %s1, 128, %s28, [#allocation6]
    $region9: #{tpu_custom_call.1} parent=1 // pred_fallthru
      _
    // Predicated region
    $region10: #{tpu_custom_call.1} parent=1 // pred_check
      _
    $region11: #{tpu_custom_call.1} parent=1 // pred_check_branch
      %32 = sbr.rel (0) target = $region13
    $region12: #{tpu_custom_call.1} parent=1 // pred_region
      %s34 = ssub.s32 128, 128
      %35 = vsyncadd [#allocation6], %s34
      %s37 = sshll.u32 [#allocation7], 4
      %s38 = int_to_ptr.vmem [resolvable:$true] %s37
      %40 = dma.hbm_to_vmem [thread:$0]  %s2, 128, %s38, [#allocation6]
    $region13: #{tpu_custom_call.1} parent=1 // pred_fallthru
      _
    // Predicated region
    $region14: #{tpu_custom_call.1} parent=1 // pred_check
      _
    $region15: #{tpu_custom_call.1} parent=1 // pred_check_branch
      %42 = sbr.rel (0) target = $region17
    $region16: #{tpu_custom_call.1} parent=1 // pred_region
      %43 = dma.done [#allocation3], 2112
    $region17: #{tpu_custom_call.1} parent=1 // pred_fallthru
      _
    // Predicated region
    $region18: #{tpu_custom_call.1} parent=1 // pred_check
      _
    $region19: #{tpu_custom_call.1} parent=1 // pred_check_branch
      %45 = sbr.rel (0) target = $region21
    $region20: #{tpu_custom_call.1} parent=1 // pred_region
      %46 = dma.done [#allocation6], 128
    $region21: #{tpu_custom_call.1} parent=1 // pred_fallthru
      _
    // Predicated region
    $region22: #{tpu_custom_call.1} parent=1 // pred_check
      _
    $region23: #{tpu_custom_call.1} parent=1 // pred_check_branch
      %48 = sbr.rel (0) target = $region25
    $region24: #{tpu_custom_call.1} parent=1 // pred_region
      %49 = dma.done [#allocation6], 128
    $region25: #{tpu_custom_call.1} parent=1 // pred_fallthru
      _
    %v50 = vld [vmem:[#allocation5] sm:$0xff]
    %s51 = smul.u32 0, 4096
    %s52 = sshra.s32 %s51, 7
    %s53 = sand.u32 %s51, 127
    %s54 = smul.addr %s52, 4
    %s55 = scalar_lea.vmem [#allocation2], %s54
    %v56 = vld [vmem:[%s55] ss:$4 sm:$0xff]
    %s57 = scalar_lea.vmem %s55, 32 [#allocation2]
    %v58 = vld [vmem:[%s57] ss:$4 sm:$0xff]
    %s59 = scalar_lea.vmem %s55, 64 [#allocation2]
    %v60 = vld [vmem:[%s59] ss:$4 sm:$0x1]
    %v64 = vlaneseq
    %v65 = vshrl.u32 %v64, 7
    %v66 = vsub.s32 0, %v65
    %v67 = vrot.slane %v56, %v66
    %v68 = vlaneseq
    %v69 = vshrl.u32 %v68, 7
    %v70 = vsub.s32 1, %v69
    %v71 = vrot.slane %v56, %v70
    %v72 = vlaneseq
    %v73 = vshrl.u32 %v72, 7
    %v74 = vsub.s32 2, %v73
    %v75 = vrot.slane %v56, %v74
    %v76 = vlaneseq
    %v77 = vshrl.u32 %v76, 7
    %v78 = vsub.s32 3, %v77
    %v79 = vrot.slane %v56, %v78
    %v80 = vlaneseq
    %v81 = vshrl.u32 %v80, 7
    %v82 = vsub.s32 4, %v81
    %v83 = vrot.slane %v56, %v82
    %v84 = vlaneseq
    %v85 = vshrl.u32 %v84, 7
    %v86 = vsub.s32 5, %v85
    %v87 = vrot.slane %v56, %v86
    %v88 = vlaneseq
    %v89 = vshrl.u32 %v88, 7
    %v90 = vsub.s32 6, %v89
    %v91 = vrot.slane %v56, %v90
    %v92 = vlaneseq
    %v93 = vshrl.u32 %v92, 7
    %v94 = vsub.s32 7, %v93
    %v95 = vrot.slane %v56, %v94
    %v96 = vlaneseq
    %v97 = vshrl.u32 %v96, 7
    %v98 = vsub.s32 0, %v97
    %v99 = vrot.slane %v58, %v98
    %v100 = vlaneseq
    %v101 = vshrl.u32 %v100, 7
    %v102 = vsub.s32 1, %v101
    %v103 = vrot.slane %v58, %v102
    %v104 = vlaneseq
    %v105 = vshrl.u32 %v104, 7
    %v106 = vsub.s32 2, %v105
    %v107 = vrot.slane %v58, %v106
    %v108 = vlaneseq
    %v109 = vshrl.u32 %v108, 7
    %v110 = vsub.s32 3, %v109
    %v111 = vrot.slane %v58, %v110
    %v112 = vlaneseq
    %v113 = vshrl.u32 %v112, 7
    %v114 = vsub.s32 4, %v113
    %v115 = vrot.slane %v58, %v114
    %v116 = vlaneseq
    %v117 = vshrl.u32 %v116, 7
    %v118 = vsub.s32 5, %v117
    %v119 = vrot.slane %v58, %v118
    %v120 = vlaneseq
    %v121 = vshrl.u32 %v120, 7
    %v122 = vsub.s32 6, %v121
    %v123 = vrot.slane %v58, %v122
    %v124 = vlaneseq
    %v125 = vshrl.u32 %v124, 7
    %v126 = vsub.s32 7, %v125
    %v127 = vrot.slane %v58, %v126
    %v128 = vlaneseq
    %v129 = vshrl.u32 %v128, 7
    %v130 = vsub.s32 0, %v129
    %v131 = vrot.slane %v60, %v130
    %s149 = sadd.s32 %s51, 2048
    %s150 = sshra.s32 %s149, 7
    %s151 = sand.u32 %s149, 127
    %s152 = smul.addr %s150, 4
    %s153 = scalar_lea.vmem [#allocation2], %s152
    %v154 = vld [vmem:[%s153] ss:$4 sm:$0xff]
    %s155 = scalar_lea.vmem %s153, 32 [#allocation2]
    %v156 = vld [vmem:[%s155] ss:$4 sm:$0xff]
    %s157 = scalar_lea.vmem %s153, 64 [#allocation2]
    %v158 = vld [vmem:[%s157] ss:$4 sm:$0x1]
    %v162 = vlaneseq
    %v163 = vshrl.u32 %v162, 7
    %v164 = vsub.s32 0, %v163
    %v165 = vrot.slane %v154, %v164
    %v166 = vlaneseq
    %v167 = vshrl.u32 %v166, 7
    %v168 = vsub.s32 1, %v167
    %v169 = vrot.slane %v154, %v168
    %v170 = vlaneseq
    %v171 = vshrl.u32 %v170, 7
    %v172 = vsub.s32 2, %v171
    %v173 = vrot.slane %v154, %v172
    %v174 = vlaneseq
    %v175 = vshrl.u32 %v174, 7
    %v176 = vsub.s32 3, %v175
    %v177 = vrot.slane %v154, %v176
    %v178 = vlaneseq
    %v179 = vshrl.u32 %v178, 7
    %v180 = vsub.s32 4, %v179
    %v181 = vrot.slane %v154, %v180
    %v182 = vlaneseq
    %v183 = vshrl.u32 %v182, 7
    %v184 = vsub.s32 5, %v183
    %v185 = vrot.slane %v154, %v184
    %v186 = vlaneseq
    %v187 = vshrl.u32 %v186, 7
    %v188 = vsub.s32 6, %v187
    %v189 = vrot.slane %v154, %v188
    %v190 = vlaneseq
    %v191 = vshrl.u32 %v190, 7
    %v192 = vsub.s32 7, %v191
    %v193 = vrot.slane %v154, %v192
    %v194 = vlaneseq
    %v195 = vshrl.u32 %v194, 7
    %v196 = vsub.s32 0, %v195
    %v197 = vrot.slane %v156, %v196
    %v198 = vlaneseq
    %v199 = vshrl.u32 %v198, 7
    %v200 = vsub.s32 1, %v199
    %v201 = vrot.slane %v156, %v200
    %v202 = vlaneseq
    %v203 = vshrl.u32 %v202, 7
    %v204 = vsub.s32 2, %v203
    %v205 = vrot.slane %v156, %v204
    %v206 = vlaneseq
    %v207 = vshrl.u32 %v206, 7
    %v208 = vsub.s32 3, %v207
    %v209 = vrot.slane %v156, %v208
    %v210 = vlaneseq
    %v211 = vshrl.u32 %v210, 7
    %v212 = vsub.s32 4, %v211
    %v213 = vrot.slane %v156, %v212
    %v214 = vlaneseq
    %v215 = vshrl.u32 %v214, 7
    %v216 = vsub.s32 5, %v215
    %v217 = vrot.slane %v156, %v216
    %v218 = vlaneseq
    %v219 = vshrl.u32 %v218, 7
    %v220 = vsub.s32 6, %v219
    %v221 = vrot.slane %v156, %v220
    %v222 = vlaneseq
    %v223 = vshrl.u32 %v222, 7
    %v224 = vsub.s32 7, %v223
    %v225 = vrot.slane %v156, %v224
    %v226 = vlaneseq
    %v227 = vshrl.u32 %v226, 7
    %v228 = vsub.s32 0, %v227
    %v229 = vrot.slane %v158, %v228
    %vm247 = vcmask 1043456
    %v248 = vsel %vm247, %v67, %v165
    %v249 = vsel %vm247, %v71, %v169
    %v250 = vsel %vm247, %v75, %v173
    %v251 = vsel %vm247, %v79, %v177
    %v252 = vsel %vm247, %v83, %v181
    %v253 = vsel %vm247, %v87, %v185
    %v254 = vsel %vm247, %v91, %v189
    %v255 = vsel %vm247, %v95, %v193
    %v256 = vsel %vm247, %v99, %v197
    %v257 = vsel %vm247, %v103, %v201
    %v258 = vsel %vm247, %v107, %v205
    %v259 = vsel %vm247, %v111, %v209
    %v260 = vsel %vm247, %v115, %v213
    %v261 = vsel %vm247, %v119, %v217
    %v262 = vsel %vm247, %v123, %v221
    %v263 = vsel %vm247, %v127, %v225
    %v264 = vsel %vm247, %v131, %v229
    %266 = vset.pattern.permute.xlu0 0
    %267 = vperm.xlu0 %266, %v50
    %v268 = vpop.permute.xlu0 %267
    %v270 = vmul.f32 %v268, %v248
    %v271 = vmul.f32 %v268, %v249
    %v272 = vmul.f32 %v268, %v250
    %v273 = vmul.f32 %v268, %v251
    %v274 = vmul.f32 %v268, %v252
    %v275 = vmul.f32 %v268, %v253
    %v276 = vmul.f32 %v268, %v254
    %v277 = vmul.f32 %v268, %v255
    %v278 = vmul.f32 %v268, %v256
    %v279 = vmul.f32 %v268, %v257
    %v280 = vmul.f32 %v268, %v258
    %v281 = vmul.f32 %v268, %v259
    %v282 = vmul.f32 %v268, %v260
    %v283 = vmul.f32 %v268, %v261
    %v284 = vmul.f32 %v268, %v262
    %v285 = vmul.f32 %v268, %v263
    %v286 = vadd.f32 %v270, 0.0
    %v287 = vadd.f32 %v271, 0.0
    %v288 = vadd.f32 %v272, 0.0
    %v289 = vadd.f32 %v273, 0.0
    %v290 = vadd.f32 %v274, 0.0
    %v291 = vadd.f32 %v275, 0.0
    %v292 = vadd.f32 %v276, 0.0
    %v293 = vadd.f32 %v277, 0.0
    %v294 = vadd.f32 %v278, 0.0
    %v295 = vadd.f32 %v279, 0.0
    %v296 = vadd.f32 %v280, 0.0
    %v297 = vadd.f32 %v281, 0.0
    %v298 = vadd.f32 %v282, 0.0
    %v299 = vadd.f32 %v283, 0.0
    %v300 = vadd.f32 %v284, 0.0
    %v301 = vadd.f32 %v285, 0.0
    %302 = vset.pattern.permute.xlu0 1
    %303 = vperm.xlu0 %302, %v50
    %v304 = vpop.permute.xlu0 %303
    %v306 = vmul.f32 %v304, %v248
    %v307 = vmul.f32 %v304, %v249
    %v308 = vmul.f32 %v304, %v250
    %v309 = vmul.f32 %v304, %v251
    %v310 = vmul.f32 %v304, %v252
    %v311 = vmul.f32 %v304, %v253
    %v312 = vmul.f32 %v304, %v254
    %v313 = vmul.f32 %v304, %v255
    %v314 = vmul.f32 %v304, %v256
    %v315 = vmul.f32 %v304, %v257
    %v316 = vmul.f32 %v304, %v258
    %v317 = vmul.f32 %v304, %v259
    %v318 = vmul.f32 %v304, %v260
    %v319 = vmul.f32 %v304, %v261
    %v320 = vmul.f32 %v304, %v262
    %v321 = vmul.f32 %v304, %v263
    %v322 = vmul.f32 %v304, %v264
    %340 = vrot.lane.b32.xlu0 %v306, 127
    %v341 = vpop.permute.xlu0 %340
    %342 = vrot.lane.b32.xlu0 %v307, 127
    %v343 = vpop.permute.xlu0 %342
    %344 = vrot.lane.b32.xlu0 %v308, 127
    %v345 = vpop.permute.xlu0 %344
    %346 = vrot.lane.b32.xlu0 %v309, 127
    %v347 = vpop.permute.xlu0 %346
    %348 = vrot.lane.b32.xlu0 %v310, 127
    %v349 = vpop.permute.xlu0 %348
    %350 = vrot.lane.b32.xlu0 %v311, 127
    %v351 = vpop.permute.xlu0 %350
    %352 = vrot.lane.b32.xlu0 %v312, 127
    %v353 = vpop.permute.xlu0 %352
    %354 = vrot.lane.b32.xlu0 %v313, 127
    %v355 = vpop.permute.xlu0 %354
    %356 = vrot.lane.b32.xlu0 %v314, 127
    %v357 = vpop.permute.xlu0 %356
    %358 = vrot.lane.b32.xlu0 %v315, 127
    %v359 = vpop.permute.xlu0 %358
    %360 = vrot.lane.b32.xlu0 %v316, 127
    %v361 = vpop.permute.xlu0 %360
    %362 = vrot.lane.b32.xlu0 %v317, 127
    %v363 = vpop.permute.xlu0 %362
    %364 = vrot.lane.b32.xlu0 %v318, 127
    %v365 = vpop.permute.xlu0 %364
    %366 = vrot.lane.b32.xlu0 %v319, 127
    %v367 = vpop.permute.xlu0 %366
    %368 = vrot.lane.b32.xlu0 %v320, 127
    %v369 = vpop.permute.xlu0 %368
    %370 = vrot.lane.b32.xlu0 %v321, 127
    %v371 = vpop.permute.xlu0 %370
    %372 = vrot.lane.b32.xlu0 %v322, 127
    %v373 = vpop.permute.xlu0 %372
    %vm374 = vcmask 1039360
    %v375 = vsel %vm374, %v341, %v343
    %v376 = vsel %vm374, %v343, %v345
    %v377 = vsel %vm374, %v345, %v347
    %v378 = vsel %vm374, %v347, %v349
    %v379 = vsel %vm374, %v349, %v351
    %v380 = vsel %vm374, %v351, %v353
    %v381 = vsel %vm374, %v353, %v355
    %v382 = vsel %vm374, %v355, %v357
    %v383 = vsel %vm374, %v357, %v359
    %v384 = vsel %vm374, %v359, %v361
    %v385 = vsel %vm374, %v361, %v363
    %v386 = vsel %vm374, %v363, %v365
    %v387 = vsel %vm374, %v365, %v367
    %v388 = vsel %vm374, %v367, %v369
    %v389 = vsel %vm374, %v369, %v371
    %v390 = vsel %vm374, %v371, %v373
    %v407 = vadd.f32 %v286, %v375
    %v408 = vadd.f32 %v287, %v376
    %v409 = vadd.f32 %v288, %v377
    %v410 = vadd.f32 %v289, %v378
    %v411 = vadd.f32 %v290, %v379
    %v412 = vadd.f32 %v291, %v380
    %v413 = vadd.f32 %v292, %v381
    %v414 = vadd.f32 %v293, %v382
    %v415 = vadd.f32 %v294, %v383
    %v416 = vadd.f32 %v295, %v384
    %v417 = vadd.f32 %v296, %v385
    %v418 = vadd.f32 %v297, %v386
    %v419 = vadd.f32 %v298, %v387
    %v420 = vadd.f32 %v299, %v388
    %v421 = vadd.f32 %v300, %v389
    %v422 = vadd.f32 %v301, %v390
    %423 = vset.pattern.permute.xlu0 2
    %424 = vperm.xlu0 %423, %v50
    %v425 = vpop.permute.xlu0 %424
    %v427 = vmul.f32 %v425, %v248
    %v428 = vmul.f32 %v425, %v249
    %v429 = vmul.f32 %v425, %v250
    %v430 = vmul.f32 %v425, %v251
    %v431 = vmul.f32 %v425, %v252
    %v432 = vmul.f32 %v425, %v253
    %v433 = vmul.f32 %v425, %v254
    %v434 = vmul.f32 %v425, %v255
    %v435 = vmul.f32 %v425, %v256
    %v436 = vmul.f32 %v425, %v257
    %v437 = vmul.f32 %v425, %v258
    %v438 = vmul.f32 %v425, %v259
    %v439 = vmul.f32 %v425, %v260
    %v440 = vmul.f32 %v425, %v261
    %v441 = vmul.f32 %v425, %v262
    %v442 = vmul.f32 %v425, %v263
    %v443 = vmul.f32 %v425, %v264
    %461 = vrot.lane.b32.xlu0 %v427, 126
    %v462 = vpop.permute.xlu0 %461
    %463 = vrot.lane.b32.xlu0 %v428, 126
    %v464 = vpop.permute.xlu0 %463
    %465 = vrot.lane.b32.xlu0 %v429, 126
    %v466 = vpop.permute.xlu0 %465
    %467 = vrot.lane.b32.xlu0 %v430, 126
    %v468 = vpop.permute.xlu0 %467
    %469 = vrot.lane.b32.xlu0 %v431, 126
    %v470 = vpop.permute.xlu0 %469
    %471 = vrot.lane.b32.xlu0 %v432, 126
    %v472 = vpop.permute.xlu0 %471
    %473 = vrot.lane.b32.xlu0 %v433, 126
    %v474 = vpop.permute.xlu0 %473
    %475 = vrot.lane.b32.xlu0 %v434, 126
    %v476 = vpop.permute.xlu0 %475
    %477 = vrot.lane.b32.xlu0 %v435, 126
    %v478 = vpop.permute.xlu0 %477
    %479 = vrot.lane.b32.xlu0 %v436, 126
    %v480 = vpop.permute.xlu0 %479
    %481 = vrot.lane.b32.xlu0 %v437, 126
    %v482 = vpop.permute.xlu0 %481
    %483 = vrot.lane.b32.xlu0 %v438, 126
    %v484 = vpop.permute.xlu0 %483
    %485 = vrot.lane.b32.xlu0 %v439, 126
    %v486 = vpop.permute.xlu0 %485
    %487 = vrot.lane.b32.xlu0 %v440, 126
    %v488 = vpop.permute.xlu0 %487
    %489 = vrot.lane.b32.xlu0 %v441, 126
    %v490 = vpop.permute.xlu0 %489
    %491 = vrot.lane.b32.xlu0 %v442, 126
    %v492 = vpop.permute.xlu0 %491
    %493 = vrot.lane.b32.xlu0 %v443, 126
    %v494 = vpop.permute.xlu0 %493
    %vm495 = vcmask 1031168
    %v496 = vsel %vm495, %v462, %v464
    %v497 = vsel %vm495, %v464, %v466
    %v498 = vsel %vm495, %v466, %v468
    %v499 = vsel %vm495, %v468, %v470
    %v500 = vsel %vm495, %v470, %v472
    %v501 = vsel %vm495, %v472, %v474
    %v502 = vsel %vm495, %v474, %v476
    %v503 = vsel %vm495, %v476, %v478
    %v504 = vsel %vm495, %v478, %v480
    %v505 = vsel %vm495, %v480, %v482
    %v506 = vsel %vm495, %v482, %v484
    %v507 = vsel %vm495, %v484, %v486
    %v508 = vsel %vm495, %v486, %v488
    %v509 = vsel %vm495, %v488, %v490
    %v510 = vsel %vm495, %v490, %v492
    %v511 = vsel %vm495, %v492, %v494
    %v528 = vadd.f32 %v407, %v496
    %v529 = vadd.f32 %v408, %v497
    %v530 = vadd.f32 %v409, %v498
    %v531 = vadd.f32 %v410, %v499
    %v532 = vadd.f32 %v411, %v500
    %v533 = vadd.f32 %v412, %v501
    %v534 = vadd.f32 %v413, %v502
    %v535 = vadd.f32 %v414, %v503
    %v536 = vadd.f32 %v415, %v504
    %v537 = vadd.f32 %v416, %v505
    %v538 = vadd.f32 %v417, %v506
    %v539 = vadd.f32 %v418, %v507
    %v540 = vadd.f32 %v419, %v508
    %v541 = vadd.f32 %v420, %v509
    %v542 = vadd.f32 %v421, %v510
    %v543 = vadd.f32 %v422, %v511
    %544 = vset.pattern.permute.xlu0 3
    %545 = vperm.xlu0 %544, %v50
    %v546 = vpop.permute.xlu0 %545
    %v548 = vmul.f32 %v546, %v248
    %v549 = vmul.f32 %v546, %v249
    %v550 = vmul.f32 %v546, %v250
    %v551 = vmul.f32 %v546, %v251
    %v552 = vmul.f32 %v546, %v252
    %v553 = vmul.f32 %v546, %v253
    %v554 = vmul.f32 %v546, %v254
    %v555 = vmul.f32 %v546, %v255
    %v556 = vmul.f32 %v546, %v256
    %v557 = vmul.f32 %v546, %v257
    %v558 = vmul.f32 %v546, %v258
    %v559 = vmul.f32 %v546, %v259
    %v560 = vmul.f32 %v546, %v260
    %v561 = vmul.f32 %v546, %v261
    %v562 = vmul.f32 %v546, %v262
    %v563 = vmul.f32 %v546, %v263
    %v564 = vmul.f32 %v546, %v264
    %582 = vrot.lane.b32.xlu0 %v548, 94
    %v583 = vpop.permute.xlu0 %582
    %584 = vrot.lane.b32.xlu0 %v549, 94
    %v585 = vpop.permute.xlu0 %584
    %586 = vrot.lane.b32.xlu0 %v550, 94
    %v587 = vpop.permute.xlu0 %586
    %588 = vrot.lane.b32.xlu0 %v551, 94
    %v589 = vpop.permute.xlu0 %588
    %590 = vrot.lane.b32.xlu0 %v552, 94
    %v591 = vpop.permute.xlu0 %590
    %592 = vrot.lane.b32.xlu0 %v553, 94
    %v593 = vpop.permute.xlu0 %592
    %594 = vrot.lane.b32.xlu0 %v554, 94
    %v595 = vpop.permute.xlu0 %594
    %596 = vrot.lane.b32.xlu0 %v555, 94
    %v597 = vpop.permute.xlu0 %596
    %598 = vrot.lane.b32.xlu0 %v556, 94
    %v599 = vpop.permute.xlu0 %598
    %600 = vrot.lane.b32.xlu0 %v557, 94
    %v601 = vpop.permute.xlu0 %600
    %602 = vrot.lane.b32.xlu0 %v558, 94
    %v603 = vpop.permute.xlu0 %602
    %604 = vrot.lane.b32.xlu0 %v559, 94
    %v605 = vpop.permute.xlu0 %604
    %606 = vrot.lane.b32.xlu0 %v560, 94
    %v607 = vpop.permute.xlu0 %606
    %608 = vrot.lane.b32.xlu0 %v561, 94
    %v609 = vpop.permute.xlu0 %608
    %610 = vrot.lane.b32.xlu0 %v562, 94
    %v611 = vpop.permute.xlu0 %610
    %612 = vrot.lane.b32.xlu0 %v563, 94
    %v613 = vpop.permute.xlu0 %612
    %614 = vrot.lane.b32.xlu0 %v564, 94
    %v615 = vpop.permute.xlu0 %614
    %vm616 = vcmask 769024
    %v617 = vsel %vm616, %v583, %v585
    %v618 = vsel %vm616, %v585, %v587
    %v619 = vsel %vm616, %v587, %v589
    %v620 = vsel %vm616, %v589, %v591
    %v621 = vsel %vm616, %v591, %v593
    %v622 = vsel %vm616, %v593, %v595
    %v623 = vsel %vm616, %v595, %v597
    %v624 = vsel %vm616, %v597, %v599
    %v625 = vsel %vm616, %v599, %v601
    %v626 = vsel %vm616, %v601, %v603
    %v627 = vsel %vm616, %v603, %v605
    %v628 = vsel %vm616, %v605, %v607
    %v629 = vsel %vm616, %v607, %v609
    %v630 = vsel %vm616, %v609, %v611
    %v631 = vsel %vm616, %v611, %v613
    %v632 = vsel %vm616, %v613, %v615
    %v649 = vadd.f32 %v528, %v617
    %v650 = vadd.f32 %v529, %v618
    %v651 = vadd.f32 %v530, %v619
    %v652 = vadd.f32 %v531, %v620
    %v653 = vadd.f32 %v532, %v621
    %v654 = vadd.f32 %v533, %v622
    %v655 = vadd.f32 %v534, %v623
    %v656 = vadd.f32 %v535, %v624
    %v657 = vadd.f32 %v536, %v625
    %v658 = vadd.f32 %v537, %v626
    %v659 = vadd.f32 %v538, %v627
    %v660 = vadd.f32 %v539, %v628
    %v661 = vadd.f32 %v540, %v629
    %v662 = vadd.f32 %v541, %v630
    %v663 = vadd.f32 %v542, %v631
    %v664 = vadd.f32 %v543, %v632
    %665 = vset.pattern.permute.xlu0 4
    %666 = vperm.xlu0 %665, %v50
    %v667 = vpop.permute.xlu0 %666
    %v669 = vmul.f32 %v667, %v248
    %v670 = vmul.f32 %v667, %v249
    %v671 = vmul.f32 %v667, %v250
    %v672 = vmul.f32 %v667, %v251
    %v673 = vmul.f32 %v667, %v252
    %v674 = vmul.f32 %v667, %v253
    %v675 = vmul.f32 %v667, %v254
    %v676 = vmul.f32 %v667, %v255
    %v677 = vmul.f32 %v667, %v256
    %v678 = vmul.f32 %v667, %v257
    %v679 = vmul.f32 %v667, %v258
    %v680 = vmul.f32 %v667, %v259
    %v681 = vmul.f32 %v667, %v260
    %v682 = vmul.f32 %v667, %v261
    %v683 = vmul.f32 %v667, %v262
    %v684 = vmul.f32 %v667, %v263
    %v685 = vmul.f32 %v667, %v264
    %703 = vrot.lane.b32.xlu0 %v669, 93
    %v704 = vpop.permute.xlu0 %703
    %705 = vrot.lane.b32.xlu0 %v670, 93
    %v706 = vpop.permute.xlu0 %705
    %707 = vrot.lane.b32.xlu0 %v671, 93
    %v708 = vpop.permute.xlu0 %707
    %709 = vrot.lane.b32.xlu0 %v672, 93
    %v710 = vpop.permute.xlu0 %709
    %711 = vrot.lane.b32.xlu0 %v673, 93
    %v712 = vpop.permute.xlu0 %711
    %713 = vrot.lane.b32.xlu0 %v674, 93
    %v714 = vpop.permute.xlu0 %713
    %715 = vrot.lane.b32.xlu0 %v675, 93
    %v716 = vpop.permute.xlu0 %715
    %717 = vrot.lane.b32.xlu0 %v676, 93
    %v718 = vpop.permute.xlu0 %717
    %719 = vrot.lane.b32.xlu0 %v677, 93
    %v720 = vpop.permute.xlu0 %719
    %721 = vrot.lane.b32.xlu0 %v678, 93
    %v722 = vpop.permute.xlu0 %721
    %723 = vrot.lane.b32.xlu0 %v679, 93
    %v724 = vpop.permute.xlu0 %723
    %725 = vrot.lane.b32.xlu0 %v680, 93
    %v726 = vpop.permute.xlu0 %725
    %727 = vrot.lane.b32.xlu0 %v681, 93
    %v728 = vpop.permute.xlu0 %727
    %729 = vrot.lane.b32.xlu0 %v682, 93
    %v730 = vpop.permute.xlu0 %729
    %731 = vrot.lane.b32.xlu0 %v683, 93
    %v732 = vpop.permute.xlu0 %731
    %733 = vrot.lane.b32.xlu0 %v684, 93
    %v734 = vpop.permute.xlu0 %733
    %735 = vrot.lane.b32.xlu0 %v685, 93
    %v736 = vpop.permute.xlu0 %735
    %vm737 = vcmask 760832
    %v738 = vsel %vm737, %v704, %v706
    %v739 = vsel %vm737, %v706, %v708
    %v740 = vsel %vm737, %v708, %v710
    %v741 = vsel %vm737, %v710, %v712
    %v742 = vsel %vm737, %v712, %v714
    %v743 = vsel %vm737, %v714, %v716
    %v744 = vsel %vm737, %v716, %v718
    %v745 = vsel %vm737, %v718, %v720
    %v746 = vsel %vm737, %v720, %v722
    %v747 = vsel %vm737, %v722, %v724
    %v748 = vsel %vm737, %v724, %v726
    %v749 = vsel %vm737, %v726, %v728
    %v750 = vsel %vm737, %v728, %v730
    %v751 = vsel %vm737, %v730, %v732
    %v752 = vsel %vm737, %v732, %v734
    %v753 = vsel %vm737, %v734, %v736
    %v770 = vadd.f32 %v649, %v738
    %v771 = vadd.f32 %v650, %v739
    %v772 = vadd.f32 %v651, %v740
    %v773 = vadd.f32 %v652, %v741
    %v774 = vadd.f32 %v653, %v742
    %v775 = vadd.f32 %v654, %v743
    %v776 = vadd.f32 %v655, %v744
    %v777 = vadd.f32 %v656, %v745
    %v778 = vadd.f32 %v657, %v746
    %v779 = vadd.f32 %v658, %v747
    %v780 = vadd.f32 %v659, %v748
    %v781 = vadd.f32 %v660, %v749
    %v782 = vadd.f32 %v661, %v750
    %v783 = vadd.f32 %v662, %v751
    %v784 = vadd.f32 %v663, %v752
    %v785 = vadd.f32 %v664, %v753
    %786 = vset.pattern.permute.xlu0 5
    %787 = vperm.xlu0 %786, %v50
    %v788 = vpop.permute.xlu0 %787
    %v790 = vmul.f32 %v788, %v248
    %v791 = vmul.f32 %v788, %v249
    %v792 = vmul.f32 %v788, %v250
    %v793 = vmul.f32 %v788, %v251
    %v794 = vmul.f32 %v788, %v252
    %v795 = vmul.f32 %v788, %v253
    %v796 = vmul.f32 %v788, %v254
    %v797 = vmul.f32 %v788, %v255
    %v798 = vmul.f32 %v788, %v256
    %v799 = vmul.f32 %v788, %v257
    %v800 = vmul.f32 %v788, %v258
    %v801 = vmul.f32 %v788, %v259
    %v802 = vmul.f32 %v788, %v260
    %v803 = vmul.f32 %v788, %v261
    %v804 = vmul.f32 %v788, %v262
    %v805 = vmul.f32 %v788, %v263
    %v806 = vmul.f32 %v788, %v264
    %824 = vrot.lane.b32.xlu0 %v790, 92
    %v825 = vpop.permute.xlu0 %824
    %826 = vrot.lane.b32.xlu0 %v791, 92
    %v827 = vpop.permute.xlu0 %826
    %828 = vrot.lane.b32.xlu0 %v792, 92
    %v829 = vpop.permute.xlu0 %828
    %830 = vrot.lane.b32.xlu0 %v793, 92
    %v831 = vpop.permute.xlu0 %830
    %832 = vrot.lane.b32.xlu0 %v794, 92
    %v833 = vpop.permute.xlu0 %832
    %834 = vrot.lane.b32.xlu0 %v795, 92
    %v835 = vpop.permute.xlu0 %834
    %836 = vrot.lane.b32.xlu0 %v796, 92
    %v837 = vpop.permute.xlu0 %836
    %838 = vrot.lane.b32.xlu0 %v797, 92
    %v839 = vpop.permute.xlu0 %838
    %840 = vrot.lane.b32.xlu0 %v798, 92
    %v841 = vpop.permute.xlu0 %840
    %842 = vrot.lane.b32.xlu0 %v799, 92
    %v843 = vpop.permute.xlu0 %842
    %844 = vrot.lane.b32.xlu0 %v800, 92
    %v845 = vpop.permute.xlu0 %844
    %846 = vrot.lane.b32.xlu0 %v801, 92
    %v847 = vpop.permute.xlu0 %846
    %848 = vrot.lane.b32.xlu0 %v802, 92
    %v849 = vpop.permute.xlu0 %848
    %850 = vrot.lane.b32.xlu0 %v803, 92
    %v851 = vpop.permute.xlu0 %850
    %852 = vrot.lane.b32.xlu0 %v804, 92
    %v853 = vpop.permute.xlu0 %852
    %854 = vrot.lane.b32.xlu0 %v805, 92
    %v855 = vpop.permute.xlu0 %854
    %856 = vrot.lane.b32.xlu0 %v806, 92
    %v857 = vpop.permute.xlu0 %856
    %vm858 = vcmask 752640
    %v859 = vsel %vm858, %v825, %v827
    %v860 = vsel %vm858, %v827, %v829
    %v861 = vsel %vm858, %v829, %v831
    %v862 = vsel %vm858, %v831, %v833
    %v863 = vsel %vm858, %v833, %v835
    %v864 = vsel %vm858, %v835, %v837
    %v865 = vsel %vm858, %v837, %v839
    %v866 = vsel %vm858, %v839, %v841
    %v867 = vsel %vm858, %v841, %v843
    %v868 = vsel %vm858, %v843, %v845
    %v869 = vsel %vm858, %v845, %v847
    %v870 = vsel %vm858, %v847, %v849
    %v871 = vsel %vm858, %v849, %v851
    %v872 = vsel %vm858, %v851, %v853
    %v873 = vsel %vm858, %v853, %v855
    %v874 = vsel %vm858, %v855, %v857
    %v891 = vadd.f32 %v770, %v859
    %v892 = vadd.f32 %v771, %v860
    %v893 = vadd.f32 %v772, %v861
    %v894 = vadd.f32 %v773, %v862
    %v895 = vadd.f32 %v774, %v863
    %v896 = vadd.f32 %v775, %v864
    %v897 = vadd.f32 %v776, %v865
    %v898 = vadd.f32 %v777, %v866
    %v899 = vadd.f32 %v778, %v867
    %v900 = vadd.f32 %v779, %v868
    %v901 = vadd.f32 %v780, %v869
    %v902 = vadd.f32 %v781, %v870
    %v903 = vadd.f32 %v782, %v871
    %v904 = vadd.f32 %v783, %v872
    %v905 = vadd.f32 %v784, %v873
    %v906 = vadd.f32 %v785, %v874
    %907 = vset.pattern.permute.xlu0 6
    %908 = vperm.xlu0 %907, %v50
    %v909 = vpop.permute.xlu0 %908
    %v911 = vmul.f32 %v909, %v248
    %v912 = vmul.f32 %v909, %v249
    %v913 = vmul.f32 %v909, %v250
    %v914 = vmul.f32 %v909, %v251
    %v915 = vmul.f32 %v909, %v252
    %v916 = vmul.f32 %v909, %v253
    %v917 = vmul.f32 %v909, %v254
    %v918 = vmul.f32 %v909, %v255
    %v919 = vmul.f32 %v909, %v256
    %v920 = vmul.f32 %v909, %v257
    %v921 = vmul.f32 %v909, %v258
    %v922 = vmul.f32 %v909, %v259
    %v923 = vmul.f32 %v909, %v260
    %v924 = vmul.f32 %v909, %v261
    %v925 = vmul.f32 %v909, %v262
    %v926 = vmul.f32 %v909, %v263
    %v927 = vmul.f32 %v909, %v264
    %945 = vrot.lane.b32.xlu0 %v911, 60
    %v946 = vpop.permute.xlu0 %945
    %947 = vrot.lane.b32.xlu0 %v912, 60
    %v948 = vpop.permute.xlu0 %947
    %949 = vrot.lane.b32.xlu0 %v913, 60
    %v950 = vpop.permute.xlu0 %949
    %951 = vrot.lane.b32.xlu0 %v914, 60
    %v952 = vpop.permute.xlu0 %951
    %953 = vrot.lane.b32.xlu0 %v915, 60
    %v954 = vpop.permute.xlu0 %953
    %955 = vrot.lane.b32.xlu0 %v916, 60
    %v956 = vpop.permute.xlu0 %955
    %957 = vrot.lane.b32.xlu0 %v917, 60
    %v958 = vpop.permute.xlu0 %957
    %959 = vrot.lane.b32.xlu0 %v918, 60
    %v960 = vpop.permute.xlu0 %959
    %961 = vrot.lane.b32.xlu0 %v919, 60
    %v962 = vpop.permute.xlu0 %961
    %963 = vrot.lane.b32.xlu0 %v920, 60
    %v964 = vpop.permute.xlu0 %963
    %965 = vrot.lane.b32.xlu0 %v921, 60
    %v966 = vpop.permute.xlu0 %965
    %967 = vrot.lane.b32.xlu0 %v922, 60
    %v968 = vpop.permute.xlu0 %967
    %969 = vrot.lane.b32.xlu0 %v923, 60
    %v970 = vpop.permute.xlu0 %969
    %971 = vrot.lane.b32.xlu0 %v924, 60
    %v972 = vpop.permute.xlu0 %971
    %973 = vrot.lane.b32.xlu0 %v925, 60
    %v974 = vpop.permute.xlu0 %973
    %975 = vrot.lane.b32.xlu0 %v926, 60
    %v976 = vpop.permute.xlu0 %975
    %977 = vrot.lane.b32.xlu0 %v927, 60
    %v978 = vpop.permute.xlu0 %977
    %vm979 = vcmask 490496
    %v980 = vsel %vm979, %v946, %v948
    %v981 = vsel %vm979, %v948, %v950
    %v982 = vsel %vm979, %v950, %v952
    %v983 = vsel %vm979, %v952, %v954
    %v984 = vsel %vm979, %v954, %v956
    %v985 = vsel %vm979, %v956, %v958
    %v986 = vsel %vm979, %v958, %v960
    %v987 = vsel %vm979, %v960, %v962
    %v988 = vsel %vm979, %v962, %v964
    %v989 = vsel %vm979, %v964, %v966
    %v990 = vsel %vm979, %v966, %v968
    %v991 = vsel %vm979, %v968, %v970
    %v992 = vsel %vm979, %v970, %v972
    %v993 = vsel %vm979, %v972, %v974
    %v994 = vsel %vm979, %v974, %v976
    %v995 = vsel %vm979, %v976, %v978
    %v1012 = vadd.f32 %v891, %v980
    %v1013 = vadd.f32 %v892, %v981
    %v1014 = vadd.f32 %v893, %v982
    %v1015 = vadd.f32 %v894, %v983
    %v1016 = vadd.f32 %v895, %v984
    %v1017 = vadd.f32 %v896, %v985
    %v1018 = vadd.f32 %v897, %v986
    %v1019 = vadd.f32 %v898, %v987
    %v1020 = vadd.f32 %v899, %v988
    %v1021 = vadd.f32 %v900, %v989
    %v1022 = vadd.f32 %v901, %v990
    %v1023 = vadd.f32 %v902, %v991
    %v1024 = vadd.f32 %v903, %v992
    %v1025 = vadd.f32 %v904, %v993
    %v1026 = vadd.f32 %v905, %v994
    %v1027 = vadd.f32 %v906, %v995
    %1028 = vset.pattern.permute.xlu0 7
    %1029 = vperm.xlu0 %1028, %v50
    %v1030 = vpop.permute.xlu0 %1029
    %v1032 = vmul.f32 %v1030, %v248
    %v1033 = vmul.f32 %v1030, %v249
    %v1034 = vmul.f32 %v1030, %v250
    %v1035 = vmul.f32 %v1030, %v251
    %v1036 = vmul.f32 %v1030, %v252
    %v1037 = vmul.f32 %v1030, %v253
    %v1038 = vmul.f32 %v1030, %v254
    %v1039 = vmul.f32 %v1030, %v255
    %v1040 = vmul.f32 %v1030, %v256
    %v1041 = vmul.f32 %v1030, %v257
    %v1042 = vmul.f32 %v1030, %v258
    %v1043 = vmul.f32 %v1030, %v259
    %v1044 = vmul.f32 %v1030, %v260
    %v1045 = vmul.f32 %v1030, %v261
    %v1046 = vmul.f32 %v1030, %v262
    %v1047 = vmul.f32 %v1030, %v263
    %v1048 = vmul.f32 %v1030, %v264
    %1066 = vrot.lane.b32.xlu0 %v1032, 59
    %v1067 = vpop.permute.xlu0 %1066
    %1068 = vrot.lane.b32.xlu0 %v1033, 59
    %v1069 = vpop.permute.xlu0 %1068
    %1070 = vrot.lane.b32.xlu0 %v1034, 59
    %v1071 = vpop.permute.xlu0 %1070
    %1072 = vrot.lane.b32.xlu0 %v1035, 59
    %v1073 = vpop.permute.xlu0 %1072
    %1074 = vrot.lane.b32.xlu0 %v1036, 59
    %v1075 = vpop.permute.xlu0 %1074
    %1076 = vrot.lane.b32.xlu0 %v1037, 59
    %v1077 = vpop.permute.xlu0 %1076
    %1078 = vrot.lane.b32.xlu0 %v1038, 59
    %v1079 = vpop.permute.xlu0 %1078
    %1080 = vrot.lane.b32.xlu0 %v1039, 59
    %v1081 = vpop.permute.xlu0 %1080
    %1082 = vrot.lane.b32.xlu0 %v1040, 59
    %v1083 = vpop.permute.xlu0 %1082
    %1084 = vrot.lane.b32.xlu0 %v1041, 59
    %v1085 = vpop.permute.xlu0 %1084
    %1086 = vrot.lane.b32.xlu0 %v1042, 59
    %v1087 = vpop.permute.xlu0 %1086
    %1088 = vrot.lane.b32.xlu0 %v1043, 59
    %v1089 = vpop.permute.xlu0 %1088
    %1090 = vrot.lane.b32.xlu0 %v1044, 59
    %v1091 = vpop.permute.xlu0 %1090
    %1092 = vrot.lane.b32.xlu0 %v1045, 59
    %v1093 = vpop.permute.xlu0 %1092
    %1094 = vrot.lane.b32.xlu0 %v1046, 59
    %v1095 = vpop.permute.xlu0 %1094
    %1096 = vrot.lane.b32.xlu0 %v1047, 59
    %v1097 = vpop.permute.xlu0 %1096
    %1098 = vrot.lane.b32.xlu0 %v1048, 59
    %v1099 = vpop.permute.xlu0 %1098
    %vm1100 = vcmask 482304
    %v1101 = vsel %vm1100, %v1067, %v1069
    %v1102 = vsel %vm1100, %v1069, %v1071
    %v1103 = vsel %vm1100, %v1071, %v1073
    %v1104 = vsel %vm1100, %v1073, %v1075
    %v1105 = vsel %vm1100, %v1075, %v1077
    %v1106 = vsel %vm1100, %v1077, %v1079
    %v1107 = vsel %vm1100, %v1079, %v1081
    %v1108 = vsel %vm1100, %v1081, %v1083
    %v1109 = vsel %vm1100, %v1083, %v1085
    %v1110 = vsel %vm1100, %v1085, %v1087
    %v1111 = vsel %vm1100, %v1087, %v1089
    %v1112 = vsel %vm1100, %v1089, %v1091
    %v1113 = vsel %vm1100, %v1091, %v1093
    %v1114 = vsel %vm1100, %v1093, %v1095
    %v1115 = vsel %vm1100, %v1095, %v1097
    %v1116 = vsel %vm1100, %v1097, %v1099
    %v1133 = vadd.f32 %v1012, %v1101
    %v1134 = vadd.f32 %v1013, %v1102
    %v1135 = vadd.f32 %v1014, %v1103
    %v1136 = vadd.f32 %v1015, %v1104
    %v1137 = vadd.f32 %v1016, %v1105
    %v1138 = vadd.f32 %v1017, %v1106
    %v1139 = vadd.f32 %v1018, %v1107
    %v1140 = vadd.f32 %v1019, %v1108
    %v1141 = vadd.f32 %v1020, %v1109
    %v1142 = vadd.f32 %v1021, %v1110
    %v1143 = vadd.f32 %v1022, %v1111
    %v1144 = vadd.f32 %v1023, %v1112
    %v1145 = vadd.f32 %v1024, %v1113
    %v1146 = vadd.f32 %v1025, %v1114
    %v1147 = vadd.f32 %v1026, %v1115
    %v1148 = vadd.f32 %v1027, %v1116
    %1149 = vset.pattern.permute.xlu0 8
    %1150 = vperm.xlu0 %1149, %v50
    %v1151 = vpop.permute.xlu0 %1150
    %v1153 = vmul.f32 %v1151, %v248
    %v1154 = vmul.f32 %v1151, %v249
    %v1155 = vmul.f32 %v1151, %v250
    %v1156 = vmul.f32 %v1151, %v251
    %v1157 = vmul.f32 %v1151, %v252
    %v1158 = vmul.f32 %v1151, %v253
    %v1159 = vmul.f32 %v1151, %v254
    %v1160 = vmul.f32 %v1151, %v255
    %v1161 = vmul.f32 %v1151, %v256
    %v1162 = vmul.f32 %v1151, %v257
    %v1163 = vmul.f32 %v1151, %v258
    %v1164 = vmul.f32 %v1151, %v259
    %v1165 = vmul.f32 %v1151, %v260
    %v1166 = vmul.f32 %v1151, %v261
    %v1167 = vmul.f32 %v1151, %v262
    %v1168 = vmul.f32 %v1151, %v263
    %v1169 = vmul.f32 %v1151, %v264
    %1187 = vrot.lane.b32.xlu0 %v1153, 58
    %v1188 = vpop.permute.xlu0 %1187
    %1189 = vrot.lane.b32.xlu0 %v1154, 58
    %v1190 = vpop.permute.xlu0 %1189
    %1191 = vrot.lane.b32.xlu0 %v1155, 58
    %v1192 = vpop.permute.xlu0 %1191
    %1193 = vrot.lane.b32.xlu0 %v1156, 58
    %v1194 = vpop.permute.xlu0 %1193
    %1195 = vrot.lane.b32.xlu0 %v1157, 58
    %v1196 = vpop.permute.xlu0 %1195
    %1197 = vrot.lane.b32.xlu0 %v1158, 58
    %v1198 = vpop.permute.xlu0 %1197
    %1199 = vrot.lane.b32.xlu0 %v1159, 58
    %v1200 = vpop.permute.xlu0 %1199
    %1201 = vrot.lane.b32.xlu0 %v1160, 58
    %v1202 = vpop.permute.xlu0 %1201
    %1203 = vrot.lane.b32.xlu0 %v1161, 58
    %v1204 = vpop.permute.xlu0 %1203
    %1205 = vrot.lane.b32.xlu0 %v1162, 58
    %v1206 = vpop.permute.xlu0 %1205
    %1207 = vrot.lane.b32.xlu0 %v1163, 58
    %v1208 = vpop.permute.xlu0 %1207
    %1209 = vrot.lane.b32.xlu0 %v1164, 58
    %v1210 = vpop.permute.xlu0 %1209
    %1211 = vrot.lane.b32.xlu0 %v1165, 58
    %v1212 = vpop.permute.xlu0 %1211
    %1213 = vrot.lane.b32.xlu0 %v1166, 58
    %v1214 = vpop.permute.xlu0 %1213
    %1215 = vrot.lane.b32.xlu0 %v1167, 58
    %v1216 = vpop.permute.xlu0 %1215
    %1217 = vrot.lane.b32.xlu0 %v1168, 58
    %v1218 = vpop.permute.xlu0 %1217
    %1219 = vrot.lane.b32.xlu0 %v1169, 58
    %v1220 = vpop.permute.xlu0 %1219
    %vm1221 = vcmask 474112
    %v1222 = vsel %vm1221, %v1188, %v1190
    %v1223 = vsel %vm1221, %v1190, %v1192
    %v1224 = vsel %vm1221, %v1192, %v1194
    %v1225 = vsel %vm1221, %v1194, %v1196
    %v1226 = vsel %vm1221, %v1196, %v1198
    %v1227 = vsel %vm1221, %v1198, %v1200
    %v1228 = vsel %vm1221, %v1200, %v1202
    %v1229 = vsel %vm1221, %v1202, %v1204
    %v1230 = vsel %vm1221, %v1204, %v1206
    %v1231 = vsel %vm1221, %v1206, %v1208
    %v1232 = vsel %vm1221, %v1208, %v1210
    %v1233 = vsel %vm1221, %v1210, %v1212
    %v1234 = vsel %vm1221, %v1212, %v1214
    %v1235 = vsel %vm1221, %v1214, %v1216
    %v1236 = vsel %vm1221, %v1216, %v1218
    %v1237 = vsel %vm1221, %v1218, %v1220
    %v1254 = vadd.f32 %v1133, %v1222
    %v1255 = vadd.f32 %v1134, %v1223
    %v1256 = vadd.f32 %v1135, %v1224
    %v1257 = vadd.f32 %v1136, %v1225
    %v1258 = vadd.f32 %v1137, %v1226
    %v1259 = vadd.f32 %v1138, %v1227
    %v1260 = vadd.f32 %v1139, %v1228
    %v1261 = vadd.f32 %v1140, %v1229
    %v1262 = vadd.f32 %v1141, %v1230
    %v1263 = vadd.f32 %v1142, %v1231
    %v1264 = vadd.f32 %v1143, %v1232
    %v1265 = vadd.f32 %v1144, %v1233
    %v1266 = vadd.f32 %v1145, %v1234
    %v1267 = vadd.f32 %v1146, %v1235
    %v1268 = vadd.f32 %v1147, %v1236
    %v1269 = vadd.f32 %v1148, %v1237
    %s1270 = scalar_lea.vmem %s55, 1 [#allocation2]
    %v1271 = vld [vmem:[%s1270] ss:$4 sm:$0xff]
    %s1272 = scalar_lea.vmem %s55, 33 [#allocation2]
    %v1273 = vld [vmem:[%s1272] ss:$4 sm:$0xff]
    %s1274 = scalar_lea.vmem %s55, 65 [#allocation2]
    %v1275 = vld [vmem:[%s1274] ss:$4 sm:$0x1]
    %v1279 = vlaneseq
    %v1280 = vshrl.u32 %v1279, 7
    %v1281 = vsub.s32 0, %v1280
    %v1282 = vrot.slane %v1271, %v1281
    %v1283 = vlaneseq
    %v1284 = vshrl.u32 %v1283, 7
    %v1285 = vsub.s32 1, %v1284
    %v1286 = vrot.slane %v1271, %v1285
    %v1287 = vlaneseq
    %v1288 = vshrl.u32 %v1287, 7
    %v1289 = vsub.s32 2, %v1288
    %v1290 = vrot.slane %v1271, %v1289
    %v1291 = vlaneseq
    %v1292 = vshrl.u32 %v1291, 7
    %v1293 = vsub.s32 3, %v1292
    %v1294 = vrot.slane %v1271, %v1293
    %v1295 = vlaneseq
    %v1296 = vshrl.u32 %v1295, 7
    %v1297 = vsub.s32 4, %v1296
    %v1298 = vrot.slane %v1271, %v1297
    %v1299 = vlaneseq
    %v1300 = vshrl.u32 %v1299, 7
    %v1301 = vsub.s32 5, %v1300
    %v1302 = vrot.slane %v1271, %v1301
    %v1303 = vlaneseq
    %v1304 = vshrl.u32 %v1303, 7
    %v1305 = vsub.s32 6, %v1304
    %v1306 = vrot.slane %v1271, %v1305
    %v1307 = vlaneseq
    %v1308 = vshrl.u32 %v1307, 7
    %v1309 = vsub.s32 7, %v1308
    %v1310 = vrot.slane %v1271, %v1309
    %v1311 = vlaneseq
    %v1312 = vshrl.u32 %v1311, 7
    %v1313 = vsub.s32 0, %v1312
    %v1314 = vrot.slane %v1273, %v1313
    %v1315 = vlaneseq
    %v1316 = vshrl.u32 %v1315, 7
    %v1317 = vsub.s32 1, %v1316
    %v1318 = vrot.slane %v1273, %v1317
    %v1319 = vlaneseq
    %v1320 = vshrl.u32 %v1319, 7
    %v1321 = vsub.s32 2, %v1320
    %v1322 = vrot.slane %v1273, %v1321
    %v1323 = vlaneseq
    %v1324 = vshrl.u32 %v1323, 7
    %v1325 = vsub.s32 3, %v1324
    %v1326 = vrot.slane %v1273, %v1325
    %v1327 = vlaneseq
    %v1328 = vshrl.u32 %v1327, 7
    %v1329 = vsub.s32 4, %v1328
    %v1330 = vrot.slane %v1273, %v1329
    %v1331 = vlaneseq
    %v1332 = vshrl.u32 %v1331, 7
    %v1333 = vsub.s32 5, %v1332
    %v1334 = vrot.slane %v1273, %v1333
    %v1335 = vlaneseq
    %v1336 = vshrl.u32 %v1335, 7
    %v1337 = vsub.s32 6, %v1336
    %v1338 = vrot.slane %v1273, %v1337
    %v1339 = vlaneseq
    %v1340 = vshrl.u32 %v1339, 7
    %v1341 = vsub.s32 7, %v1340
    %v1342 = vrot.slane %v1273, %v1341
    %v1343 = vlaneseq
    %v1344 = vshrl.u32 %v1343, 7
    %v1345 = vsub.s32 0, %v1344
    %v1346 = vrot.slane %v1275, %v1345
    %s1364 = scalar_lea.vmem %s153, 1 [#allocation2]
    %v1365 = vld [vmem:[%s1364] ss:$4 sm:$0xff]
    %s1366 = scalar_lea.vmem %s153, 33 [#allocation2]
    %v1367 = vld [vmem:[%s1366] ss:$4 sm:$0xff]
    %s1368 = scalar_lea.vmem %s153, 65 [#allocation2]
    %v1369 = vld [vmem:[%s1368] ss:$4 sm:$0x1]
    %v1373 = vlaneseq
    %v1374 = vshrl.u32 %v1373, 7
    %v1375 = vsub.s32 0, %v1374
    %v1376 = vrot.slane %v1365, %v1375
    %v1377 = vlaneseq
    %v1378 = vshrl.u32 %v1377, 7
    %v1379 = vsub.s32 1, %v1378
    %v1380 = vrot.slane %v1365, %v1379
    %v1381 = vlaneseq
    %v1382 = vshrl.u32 %v1381, 7
    %v1383 = vsub.s32 2, %v1382
    %v1384 = vrot.slane %v1365, %v1383
    %v1385 = vlaneseq
    %v1386 = vshrl.u32 %v1385, 7
    %v1387 = vsub.s32 3, %v1386
    %v1388 = vrot.slane %v1365, %v1387
    %v1389 = vlaneseq
    %v1390 = vshrl.u32 %v1389, 7
    %v1391 = vsub.s32 4, %v1390
    %v1392 = vrot.slane %v1365, %v1391
    %v1393 = vlaneseq
    %v1394 = vshrl.u32 %v1393, 7
    %v1395 = vsub.s32 5, %v1394
    %v1396 = vrot.slane %v1365, %v1395
    %v1397 = vlaneseq
    %v1398 = vshrl.u32 %v1397, 7
    %v1399 = vsub.s32 6, %v1398
    %v1400 = vrot.slane %v1365, %v1399
    %v1401 = vlaneseq
    %v1402 = vshrl.u32 %v1401, 7
    %v1403 = vsub.s32 7, %v1402
    %v1404 = vrot.slane %v1365, %v1403
    %v1405 = vlaneseq
    %v1406 = vshrl.u32 %v1405, 7
    %v1407 = vsub.s32 0, %v1406
    %v1408 = vrot.slane %v1367, %v1407
    %v1409 = vlaneseq
    %v1410 = vshrl.u32 %v1409, 7
    %v1411 = vsub.s32 1, %v1410
    %v1412 = vrot.slane %v1367, %v1411
    %v1413 = vlaneseq
    %v1414 = vshrl.u32 %v1413, 7
    %v1415 = vsub.s32 2, %v1414
    %v1416 = vrot.slane %v1367, %v1415
    %v1417 = vlaneseq
    %v1418 = vshrl.u32 %v1417, 7
    %v1419 = vsub.s32 3, %v1418
    %v1420 = vrot.slane %v1367, %v1419
    %v1421 = vlaneseq
    %v1422 = vshrl.u32 %v1421, 7
    %v1423 = vsub.s32 4, %v1422
    %v1424 = vrot.slane %v1367, %v1423
    %v1425 = vlaneseq
    %v1426 = vshrl.u32 %v1425, 7
    %v1427 = vsub.s32 5, %v1426
    %v1428 = vrot.slane %v1367, %v1427
    %v1429 = vlaneseq
    %v1430 = vshrl.u32 %v1429, 7
    %v1431 = vsub.s32 6, %v1430
    %v1432 = vrot.slane %v1367, %v1431
    %v1433 = vlaneseq
    %v1434 = vshrl.u32 %v1433, 7
    %v1435 = vsub.s32 7, %v1434
    %v1436 = vrot.slane %v1367, %v1435
    %v1437 = vlaneseq
    %v1438 = vshrl.u32 %v1437, 7
    %v1439 = vsub.s32 0, %v1438
    %v1440 = vrot.slane %v1369, %v1439
    %v1458 = vsel %vm247, %v1282, %v1376
    %v1459 = vsel %vm247, %v1286, %v1380
    %v1460 = vsel %vm247, %v1290, %v1384
    %v1461 = vsel %vm247, %v1294, %v1388
    %v1462 = vsel %vm247, %v1298, %v1392
    %v1463 = vsel %vm247, %v1302, %v1396
    %v1464 = vsel %vm247, %v1306, %v1400
    %v1465 = vsel %vm247, %v1310, %v1404
    %v1466 = vsel %vm247, %v1314, %v1408
    %v1467 = vsel %vm247, %v1318, %v1412
    %v1468 = vsel %vm247, %v1322, %v1416
    %v1469 = vsel %vm247, %v1326, %v1420
    %v1470 = vsel %vm247, %v1330, %v1424
    %v1471 = vsel %vm247, %v1334, %v1428
    %v1472 = vsel %vm247, %v1338, %v1432
    %v1473 = vsel %vm247, %v1342, %v1436
    %v1474 = vsel %vm247, %v1346, %v1440
    %1475 = vset.pattern.permute.xlu0 9
    %1476 = vperm.xlu0 %1475, %v50
    %v1477 = vpop.permute.xlu0 %1476
    %v1479 = vmul.f32 %v1477, %v1458
    %v1480 = vmul.f32 %v1477, %v1459
    %v1481 = vmul.f32 %v1477, %v1460
    %v1482 = vmul.f32 %v1477, %v1461
    %v1483 = vmul.f32 %v1477, %v1462
    %v1484 = vmul.f32 %v1477, %v1463
    %v1485 = vmul.f32 %v1477, %v1464
    %v1486 = vmul.f32 %v1477, %v1465
    %v1487 = vmul.f32 %v1477, %v1466
    %v1488 = vmul.f32 %v1477, %v1467
    %v1489 = vmul.f32 %v1477, %v1468
    %v1490 = vmul.f32 %v1477, %v1469
    %v1491 = vmul.f32 %v1477, %v1470
    %v1492 = vmul.f32 %v1477, %v1471
    %v1493 = vmul.f32 %v1477, %v1472
    %v1494 = vmul.f32 %v1477, %v1473
    %v1495 = vadd.f32 %v1254, %v1479
    %v1496 = vadd.f32 %v1255, %v1480
    %v1497 = vadd.f32 %v1256, %v1481
    %v1498 = vadd.f32 %v1257, %v1482
    %v1499 = vadd.f32 %v1258, %v1483
    %v1500 = vadd.f32 %v1259, %v1484
    %v1501 = vadd.f32 %v1260, %v1485
    %v1502 = vadd.f32 %v1261, %v1486
    %v1503 = vadd.f32 %v1262, %v1487
    %v1504 = vadd.f32 %v1263, %v1488
    %v1505 = vadd.f32 %v1264, %v1489
    %v1506 = vadd.f32 %v1265, %v1490
    %v1507 = vadd.f32 %v1266, %v1491
    %v1508 = vadd.f32 %v1267, %v1492
    %v1509 = vadd.f32 %v1268, %v1493
    %v1510 = vadd.f32 %v1269, %v1494
    %1511 = vset.pattern.permute.xlu0 10
    %1512 = vperm.xlu0 %1511, %v50
    %v1513 = vpop.permute.xlu0 %1512
    %v1515 = vmul.f32 %v1513, %v1458
    %v1516 = vmul.f32 %v1513, %v1459
    %v1517 = vmul.f32 %v1513, %v1460
    %v1518 = vmul.f32 %v1513, %v1461
    %v1519 = vmul.f32 %v1513, %v1462
    %v1520 = vmul.f32 %v1513, %v1463
    %v1521 = vmul.f32 %v1513, %v1464
    %v1522 = vmul.f32 %v1513, %v1465
    %v1523 = vmul.f32 %v1513, %v1466
    %v1524 = vmul.f32 %v1513, %v1467
    %v1525 = vmul.f32 %v1513, %v1468
    %v1526 = vmul.f32 %v1513, %v1469
    %v1527 = vmul.f32 %v1513, %v1470
    %v1528 = vmul.f32 %v1513, %v1471
    %v1529 = vmul.f32 %v1513, %v1472
    %v1530 = vmul.f32 %v1513, %v1473
    %v1531 = vmul.f32 %v1513, %v1474
    %1549 = vrot.lane.b32.xlu0 %v1515, 127
    %v1550 = vpop.permute.xlu0 %1549
    %1551 = vrot.lane.b32.xlu0 %v1516, 127
    %v1552 = vpop.permute.xlu0 %1551
    %1553 = vrot.lane.b32.xlu0 %v1517, 127
    %v1554 = vpop.permute.xlu0 %1553
    %1555 = vrot.lane.b32.xlu0 %v1518, 127
    %v1556 = vpop.permute.xlu0 %1555
    %1557 = vrot.lane.b32.xlu0 %v1519, 127
    %v1558 = vpop.permute.xlu0 %1557
    %1559 = vrot.lane.b32.xlu0 %v1520, 127
    %v1560 = vpop.permute.xlu0 %1559
    %1561 = vrot.lane.b32.xlu0 %v1521, 127
    %v1562 = vpop.permute.xlu0 %1561
    %1563 = vrot.lane.b32.xlu0 %v1522, 127
    %v1564 = vpop.permute.xlu0 %1563
    %1565 = vrot.lane.b32.xlu0 %v1523, 127
    %v1566 = vpop.permute.xlu0 %1565
    %1567 = vrot.lane.b32.xlu0 %v1524, 127
    %v1568 = vpop.permute.xlu0 %1567
    %1569 = vrot.lane.b32.xlu0 %v1525, 127
    %v1570 = vpop.permute.xlu0 %1569
    %1571 = vrot.lane.b32.xlu0 %v1526, 127
    %v1572 = vpop.permute.xlu0 %1571
    %1573 = vrot.lane.b32.xlu0 %v1527, 127
    %v1574 = vpop.permute.xlu0 %1573
    %1575 = vrot.lane.b32.xlu0 %v1528, 127
    %v1576 = vpop.permute.xlu0 %1575
    %1577 = vrot.lane.b32.xlu0 %v1529, 127
    %v1578 = vpop.permute.xlu0 %1577
    %1579 = vrot.lane.b32.xlu0 %v1530, 127
    %v1580 = vpop.permute.xlu0 %1579
    %1581 = vrot.lane.b32.xlu0 %v1531, 127
    %v1582 = vpop.permute.xlu0 %1581
    %v1583 = vsel %vm374, %v1550, %v1552
    %v1584 = vsel %vm374, %v1552, %v1554
    %v1585 = vsel %vm374, %v1554, %v1556
    %v1586 = vsel %vm374, %v1556, %v1558
    %v1587 = vsel %vm374, %v1558, %v1560
    %v1588 = vsel %vm374, %v1560, %v1562
    %v1589 = vsel %vm374, %v1562, %v1564
    %v1590 = vsel %vm374, %v1564, %v1566
    %v1591 = vsel %vm374, %v1566, %v1568
    %v1592 = vsel %vm374, %v1568, %v1570
    %v1593 = vsel %vm374, %v1570, %v1572
    %v1594 = vsel %vm374, %v1572, %v1574
    %v1595 = vsel %vm374, %v1574, %v1576
    %v1596 = vsel %vm374, %v1576, %v1578
    %v1597 = vsel %vm374, %v1578, %v1580
    %v1598 = vsel %vm374, %v1580, %v1582
    %v1615 = vadd.f32 %v1495, %v1583
    %v1616 = vadd.f32 %v1496, %v1584
    %v1617 = vadd.f32 %v1497, %v1585
    %v1618 = vadd.f32 %v1498, %v1586
    %v1619 = vadd.f32 %v1499, %v1587
    %v1620 = vadd.f32 %v1500, %v1588
    %v1621 = vadd.f32 %v1501, %v1589
    %v1622 = vadd.f32 %v1502, %v1590
    %v1623 = vadd.f32 %v1503, %v1591
    %v1624 = vadd.f32 %v1504, %v1592
    %v1625 = vadd.f32 %v1505, %v1593
    %v1626 = vadd.f32 %v1506, %v1594
    %v1627 = vadd.f32 %v1507, %v1595
    %v1628 = vadd.f32 %v1508, %v1596
    %v1629 = vadd.f32 %v1509, %v1597
    %v1630 = vadd.f32 %v1510, %v1598
    %1631 = vset.pattern.permute.xlu0 11
    %1632 = vperm.xlu0 %1631, %v50
    %v1633 = vpop.permute.xlu0 %1632
    %v1635 = vmul.f32 %v1633, %v1458
    %v1636 = vmul.f32 %v1633, %v1459
    %v1637 = vmul.f32 %v1633, %v1460
    %v1638 = vmul.f32 %v1633, %v1461
    %v1639 = vmul.f32 %v1633, %v1462
    %v1640 = vmul.f32 %v1633, %v1463
    %v1641 = vmul.f32 %v1633, %v1464
    %v1642 = vmul.f32 %v1633, %v1465
    %v1643 = vmul.f32 %v1633, %v1466
    %v1644 = vmul.f32 %v1633, %v1467
    %v1645 = vmul.f32 %v1633, %v1468
    %v1646 = vmul.f32 %v1633, %v1469
    %v1647 = vmul.f32 %v1633, %v1470
    %v1648 = vmul.f32 %v1633, %v1471
    %v1649 = vmul.f32 %v1633, %v1472
    %v1650 = vmul.f32 %v1633, %v1473
    %v1651 = vmul.f32 %v1633, %v1474
    %1669 = vrot.lane.b32.xlu0 %v1635, 126
    %v1670 = vpop.permute.xlu0 %1669
    %1671 = vrot.lane.b32.xlu0 %v1636, 126
    %v1672 = vpop.permute.xlu0 %1671
    %1673 = vrot.lane.b32.xlu0 %v1637, 126
    %v1674 = vpop.permute.xlu0 %1673
    %1675 = vrot.lane.b32.xlu0 %v1638, 126
    %v1676 = vpop.permute.xlu0 %1675
    %1677 = vrot.lane.b32.xlu0 %v1639, 126
    %v1678 = vpop.permute.xlu0 %1677
    %1679 = vrot.lane.b32.xlu0 %v1640, 126
    %v1680 = vpop.permute.xlu0 %1679
    %1681 = vrot.lane.b32.xlu0 %v1641, 126
    %v1682 = vpop.permute.xlu0 %1681
    %1683 = vrot.lane.b32.xlu0 %v1642, 126
    %v1684 = vpop.permute.xlu0 %1683
    %1685 = vrot.lane.b32.xlu0 %v1643, 126
    %v1686 = vpop.permute.xlu0 %1685
    %1687 = vrot.lane.b32.xlu0 %v1644, 126
    %v1688 = vpop.permute.xlu0 %1687
    %1689 = vrot.lane.b32.xlu0 %v1645, 126
    %v1690 = vpop.permute.xlu0 %1689
    %1691 = vrot.lane.b32.xlu0 %v1646, 126
    %v1692 = vpop.permute.xlu0 %1691
    %1693 = vrot.lane.b32.xlu0 %v1647, 126
    %v1694 = vpop.permute.xlu0 %1693
    %1695 = vrot.lane.b32.xlu0 %v1648, 126
    %v1696 = vpop.permute.xlu0 %1695
    %1697 = vrot.lane.b32.xlu0 %v1649, 126
    %v1698 = vpop.permute.xlu0 %1697
    %1699 = vrot.lane.b32.xlu0 %v1650, 126
    %v1700 = vpop.permute.xlu0 %1699
    %1701 = vrot.lane.b32.xlu0 %v1651, 126
    %v1702 = vpop.permute.xlu0 %1701
    %v1703 = vsel %vm495, %v1670, %v1672
    %v1704 = vsel %vm495, %v1672, %v1674
    %v1705 = vsel %vm495, %v1674, %v1676
    %v1706 = vsel %vm495, %v1676, %v1678
    %v1707 = vsel %vm495, %v1678, %v1680
    %v1708 = vsel %vm495, %v1680, %v1682
    %v1709 = vsel %vm495, %v1682, %v1684
    %v1710 = vsel %vm495, %v1684, %v1686
    %v1711 = vsel %vm495, %v1686, %v1688
    %v1712 = vsel %vm495, %v1688, %v1690
    %v1713 = vsel %vm495, %v1690, %v1692
    %v1714 = vsel %vm495, %v1692, %v1694
    %v1715 = vsel %vm495, %v1694, %v1696
    %v1716 = vsel %vm495, %v1696, %v1698
    %v1717 = vsel %vm495, %v1698, %v1700
    %v1718 = vsel %vm495, %v1700, %v1702
    %v1735 = vadd.f32 %v1615, %v1703
    %v1736 = vadd.f32 %v1616, %v1704
    %v1737 = vadd.f32 %v1617, %v1705
    %v1738 = vadd.f32 %v1618, %v1706
    %v1739 = vadd.f32 %v1619, %v1707
    %v1740 = vadd.f32 %v1620, %v1708
    %v1741 = vadd.f32 %v1621, %v1709
    %v1742 = vadd.f32 %v1622, %v1710
    %v1743 = vadd.f32 %v1623, %v1711
    %v1744 = vadd.f32 %v1624, %v1712
    %v1745 = vadd.f32 %v1625, %v1713
    %v1746 = vadd.f32 %v1626, %v1714
    %v1747 = vadd.f32 %v1627, %v1715
    %v1748 = vadd.f32 %v1628, %v1716
    %v1749 = vadd.f32 %v1629, %v1717
    %v1750 = vadd.f32 %v1630, %v1718
    %1751 = vset.pattern.permute.xlu0 12
    %1752 = vperm.xlu0 %1751, %v50
    %v1753 = vpop.permute.xlu0 %1752
    %v1755 = vmul.f32 %v1753, %v1458
    %v1756 = vmul.f32 %v1753, %v1459
    %v1757 = vmul.f32 %v1753, %v1460
    %v1758 = vmul.f32 %v1753, %v1461
    %v1759 = vmul.f32 %v1753, %v1462
    %v1760 = vmul.f32 %v1753, %v1463
    %v1761 = vmul.f32 %v1753, %v1464
    %v1762 = vmul.f32 %v1753, %v1465
    %v1763 = vmul.f32 %v1753, %v1466
    %v1764 = vmul.f32 %v1753, %v1467
    %v1765 = vmul.f32 %v1753, %v1468
    %v1766 = vmul.f32 %v1753, %v1469
    %v1767 = vmul.f32 %v1753, %v1470
    %v1768 = vmul.f32 %v1753, %v1471
    %v1769 = vmul.f32 %v1753, %v1472
    %v1770 = vmul.f32 %v1753, %v1473
    %v1771 = vmul.f32 %v1753, %v1474
    %1789 = vrot.lane.b32.xlu0 %v1755, 94
    %v1790 = vpop.permute.xlu0 %1789
    %1791 = vrot.lane.b32.xlu0 %v1756, 94
    %v1792 = vpop.permute.xlu0 %1791
    %1793 = vrot.lane.b32.xlu0 %v1757, 94
    %v1794 = vpop.permute.xlu0 %1793
    %1795 = vrot.lane.b32.xlu0 %v1758, 94
    %v1796 = vpop.permute.xlu0 %1795
    %1797 = vrot.lane.b32.xlu0 %v1759, 94
    %v1798 = vpop.permute.xlu0 %1797
    %1799 = vrot.lane.b32.xlu0 %v1760, 94
    %v1800 = vpop.permute.xlu0 %1799
    %1801 = vrot.lane.b32.xlu0 %v1761, 94
    %v1802 = vpop.permute.xlu0 %1801
    %1803 = vrot.lane.b32.xlu0 %v1762, 94
    %v1804 = vpop.permute.xlu0 %1803
    %1805 = vrot.lane.b32.xlu0 %v1763, 94
    %v1806 = vpop.permute.xlu0 %1805
    %1807 = vrot.lane.b32.xlu0 %v1764, 94
    %v1808 = vpop.permute.xlu0 %1807
    %1809 = vrot.lane.b32.xlu0 %v1765, 94
    %v1810 = vpop.permute.xlu0 %1809
    %1811 = vrot.lane.b32.xlu0 %v1766, 94
    %v1812 = vpop.permute.xlu0 %1811
    %1813 = vrot.lane.b32.xlu0 %v1767, 94
    %v1814 = vpop.permute.xlu0 %1813
    %1815 = vrot.lane.b32.xlu0 %v1768, 94
    %v1816 = vpop.permute.xlu0 %1815
    %1817 = vrot.lane.b32.xlu0 %v1769, 94
    %v1818 = vpop.permute.xlu0 %1817
    %1819 = vrot.lane.b32.xlu0 %v1770, 94
    %v1820 = vpop.permute.xlu0 %1819
    %1821 = vrot.lane.b32.xlu0 %v1771, 94
    %v1822 = vpop.permute.xlu0 %1821
    %v1823 = vsel %vm616, %v1790, %v1792
    %v1824 = vsel %vm616, %v1792, %v1794
    %v1825 = vsel %vm616, %v1794, %v1796
    %v1826 = vsel %vm616, %v1796, %v1798
    %v1827 = vsel %vm616, %v1798, %v1800
    %v1828 = vsel %vm616, %v1800, %v1802
    %v1829 = vsel %vm616, %v1802, %v1804
    %v1830 = vsel %vm616, %v1804, %v1806
    %v1831 = vsel %vm616, %v1806, %v1808
    %v1832 = vsel %vm616, %v1808, %v1810
    %v1833 = vsel %vm616, %v1810, %v1812
    %v1834 = vsel %vm616, %v1812, %v1814
    %v1835 = vsel %vm616, %v1814, %v1816
    %v1836 = vsel %vm616, %v1816, %v1818
    %v1837 = vsel %vm616, %v1818, %v1820
    %v1838 = vsel %vm616, %v1820, %v1822
    %v1855 = vadd.f32 %v1735, %v1823
    %v1856 = vadd.f32 %v1736, %v1824
    %v1857 = vadd.f32 %v1737, %v1825
    %v1858 = vadd.f32 %v1738, %v1826
    %v1859 = vadd.f32 %v1739, %v1827
    %v1860 = vadd.f32 %v1740, %v1828
    %v1861 = vadd.f32 %v1741, %v1829
    %v1862 = vadd.f32 %v1742, %v1830
    %v1863 = vadd.f32 %v1743, %v1831
    %v1864 = vadd.f32 %v1744, %v1832
    %v1865 = vadd.f32 %v1745, %v1833
    %v1866 = vadd.f32 %v1746, %v1834
    %v1867 = vadd.f32 %v1747, %v1835
    %v1868 = vadd.f32 %v1748, %v1836
    %v1869 = vadd.f32 %v1749, %v1837
    %v1870 = vadd.f32 %v1750, %v1838
    %1871 = vset.pattern.permute.xlu0 13
    %1872 = vperm.xlu0 %1871, %v50
    %v1873 = vpop.permute.xlu0 %1872
    %v1875 = vmul.f32 %v1873, %v1458
    %v1876 = vmul.f32 %v1873, %v1459
    %v1877 = vmul.f32 %v1873, %v1460
    %v1878 = vmul.f32 %v1873, %v1461
    %v1879 = vmul.f32 %v1873, %v1462
    %v1880 = vmul.f32 %v1873, %v1463
    %v1881 = vmul.f32 %v1873, %v1464
    %v1882 = vmul.f32 %v1873, %v1465
    %v1883 = vmul.f32 %v1873, %v1466
    %v1884 = vmul.f32 %v1873, %v1467
    %v1885 = vmul.f32 %v1873, %v1468
    %v1886 = vmul.f32 %v1873, %v1469
    %v1887 = vmul.f32 %v1873, %v1470
    %v1888 = vmul.f32 %v1873, %v1471
    %v1889 = vmul.f32 %v1873, %v1472
    %v1890 = vmul.f32 %v1873, %v1473
    %v1891 = vmul.f32 %v1873, %v1474
    %1909 = vrot.lane.b32.xlu0 %v1875, 93
    %v1910 = vpop.permute.xlu0 %1909
    %1911 = vrot.lane.b32.xlu0 %v1876, 93
    %v1912 = vpop.permute.xlu0 %1911
    %1913 = vrot.lane.b32.xlu0 %v1877, 93
    %v1914 = vpop.permute.xlu0 %1913
    %1915 = vrot.lane.b32.xlu0 %v1878, 93
    %v1916 = vpop.permute.xlu0 %1915
    %1917 = vrot.lane.b32.xlu0 %v1879, 93
    %v1918 = vpop.permute.xlu0 %1917
    %1919 = vrot.lane.b32.xlu0 %v1880, 93
    %v1920 = vpop.permute.xlu0 %1919
    %1921 = vrot.lane.b32.xlu0 %v1881, 93
    %v1922 = vpop.permute.xlu0 %1921
    %1923 = vrot.lane.b32.xlu0 %v1882, 93
    %v1924 = vpop.permute.xlu0 %1923
    %1925 = vrot.lane.b32.xlu0 %v1883, 93
    %v1926 = vpop.permute.xlu0 %1925
    %1927 = vrot.lane.b32.xlu0 %v1884, 93
    %v1928 = vpop.permute.xlu0 %1927
    %1929 = vrot.lane.b32.xlu0 %v1885, 93
    %v1930 = vpop.permute.xlu0 %1929
    %1931 = vrot.lane.b32.xlu0 %v1886, 93
    %v1932 = vpop.permute.xlu0 %1931
    %1933 = vrot.lane.b32.xlu0 %v1887, 93
    %v1934 = vpop.permute.xlu0 %1933
    %1935 = vrot.lane.b32.xlu0 %v1888, 93
    %v1936 = vpop.permute.xlu0 %1935
    %1937 = vrot.lane.b32.xlu0 %v1889, 93
    %v1938 = vpop.permute.xlu0 %1937
    %1939 = vrot.lane.b32.xlu0 %v1890, 93
    %v1940 = vpop.permute.xlu0 %1939
    %1941 = vrot.lane.b32.xlu0 %v1891, 93
    %v1942 = vpop.permute.xlu0 %1941
    %v1943 = vsel %vm737, %v1910, %v1912
    %v1944 = vsel %vm737, %v1912, %v1914
    %v1945 = vsel %vm737, %v1914, %v1916
    %v1946 = vsel %vm737, %v1916, %v1918
    %v1947 = vsel %vm737, %v1918, %v1920
    %v1948 = vsel %vm737, %v1920, %v1922
    %v1949 = vsel %vm737, %v1922, %v1924
    %v1950 = vsel %vm737, %v1924, %v1926
    %v1951 = vsel %vm737, %v1926, %v1928
    %v1952 = vsel %vm737, %v1928, %v1930
    %v1953 = vsel %vm737, %v1930, %v1932
    %v1954 = vsel %vm737, %v1932, %v1934
    %v1955 = vsel %vm737, %v1934, %v1936
    %v1956 = vsel %vm737, %v1936, %v1938
    %v1957 = vsel %vm737, %v1938, %v1940
    %v1958 = vsel %vm737, %v1940, %v1942
    %v1975 = vadd.f32 %v1855, %v1943
    %v1976 = vadd.f32 %v1856, %v1944
    %v1977 = vadd.f32 %v1857, %v1945
    %v1978 = vadd.f32 %v1858, %v1946
    %v1979 = vadd.f32 %v1859, %v1947
    %v1980 = vadd.f32 %v1860, %v1948
    %v1981 = vadd.f32 %v1861, %v1949
    %v1982 = vadd.f32 %v1862, %v1950
    %v1983 = vadd.f32 %v1863, %v1951
    %v1984 = vadd.f32 %v1864, %v1952
    %v1985 = vadd.f32 %v1865, %v1953
    %v1986 = vadd.f32 %v1866, %v1954
    %v1987 = vadd.f32 %v1867, %v1955
    %v1988 = vadd.f32 %v1868, %v1956
    %v1989 = vadd.f32 %v1869, %v1957
    %v1990 = vadd.f32 %v1870, %v1958
    %1991 = vset.pattern.permute.xlu0 14
    %1992 = vperm.xlu0 %1991, %v50
    %v1993 = vpop.permute.xlu0 %1992
    %v1995 = vmul.f32 %v1993, %v1458
    %v1996 = vmul.f32 %v1993, %v1459
    %v1997 = vmul.f32 %v1993, %v1460
    %v1998 = vmul.f32 %v1993, %v1461
    %v1999 = vmul.f32 %v1993, %v1462
    %v2000 = vmul.f32 %v1993, %v1463
    %v2001 = vmul.f32 %v1993, %v1464
    %v2002 = vmul.f32 %v1993, %v1465
    %v2003 = vmul.f32 %v1993, %v1466
    %v2004 = vmul.f32 %v1993, %v1467
    %v2005 = vmul.f32 %v1993, %v1468
    %v2006 = vmul.f32 %v1993, %v1469
    %v2007 = vmul.f32 %v1993, %v1470
    %v2008 = vmul.f32 %v1993, %v1471
    %v2009 = vmul.f32 %v1993, %v1472
    %v2010 = vmul.f32 %v1993, %v1473
    %v2011 = vmul.f32 %v1993, %v1474
    %2029 = vrot.lane.b32.xlu0 %v1995, 92
    %v2030 = vpop.permute.xlu0 %2029
    %2031 = vrot.lane.b32.xlu0 %v1996, 92
    %v2032 = vpop.permute.xlu0 %2031
    %2033 = vrot.lane.b32.xlu0 %v1997, 92
    %v2034 = vpop.permute.xlu0 %2033
    %2035 = vrot.lane.b32.xlu0 %v1998, 92
    %v2036 = vpop.permute.xlu0 %2035
    %2037 = vrot.lane.b32.xlu0 %v1999, 92
    %v2038 = vpop.permute.xlu0 %2037
    %2039 = vrot.lane.b32.xlu0 %v2000, 92
    %v2040 = vpop.permute.xlu0 %2039
    %2041 = vrot.lane.b32.xlu0 %v2001, 92
    %v2042 = vpop.permute.xlu0 %2041
    %2043 = vrot.lane.b32.xlu0 %v2002, 92
    %v2044 = vpop.permute.xlu0 %2043
    %2045 = vrot.lane.b32.xlu0 %v2003, 92
    %v2046 = vpop.permute.xlu0 %2045
    %2047 = vrot.lane.b32.xlu0 %v2004, 92
    %v2048 = vpop.permute.xlu0 %2047
    %2049 = vrot.lane.b32.xlu0 %v2005, 92
    %v2050 = vpop.permute.xlu0 %2049
    %2051 = vrot.lane.b32.xlu0 %v2006, 92
    %v2052 = vpop.permute.xlu0 %2051
    %2053 = vrot.lane.b32.xlu0 %v2007, 92
    %v2054 = vpop.permute.xlu0 %2053
    %2055 = vrot.lane.b32.xlu0 %v2008, 92
    %v2056 = vpop.permute.xlu0 %2055
    %2057 = vrot.lane.b32.xlu0 %v2009, 92
    %v2058 = vpop.permute.xlu0 %2057
    %2059 = vrot.lane.b32.xlu0 %v2010, 92
    %v2060 = vpop.permute.xlu0 %2059
    %2061 = vrot.lane.b32.xlu0 %v2011, 92
    %v2062 = vpop.permute.xlu0 %2061
    %v2063 = vsel %vm858, %v2030, %v2032
    %v2064 = vsel %vm858, %v2032, %v2034
    %v2065 = vsel %vm858, %v2034, %v2036
    %v2066 = vsel %vm858, %v2036, %v2038
    %v2067 = vsel %vm858, %v2038, %v2040
    %v2068 = vsel %vm858, %v2040, %v2042
    %v2069 = vsel %vm858, %v2042, %v2044
    %v2070 = vsel %vm858, %v2044, %v2046
    %v2071 = vsel %vm858, %v2046, %v2048
    %v2072 = vsel %vm858, %v2048, %v2050
    %v2073 = vsel %vm858, %v2050, %v2052
    %v2074 = vsel %vm858, %v2052, %v2054
    %v2075 = vsel %vm858, %v2054, %v2056
    %v2076 = vsel %vm858, %v2056, %v2058
    %v2077 = vsel %vm858, %v2058, %v2060
    %v2078 = vsel %vm858, %v2060, %v2062
    %v2095 = vadd.f32 %v1975, %v2063
    %v2096 = vadd.f32 %v1976, %v2064
    %v2097 = vadd.f32 %v1977, %v2065
    %v2098 = vadd.f32 %v1978, %v2066
    %v2099 = vadd.f32 %v1979, %v2067
    %v2100 = vadd.f32 %v1980, %v2068
    %v2101 = vadd.f32 %v1981, %v2069
    %v2102 = vadd.f32 %v1982, %v2070
    %v2103 = vadd.f32 %v1983, %v2071
    %v2104 = vadd.f32 %v1984, %v2072
    %v2105 = vadd.f32 %v1985, %v2073
    %v2106 = vadd.f32 %v1986, %v2074
    %v2107 = vadd.f32 %v1987, %v2075
    %v2108 = vadd.f32 %v1988, %v2076
    %v2109 = vadd.f32 %v1989, %v2077
    %v2110 = vadd.f32 %v1990, %v2078
    %2111 = vset.pattern.permute.xlu0 15
    %2112 = vperm.xlu0 %2111, %v50
    %v2113 = vpop.permute.xlu0 %2112
    %v2115 = vmul.f32 %v2113, %v1458
    %v2116 = vmul.f32 %v2113, %v1459
    %v2117 = vmul.f32 %v2113, %v1460
    %v2118 = vmul.f32 %v2113, %v1461
    %v2119 = vmul.f32 %v2113, %v1462
    %v2120 = vmul.f32 %v2113, %v1463
    %v2121 = vmul.f32 %v2113, %v1464
    %v2122 = vmul.f32 %v2113, %v1465
    %v2123 = vmul.f32 %v2113, %v1466
    %v2124 = vmul.f32 %v2113, %v1467
    %v2125 = vmul.f32 %v2113, %v1468
    %v2126 = vmul.f32 %v2113, %v1469
    %v2127 = vmul.f32 %v2113, %v1470
    %v2128 = vmul.f32 %v2113, %v1471
    %v2129 = vmul.f32 %v2113, %v1472
    %v2130 = vmul.f32 %v2113, %v1473
    %v2131 = vmul.f32 %v2113, %v1474
    %2149 = vrot.lane.b32.xlu0 %v2115, 60
    %v2150 = vpop.permute.xlu0 %2149
    %2151 = vrot.lane.b32.xlu0 %v2116, 60
    %v2152 = vpop.permute.xlu0 %2151
    %2153 = vrot.lane.b32.xlu0 %v2117, 60
    %v2154 = vpop.permute.xlu0 %2153
    %2155 = vrot.lane.b32.xlu0 %v2118, 60
    %v2156 = vpop.permute.xlu0 %2155
    %2157 = vrot.lane.b32.xlu0 %v2119, 60
    %v2158 = vpop.permute.xlu0 %2157
    %2159 = vrot.lane.b32.xlu0 %v2120, 60
    %v2160 = vpop.permute.xlu0 %2159
    %2161 = vrot.lane.b32.xlu0 %v2121, 60
    %v2162 = vpop.permute.xlu0 %2161
    %2163 = vrot.lane.b32.xlu0 %v2122, 60
    %v2164 = vpop.permute.xlu0 %2163
    %2165 = vrot.lane.b32.xlu0 %v2123, 60
    %v2166 = vpop.permute.xlu0 %2165
    %2167 = vrot.lane.b32.xlu0 %v2124, 60
    %v2168 = vpop.permute.xlu0 %2167
    %2169 = vrot.lane.b32.xlu0 %v2125, 60
    %v2170 = vpop.permute.xlu0 %2169
    %2171 = vrot.lane.b32.xlu0 %v2126, 60
    %v2172 = vpop.permute.xlu0 %2171
    %2173 = vrot.lane.b32.xlu0 %v2127, 60
    %v2174 = vpop.permute.xlu0 %2173
    %2175 = vrot.lane.b32.xlu0 %v2128, 60
    %v2176 = vpop.permute.xlu0 %2175
    %2177 = vrot.lane.b32.xlu0 %v2129, 60
    %v2178 = vpop.permute.xlu0 %2177
    %2179 = vrot.lane.b32.xlu0 %v2130, 60
    %v2180 = vpop.permute.xlu0 %2179
    %2181 = vrot.lane.b32.xlu0 %v2131, 60
    %v2182 = vpop.permute.xlu0 %2181
    %v2183 = vsel %vm979, %v2150, %v2152
    %v2184 = vsel %vm979, %v2152, %v2154
    %v2185 = vsel %vm979, %v2154, %v2156
    %v2186 = vsel %vm979, %v2156, %v2158
    %v2187 = vsel %vm979, %v2158, %v2160
    %v2188 = vsel %vm979, %v2160, %v2162
    %v2189 = vsel %vm979, %v2162, %v2164
    %v2190 = vsel %vm979, %v2164, %v2166
    %v2191 = vsel %vm979, %v2166, %v2168
    %v2192 = vsel %vm979, %v2168, %v2170
    %v2193 = vsel %vm979, %v2170, %v2172
    %v2194 = vsel %vm979, %v2172, %v2174
    %v2195 = vsel %vm979, %v2174, %v2176
    %v2196 = vsel %vm979, %v2176, %v2178
    %v2197 = vsel %vm979, %v2178, %v2180
    %v2198 = vsel %vm979, %v2180, %v2182
    %v2215 = vadd.f32 %v2095, %v2183
    %v2216 = vadd.f32 %v2096, %v2184
    %v2217 = vadd.f32 %v2097, %v2185
    %v2218 = vadd.f32 %v2098, %v2186
    %v2219 = vadd.f32 %v2099, %v2187
    %v2220 = vadd.f32 %v2100, %v2188
    %v2221 = vadd.f32 %v2101, %v2189
    %v2222 = vadd.f32 %v2102, %v2190
    %v2223 = vadd.f32 %v2103, %v2191
    %v2224 = vadd.f32 %v2104, %v2192
    %v2225 = vadd.f32 %v2105, %v2193
    %v2226 = vadd.f32 %v2106, %v2194
    %v2227 = vadd.f32 %v2107, %v2195
    %v2228 = vadd.f32 %v2108, %v2196
    %v2229 = vadd.f32 %v2109, %v2197
    %v2230 = vadd.f32 %v2110, %v2198
    %2231 = vset.pattern.permute.xlu0 16
    %2232 = vperm.xlu0 %2231, %v50
    %v2233 = vpop.permute.xlu0 %2232
    %v2235 = vmul.f32 %v2233, %v1458
    %v2236 = vmul.f32 %v2233, %v1459
    %v2237 = vmul.f32 %v2233, %v1460
    %v2238 = vmul.f32 %v2233, %v1461
    %v2239 = vmul.f32 %v2233, %v1462
    %v2240 = vmul.f32 %v2233, %v1463
    %v2241 = vmul.f32 %v2233, %v1464
    %v2242 = vmul.f32 %v2233, %v1465
    %v2243 = vmul.f32 %v2233, %v1466
    %v2244 = vmul.f32 %v2233, %v1467
    %v2245 = vmul.f32 %v2233, %v1468
    %v2246 = vmul.f32 %v2233, %v1469
    %v2247 = vmul.f32 %v2233, %v1470
    %v2248 = vmul.f32 %v2233, %v1471
    %v2249 = vmul.f32 %v2233, %v1472
    %v2250 = vmul.f32 %v2233, %v1473
    %v2251 = vmul.f32 %v2233, %v1474
    %2269 = vrot.lane.b32.xlu0 %v2235, 59
    %v2270 = vpop.permute.xlu0 %2269
    %2271 = vrot.lane.b32.xlu0 %v2236, 59
    %v2272 = vpop.permute.xlu0 %2271
    %2273 = vrot.lane.b32.xlu0 %v2237, 59
    %v2274 = vpop.permute.xlu0 %2273
    %2275 = vrot.lane.b32.xlu0 %v2238, 59
    %v2276 = vpop.permute.xlu0 %2275
    %2277 = vrot.lane.b32.xlu0 %v2239, 59
    %v2278 = vpop.permute.xlu0 %2277
    %2279 = vrot.lane.b32.xlu0 %v2240, 59
    %v2280 = vpop.permute.xlu0 %2279
    %2281 = vrot.lane.b32.xlu0 %v2241, 59
    %v2282 = vpop.permute.xlu0 %2281
    %2283 = vrot.lane.b32.xlu0 %v2242, 59
    %v2284 = vpop.permute.xlu0 %2283
    %2285 = vrot.lane.b32.xlu0 %v2243, 59
    %v2286 = vpop.permute.xlu0 %2285
    %2287 = vrot.lane.b32.xlu0 %v2244, 59
    %v2288 = vpop.permute.xlu0 %2287
    %2289 = vrot.lane.b32.xlu0 %v2245, 59
    %v2290 = vpop.permute.xlu0 %2289
    %2291 = vrot.lane.b32.xlu0 %v2246, 59
    %v2292 = vpop.permute.xlu0 %2291
    %2293 = vrot.lane.b32.xlu0 %v2247, 59
    %v2294 = vpop.permute.xlu0 %2293
    %2295 = vrot.lane.b32.xlu0 %v2248, 59
    %v2296 = vpop.permute.xlu0 %2295
    %2297 = vrot.lane.b32.xlu0 %v2249, 59
    %v2298 = vpop.permute.xlu0 %2297
    %2299 = vrot.lane.b32.xlu0 %v2250, 59
    %v2300 = vpop.permute.xlu0 %2299
    %2301 = vrot.lane.b32.xlu0 %v2251, 59
    %v2302 = vpop.permute.xlu0 %2301
    %v2303 = vsel %vm1100, %v2270, %v2272
    %v2304 = vsel %vm1100, %v2272, %v2274
    %v2305 = vsel %vm1100, %v2274, %v2276
    %v2306 = vsel %vm1100, %v2276, %v2278
    %v2307 = vsel %vm1100, %v2278, %v2280
    %v2308 = vsel %vm1100, %v2280, %v2282
    %v2309 = vsel %vm1100, %v2282, %v2284
    %v2310 = vsel %vm1100, %v2284, %v2286
    %v2311 = vsel %vm1100, %v2286, %v2288
    %v2312 = vsel %vm1100, %v2288, %v2290
    %v2313 = vsel %vm1100, %v2290, %v2292
    %v2314 = vsel %vm1100, %v2292, %v2294
    %v2315 = vsel %vm1100, %v2294, %v2296
    %v2316 = vsel %vm1100, %v2296, %v2298
    %v2317 = vsel %vm1100, %v2298, %v2300
    %v2318 = vsel %vm1100, %v2300, %v2302
    %v2335 = vadd.f32 %v2215, %v2303
    %v2336 = vadd.f32 %v2216, %v2304
    %v2337 = vadd.f32 %v2217, %v2305
    %v2338 = vadd.f32 %v2218, %v2306
    %v2339 = vadd.f32 %v2219, %v2307
    %v2340 = vadd.f32 %v2220, %v2308
    %v2341 = vadd.f32 %v2221, %v2309
    %v2342 = vadd.f32 %v2222, %v2310
    %v2343 = vadd.f32 %v2223, %v2311
    %v2344 = vadd.f32 %v2224, %v2312
    %v2345 = vadd.f32 %v2225, %v2313
    %v2346 = vadd.f32 %v2226, %v2314
    %v2347 = vadd.f32 %v2227, %v2315
    %v2348 = vadd.f32 %v2228, %v2316
    %v2349 = vadd.f32 %v2229, %v2317
    %v2350 = vadd.f32 %v2230, %v2318
    %2351 = vset.pattern.permute.xlu0 17
    %2352 = vperm.xlu0 %2351, %v50
    %v2353 = vpop.permute.xlu0 %2352
    %v2355 = vmul.f32 %v2353, %v1458
    %v2356 = vmul.f32 %v2353, %v1459
    %v2357 = vmul.f32 %v2353, %v1460
    %v2358 = vmul.f32 %v2353, %v1461
    %v2359 = vmul.f32 %v2353, %v1462
    %v2360 = vmul.f32 %v2353, %v1463
    %v2361 = vmul.f32 %v2353, %v1464
    %v2362 = vmul.f32 %v2353, %v1465
    %v2363 = vmul.f32 %v2353, %v1466
    %v2364 = vmul.f32 %v2353, %v1467
    %v2365 = vmul.f32 %v2353, %v1468
    %v2366 = vmul.f32 %v2353, %v1469
    %v2367 = vmul.f32 %v2353, %v1470
    %v2368 = vmul.f32 %v2353, %v1471
    %v2369 = vmul.f32 %v2353, %v1472
    %v2370 = vmul.f32 %v2353, %v1473
    %v2371 = vmul.f32 %v2353, %v1474
    %2389 = vrot.lane.b32.xlu0 %v2355, 58
    %v2390 = vpop.permute.xlu0 %2389
    %2391 = vrot.lane.b32.xlu0 %v2356, 58
    %v2392 = vpop.permute.xlu0 %2391
    %2393 = vrot.lane.b32.xlu0 %v2357, 58
    %v2394 = vpop.permute.xlu0 %2393
    %2395 = vrot.lane.b32.xlu0 %v2358, 58
    %v2396 = vpop.permute.xlu0 %2395
    %2397 = vrot.lane.b32.xlu0 %v2359, 58
    %v2398 = vpop.permute.xlu0 %2397
    %2399 = vrot.lane.b32.xlu0 %v2360, 58
    %v2400 = vpop.permute.xlu0 %2399
    %2401 = vrot.lane.b32.xlu0 %v2361, 58
    %v2402 = vpop.permute.xlu0 %2401
    %2403 = vrot.lane.b32.xlu0 %v2362, 58
    %v2404 = vpop.permute.xlu0 %2403
    %2405 = vrot.lane.b32.xlu0 %v2363, 58
    %v2406 = vpop.permute.xlu0 %2405
    %2407 = vrot.lane.b32.xlu0 %v2364, 58
    %v2408 = vpop.permute.xlu0 %2407
    %2409 = vrot.lane.b32.xlu0 %v2365, 58
    %v2410 = vpop.permute.xlu0 %2409
    %2411 = vrot.lane.b32.xlu0 %v2366, 58
    %v2412 = vpop.permute.xlu0 %2411
    %2413 = vrot.lane.b32.xlu0 %v2367, 58
    %v2414 = vpop.permute.xlu0 %2413
    %2415 = vrot.lane.b32.xlu0 %v2368, 58
    %v2416 = vpop.permute.xlu0 %2415
    %2417 = vrot.lane.b32.xlu0 %v2369, 58
    %v2418 = vpop.permute.xlu0 %2417
    %2419 = vrot.lane.b32.xlu0 %v2370, 58
    %v2420 = vpop.permute.xlu0 %2419
    %2421 = vrot.lane.b32.xlu0 %v2371, 58
    %v2422 = vpop.permute.xlu0 %2421
    %v2423 = vsel %vm1221, %v2390, %v2392
    %v2424 = vsel %vm1221, %v2392, %v2394
    %v2425 = vsel %vm1221, %v2394, %v2396
    %v2426 = vsel %vm1221, %v2396, %v2398
    %v2427 = vsel %vm1221, %v2398, %v2400
    %v2428 = vsel %vm1221, %v2400, %v2402
    %v2429 = vsel %vm1221, %v2402, %v2404
    %v2430 = vsel %vm1221, %v2404, %v2406
    %v2431 = vsel %vm1221, %v2406, %v2408
    %v2432 = vsel %vm1221, %v2408, %v2410
    %v2433 = vsel %vm1221, %v2410, %v2412
    %v2434 = vsel %vm1221, %v2412, %v2414
    %v2435 = vsel %vm1221, %v2414, %v2416
    %v2436 = vsel %vm1221, %v2416, %v2418
    %v2437 = vsel %vm1221, %v2418, %v2420
    %v2438 = vsel %vm1221, %v2420, %v2422
    %v2455 = vadd.f32 %v2335, %v2423
    %v2456 = vadd.f32 %v2336, %v2424
    %v2457 = vadd.f32 %v2337, %v2425
    %v2458 = vadd.f32 %v2338, %v2426
    %v2459 = vadd.f32 %v2339, %v2427
    %v2460 = vadd.f32 %v2340, %v2428
    %v2461 = vadd.f32 %v2341, %v2429
    %v2462 = vadd.f32 %v2342, %v2430
    %v2463 = vadd.f32 %v2343, %v2431
    %v2464 = vadd.f32 %v2344, %v2432
    %v2465 = vadd.f32 %v2345, %v2433
    %v2466 = vadd.f32 %v2346, %v2434
    %v2467 = vadd.f32 %v2347, %v2435
    %v2468 = vadd.f32 %v2348, %v2436
    %v2469 = vadd.f32 %v2349, %v2437
    %v2470 = vadd.f32 %v2350, %v2438
    %s2471 = scalar_lea.vmem %s55, 2 [#allocation2]
    %v2472 = vld [vmem:[%s2471] ss:$4 sm:$0xff]
    %s2473 = scalar_lea.vmem %s55, 34 [#allocation2]
    %v2474 = vld [vmem:[%s2473] ss:$4 sm:$0xff]
    %s2475 = scalar_lea.vmem %s55, 66 [#allocation2]
    %v2476 = vld [vmem:[%s2475] ss:$4 sm:$0x1]
    %v2480 = vlaneseq
    %v2481 = vshrl.u32 %v2480, 7
    %v2482 = vsub.s32 0, %v2481
    %v2483 = vrot.slane %v2472, %v2482
    %v2484 = vlaneseq
    %v2485 = vshrl.u32 %v2484, 7
    %v2486 = vsub.s32 1, %v2485
    %v2487 = vrot.slane %v2472, %v2486
    %v2488 = vlaneseq
    %v2489 = vshrl.u32 %v2488, 7
    %v2490 = vsub.s32 2, %v2489
    %v2491 = vrot.slane %v2472, %v2490
    %v2492 = vlaneseq
    %v2493 = vshrl.u32 %v2492, 7
    %v2494 = vsub.s32 3, %v2493
    %v2495 = vrot.slane %v2472, %v2494
    %v2496 = vlaneseq
    %v2497 = vshrl.u32 %v2496, 7
    %v2498 = vsub.s32 4, %v2497
    %v2499 = vrot.slane %v2472, %v2498
    %v2500 = vlaneseq
    %v2501 = vshrl.u32 %v2500, 7
    %v2502 = vsub.s32 5, %v2501
    %v2503 = vrot.slane %v2472, %v2502
    %v2504 = vlaneseq
    %v2505 = vshrl.u32 %v2504, 7
    %v2506 = vsub.s32 6, %v2505
    %v2507 = vrot.slane %v2472, %v2506
    %v2508 = vlaneseq
    %v2509 = vshrl.u32 %v2508, 7
    %v2510 = vsub.s32 7, %v2509
    %v2511 = vrot.slane %v2472, %v2510
    %v2512 = vlaneseq
    %v2513 = vshrl.u32 %v2512, 7
    %v2514 = vsub.s32 0, %v2513
    %v2515 = vrot.slane %v2474, %v2514
    %v2516 = vlaneseq
    %v2517 = vshrl.u32 %v2516, 7
    %v2518 = vsub.s32 1, %v2517
    %v2519 = vrot.slane %v2474, %v2518
    %v2520 = vlaneseq
    %v2521 = vshrl.u32 %v2520, 7
    %v2522 = vsub.s32 2, %v2521
    %v2523 = vrot.slane %v2474, %v2522
    %v2524 = vlaneseq
    %v2525 = vshrl.u32 %v2524, 7
    %v2526 = vsub.s32 3, %v2525
    %v2527 = vrot.slane %v2474, %v2526
    %v2528 = vlaneseq
    %v2529 = vshrl.u32 %v2528, 7
    %v2530 = vsub.s32 4, %v2529
    %v2531 = vrot.slane %v2474, %v2530
    %v2532 = vlaneseq
    %v2533 = vshrl.u32 %v2532, 7
    %v2534 = vsub.s32 5, %v2533
    %v2535 = vrot.slane %v2474, %v2534
    %v2536 = vlaneseq
    %v2537 = vshrl.u32 %v2536, 7
    %v2538 = vsub.s32 6, %v2537
    %v2539 = vrot.slane %v2474, %v2538
    %v2540 = vlaneseq
    %v2541 = vshrl.u32 %v2540, 7
    %v2542 = vsub.s32 7, %v2541
    %v2543 = vrot.slane %v2474, %v2542
    %v2544 = vlaneseq
    %v2545 = vshrl.u32 %v2544, 7
    %v2546 = vsub.s32 0, %v2545
    %v2547 = vrot.slane %v2476, %v2546
    %s2565 = scalar_lea.vmem %s153, 2 [#allocation2]
    %v2566 = vld [vmem:[%s2565] ss:$4 sm:$0xff]
    %s2567 = scalar_lea.vmem %s153, 34 [#allocation2]
    %v2568 = vld [vmem:[%s2567] ss:$4 sm:$0xff]
    %s2569 = scalar_lea.vmem %s153, 66 [#allocation2]
    %v2570 = vld [vmem:[%s2569] ss:$4 sm:$0x1]
    %v2574 = vlaneseq
    %v2575 = vshrl.u32 %v2574, 7
    %v2576 = vsub.s32 0, %v2575
    %v2577 = vrot.slane %v2566, %v2576
    %v2578 = vlaneseq
    %v2579 = vshrl.u32 %v2578, 7
    %v2580 = vsub.s32 1, %v2579
    %v2581 = vrot.slane %v2566, %v2580
    %v2582 = vlaneseq
    %v2583 = vshrl.u32 %v2582, 7
    %v2584 = vsub.s32 2, %v2583
    %v2585 = vrot.slane %v2566, %v2584
    %v2586 = vlaneseq
    %v2587 = vshrl.u32 %v2586, 7
    %v2588 = vsub.s32 3, %v2587
    %v2589 = vrot.slane %v2566, %v2588
    %v2590 = vlaneseq
    %v2591 = vshrl.u32 %v2590, 7
    %v2592 = vsub.s32 4, %v2591
    %v2593 = vrot.slane %v2566, %v2592
    %v2594 = vlaneseq
    %v2595 = vshrl.u32 %v2594, 7
    %v2596 = vsub.s32 5, %v2595
    %v2597 = vrot.slane %v2566, %v2596
    %v2598 = vlaneseq
    %v2599 = vshrl.u32 %v2598, 7
    %v2600 = vsub.s32 6, %v2599
    %v2601 = vrot.slane %v2566, %v2600
    %v2602 = vlaneseq
    %v2603 = vshrl.u32 %v2602, 7
    %v2604 = vsub.s32 7, %v2603
    %v2605 = vrot.slane %v2566, %v2604
    %v2606 = vlaneseq
    %v2607 = vshrl.u32 %v2606, 7
    %v2608 = vsub.s32 0, %v2607
    %v2609 = vrot.slane %v2568, %v2608
    %v2610 = vlaneseq
    %v2611 = vshrl.u32 %v2610, 7
    %v2612 = vsub.s32 1, %v2611
    %v2613 = vrot.slane %v2568, %v2612
    %v2614 = vlaneseq
    %v2615 = vshrl.u32 %v2614, 7
    %v2616 = vsub.s32 2, %v2615
    %v2617 = vrot.slane %v2568, %v2616
    %v2618 = vlaneseq
    %v2619 = vshrl.u32 %v2618, 7
    %v2620 = vsub.s32 3, %v2619
    %v2621 = vrot.slane %v2568, %v2620
    %v2622 = vlaneseq
    %v2623 = vshrl.u32 %v2622, 7
    %v2624 = vsub.s32 4, %v2623
    %v2625 = vrot.slane %v2568, %v2624
    %v2626 = vlaneseq
    %v2627 = vshrl.u32 %v2626, 7
    %v2628 = vsub.s32 5, %v2627
    %v2629 = vrot.slane %v2568, %v2628
    %v2630 = vlaneseq
    %v2631 = vshrl.u32 %v2630, 7
    %v2632 = vsub.s32 6, %v2631
    %v2633 = vrot.slane %v2568, %v2632
    %v2634 = vlaneseq
    %v2635 = vshrl.u32 %v2634, 7
    %v2636 = vsub.s32 7, %v2635
    %v2637 = vrot.slane %v2568, %v2636
    %v2638 = vlaneseq
    %v2639 = vshrl.u32 %v2638, 7
    %v2640 = vsub.s32 0, %v2639
    %v2641 = vrot.slane %v2570, %v2640
    %v2659 = vsel %vm247, %v2483, %v2577
    %v2660 = vsel %vm247, %v2487, %v2581
    %v2661 = vsel %vm247, %v2491, %v2585
    %v2662 = vsel %vm247, %v2495, %v2589
    %v2663 = vsel %vm247, %v2499, %v2593
    %v2664 = vsel %vm247, %v2503, %v2597
    %v2665 = vsel %vm247, %v2507, %v2601
    %v2666 = vsel %vm247, %v2511, %v2605
    %v2667 = vsel %vm247, %v2515, %v2609
    %v2668 = vsel %vm247, %v2519, %v2613
    %v2669 = vsel %vm247, %v2523, %v2617
    %v2670 = vsel %vm247, %v2527, %v2621
    %v2671 = vsel %vm247, %v2531, %v2625
    %v2672 = vsel %vm247, %v2535, %v2629
    %v2673 = vsel %vm247, %v2539, %v2633
    %v2674 = vsel %vm247, %v2543, %v2637
    %v2675 = vsel %vm247, %v2547, %v2641
    %2676 = vset.pattern.permute.xlu0 18
    %2677 = vperm.xlu0 %2676, %v50
    %v2678 = vpop.permute.xlu0 %2677
    %v2680 = vmul.f32 %v2678, %v2659
    %v2681 = vmul.f32 %v2678, %v2660
    %v2682 = vmul.f32 %v2678, %v2661
    %v2683 = vmul.f32 %v2678, %v2662
    %v2684 = vmul.f32 %v2678, %v2663
    %v2685 = vmul.f32 %v2678, %v2664
    %v2686 = vmul.f32 %v2678, %v2665
    %v2687 = vmul.f32 %v2678, %v2666
    %v2688 = vmul.f32 %v2678, %v2667
    %v2689 = vmul.f32 %v2678, %v2668
    %v2690 = vmul.f32 %v2678, %v2669
    %v2691 = vmul.f32 %v2678, %v2670
    %v2692 = vmul.f32 %v2678, %v2671
    %v2693 = vmul.f32 %v2678, %v2672
    %v2694 = vmul.f32 %v2678, %v2673
    %v2695 = vmul.f32 %v2678, %v2674
    %v2696 = vadd.f32 %v2455, %v2680
    %v2697 = vadd.f32 %v2456, %v2681
    %v2698 = vadd.f32 %v2457, %v2682
    %v2699 = vadd.f32 %v2458, %v2683
    %v2700 = vadd.f32 %v2459, %v2684
    %v2701 = vadd.f32 %v2460, %v2685
    %v2702 = vadd.f32 %v2461, %v2686
    %v2703 = vadd.f32 %v2462, %v2687
    %v2704 = vadd.f32 %v2463, %v2688
    %v2705 = vadd.f32 %v2464, %v2689
    %v2706 = vadd.f32 %v2465, %v2690
    %v2707 = vadd.f32 %v2466, %v2691
    %v2708 = vadd.f32 %v2467, %v2692
    %v2709 = vadd.f32 %v2468, %v2693
    %v2710 = vadd.f32 %v2469, %v2694
    %v2711 = vadd.f32 %v2470, %v2695
    %2712 = vset.pattern.permute.xlu0 19
    %2713 = vperm.xlu0 %2712, %v50
    %v2714 = vpop.permute.xlu0 %2713
    %v2716 = vmul.f32 %v2714, %v2659
    %v2717 = vmul.f32 %v2714, %v2660
    %v2718 = vmul.f32 %v2714, %v2661
    %v2719 = vmul.f32 %v2714, %v2662
    %v2720 = vmul.f32 %v2714, %v2663
    %v2721 = vmul.f32 %v2714, %v2664
    %v2722 = vmul.f32 %v2714, %v2665
    %v2723 = vmul.f32 %v2714, %v2666
    %v2724 = vmul.f32 %v2714, %v2667
    %v2725 = vmul.f32 %v2714, %v2668
    %v2726 = vmul.f32 %v2714, %v2669
    %v2727 = vmul.f32 %v2714, %v2670
    %v2728 = vmul.f32 %v2714, %v2671
    %v2729 = vmul.f32 %v2714, %v2672
    %v2730 = vmul.f32 %v2714, %v2673
    %v2731 = vmul.f32 %v2714, %v2674
    %v2732 = vmul.f32 %v2714, %v2675
    %2750 = vrot.lane.b32.xlu0 %v2716, 127
    %v2751 = vpop.permute.xlu0 %2750
    %2752 = vrot.lane.b32.xlu0 %v2717, 127
    %v2753 = vpop.permute.xlu0 %2752
    %2754 = vrot.lane.b32.xlu0 %v2718, 127
    %v2755 = vpop.permute.xlu0 %2754
    %2756 = vrot.lane.b32.xlu0 %v2719, 127
    %v2757 = vpop.permute.xlu0 %2756
    %2758 = vrot.lane.b32.xlu0 %v2720, 127
    %v2759 = vpop.permute.xlu0 %2758
    %2760 = vrot.lane.b32.xlu0 %v2721, 127
    %v2761 = vpop.permute.xlu0 %2760
    %2762 = vrot.lane.b32.xlu0 %v2722, 127
    %v2763 = vpop.permute.xlu0 %2762
    %2764 = vrot.lane.b32.xlu0 %v2723, 127
    %v2765 = vpop.permute.xlu0 %2764
    %2766 = vrot.lane.b32.xlu0 %v2724, 127
    %v2767 = vpop.permute.xlu0 %2766
    %2768 = vrot.lane.b32.xlu0 %v2725, 127
    %v2769 = vpop.permute.xlu0 %2768
    %2770 = vrot.lane.b32.xlu0 %v2726, 127
    %v2771 = vpop.permute.xlu0 %2770
    %2772 = vrot.lane.b32.xlu0 %v2727, 127
    %v2773 = vpop.permute.xlu0 %2772
    %2774 = vrot.lane.b32.xlu0 %v2728, 127
    %v2775 = vpop.permute.xlu0 %2774
    %2776 = vrot.lane.b32.xlu0 %v2729, 127
    %v2777 = vpop.permute.xlu0 %2776
    %2778 = vrot.lane.b32.xlu0 %v2730, 127
    %v2779 = vpop.permute.xlu0 %2778
    %2780 = vrot.lane.b32.xlu0 %v2731, 127
    %v2781 = vpop.permute.xlu0 %2780
    %2782 = vrot.lane.b32.xlu0 %v2732, 127
    %v2783 = vpop.permute.xlu0 %2782
    %v2784 = vsel %vm374, %v2751, %v2753
    %v2785 = vsel %vm374, %v2753, %v2755
    %v2786 = vsel %vm374, %v2755, %v2757
    %v2787 = vsel %vm374, %v2757, %v2759
    %v2788 = vsel %vm374, %v2759, %v2761
    %v2789 = vsel %vm374, %v2761, %v2763
    %v2790 = vsel %vm374, %v2763, %v2765
    %v2791 = vsel %vm374, %v2765, %v2767
    %v2792 = vsel %vm374, %v2767, %v2769
    %v2793 = vsel %vm374, %v2769, %v2771
    %v2794 = vsel %vm374, %v2771, %v2773
    %v2795 = vsel %vm374, %v2773, %v2775
    %v2796 = vsel %vm374, %v2775, %v2777
    %v2797 = vsel %vm374, %v2777, %v2779
    %v2798 = vsel %vm374, %v2779, %v2781
    %v2799 = vsel %vm374, %v2781, %v2783
    %v2816 = vadd.f32 %v2696, %v2784
    %v2817 = vadd.f32 %v2697, %v2785
    %v2818 = vadd.f32 %v2698, %v2786
    %v2819 = vadd.f32 %v2699, %v2787
    %v2820 = vadd.f32 %v2700, %v2788
    %v2821 = vadd.f32 %v2701, %v2789
    %v2822 = vadd.f32 %v2702, %v2790
    %v2823 = vadd.f32 %v2703, %v2791
    %v2824 = vadd.f32 %v2704, %v2792
    %v2825 = vadd.f32 %v2705, %v2793
    %v2826 = vadd.f32 %v2706, %v2794
    %v2827 = vadd.f32 %v2707, %v2795
    %v2828 = vadd.f32 %v2708, %v2796
    %v2829 = vadd.f32 %v2709, %v2797
    %v2830 = vadd.f32 %v2710, %v2798
    %v2831 = vadd.f32 %v2711, %v2799
    %2832 = vset.pattern.permute.xlu0 20
    %2833 = vperm.xlu0 %2832, %v50
    %v2834 = vpop.permute.xlu0 %2833
    %v2836 = vmul.f32 %v2834, %v2659
    %v2837 = vmul.f32 %v2834, %v2660
    %v2838 = vmul.f32 %v2834, %v2661
    %v2839 = vmul.f32 %v2834, %v2662
    %v2840 = vmul.f32 %v2834, %v2663
    %v2841 = vmul.f32 %v2834, %v2664
    %v2842 = vmul.f32 %v2834, %v2665
    %v2843 = vmul.f32 %v2834, %v2666
    %v2844 = vmul.f32 %v2834, %v2667
    %v2845 = vmul.f32 %v2834, %v2668
    %v2846 = vmul.f32 %v2834, %v2669
    %v2847 = vmul.f32 %v2834, %v2670
    %v2848 = vmul.f32 %v2834, %v2671
    %v2849 = vmul.f32 %v2834, %v2672
    %v2850 = vmul.f32 %v2834, %v2673
    %v2851 = vmul.f32 %v2834, %v2674
    %v2852 = vmul.f32 %v2834, %v2675
    %2870 = vrot.lane.b32.xlu0 %v2836, 126
    %v2871 = vpop.permute.xlu0 %2870
    %2872 = vrot.lane.b32.xlu0 %v2837, 126
    %v2873 = vpop.permute.xlu0 %2872
    %2874 = vrot.lane.b32.xlu0 %v2838, 126
    %v2875 = vpop.permute.xlu0 %2874
    %2876 = vrot.lane.b32.xlu0 %v2839, 126
    %v2877 = vpop.permute.xlu0 %2876
    %2878 = vrot.lane.b32.xlu0 %v2840, 126
    %v2879 = vpop.permute.xlu0 %2878
    %2880 = vrot.lane.b32.xlu0 %v2841, 126
    %v2881 = vpop.permute.xlu0 %2880
    %2882 = vrot.lane.b32.xlu0 %v2842, 126
    %v2883 = vpop.permute.xlu0 %2882
    %2884 = vrot.lane.b32.xlu0 %v2843, 126
    %v2885 = vpop.permute.xlu0 %2884
    %2886 = vrot.lane.b32.xlu0 %v2844, 126
    %v2887 = vpop.permute.xlu0 %2886
    %2888 = vrot.lane.b32.xlu0 %v2845, 126
    %v2889 = vpop.permute.xlu0 %2888
    %2890 = vrot.lane.b32.xlu0 %v2846, 126
    %v2891 = vpop.permute.xlu0 %2890
    %2892 = vrot.lane.b32.xlu0 %v2847, 126
    %v2893 = vpop.permute.xlu0 %2892
    %2894 = vrot.lane.b32.xlu0 %v2848, 126
    %v2895 = vpop.permute.xlu0 %2894
    %2896 = vrot.lane.b32.xlu0 %v2849, 126
    %v2897 = vpop.permute.xlu0 %2896
    %2898 = vrot.lane.b32.xlu0 %v2850, 126
    %v2899 = vpop.permute.xlu0 %2898
    %2900 = vrot.lane.b32.xlu0 %v2851, 126
    %v2901 = vpop.permute.xlu0 %2900
    %2902 = vrot.lane.b32.xlu0 %v2852, 126
    %v2903 = vpop.permute.xlu0 %2902
    %v2904 = vsel %vm495, %v2871, %v2873
    %v2905 = vsel %vm495, %v2873, %v2875
    %v2906 = vsel %vm495, %v2875, %v2877
    %v2907 = vsel %vm495, %v2877, %v2879
    %v2908 = vsel %vm495, %v2879, %v2881
    %v2909 = vsel %vm495, %v2881, %v2883
    %v2910 = vsel %vm495, %v2883, %v2885
    %v2911 = vsel %vm495, %v2885, %v2887
    %v2912 = vsel %vm495, %v2887, %v2889
    %v2913 = vsel %vm495, %v2889, %v2891
    %v2914 = vsel %vm495, %v2891, %v2893
    %v2915 = vsel %vm495, %v2893, %v2895
    %v2916 = vsel %vm495, %v2895, %v2897
    %v2917 = vsel %vm495, %v2897, %v2899
    %v2918 = vsel %vm495, %v2899, %v2901
    %v2919 = vsel %vm495, %v2901, %v2903
    %v2936 = vadd.f32 %v2816, %v2904
    %v2937 = vadd.f32 %v2817, %v2905
    %v2938 = vadd.f32 %v2818, %v2906
    %v2939 = vadd.f32 %v2819, %v2907
    %v2940 = vadd.f32 %v2820, %v2908
    %v2941 = vadd.f32 %v2821, %v2909
    %v2942 = vadd.f32 %v2822, %v2910
    %v2943 = vadd.f32 %v2823, %v2911
    %v2944 = vadd.f32 %v2824, %v2912
    %v2945 = vadd.f32 %v2825, %v2913
    %v2946 = vadd.f32 %v2826, %v2914
    %v2947 = vadd.f32 %v2827, %v2915
    %v2948 = vadd.f32 %v2828, %v2916
    %v2949 = vadd.f32 %v2829, %v2917
    %v2950 = vadd.f32 %v2830, %v2918
    %v2951 = vadd.f32 %v2831, %v2919
    %2952 = vset.pattern.permute.xlu0 21
    %2953 = vperm.xlu0 %2952, %v50
    %v2954 = vpop.permute.xlu0 %2953
    %v2956 = vmul.f32 %v2954, %v2659
    %v2957 = vmul.f32 %v2954, %v2660
    %v2958 = vmul.f32 %v2954, %v2661
    %v2959 = vmul.f32 %v2954, %v2662
    %v2960 = vmul.f32 %v2954, %v2663
    %v2961 = vmul.f32 %v2954, %v2664
    %v2962 = vmul.f32 %v2954, %v2665
    %v2963 = vmul.f32 %v2954, %v2666
    %v2964 = vmul.f32 %v2954, %v2667
    %v2965 = vmul.f32 %v2954, %v2668
    %v2966 = vmul.f32 %v2954, %v2669
    %v2967 = vmul.f32 %v2954, %v2670
    %v2968 = vmul.f32 %v2954, %v2671
    %v2969 = vmul.f32 %v2954, %v2672
    %v2970 = vmul.f32 %v2954, %v2673
    %v2971 = vmul.f32 %v2954, %v2674
    %v2972 = vmul.f32 %v2954, %v2675
    %2990 = vrot.lane.b32.xlu0 %v2956, 94
    %v2991 = vpop.permute.xlu0 %2990
    %2992 = vrot.lane.b32.xlu0 %v2957, 94
    %v2993 = vpop.permute.xlu0 %2992
    %2994 = vrot.lane.b32.xlu0 %v2958, 94
    %v2995 = vpop.permute.xlu0 %2994
    %2996 = vrot.lane.b32.xlu0 %v2959, 94
    %v2997 = vpop.permute.xlu0 %2996
    %2998 = vrot.lane.b32.xlu0 %v2960, 94
    %v2999 = vpop.permute.xlu0 %2998
    %3000 = vrot.lane.b32.xlu0 %v2961, 94
    %v3001 = vpop.permute.xlu0 %3000
    %3002 = vrot.lane.b32.xlu0 %v2962, 94
    %v3003 = vpop.permute.xlu0 %3002
    %3004 = vrot.lane.b32.xlu0 %v2963, 94
    %v3005 = vpop.permute.xlu0 %3004
    %3006 = vrot.lane.b32.xlu0 %v2964, 94
    %v3007 = vpop.permute.xlu0 %3006
    %3008 = vrot.lane.b32.xlu0 %v2965, 94
    %v3009 = vpop.permute.xlu0 %3008
    %3010 = vrot.lane.b32.xlu0 %v2966, 94
    %v3011 = vpop.permute.xlu0 %3010
    %3012 = vrot.lane.b32.xlu0 %v2967, 94
    %v3013 = vpop.permute.xlu0 %3012
    %3014 = vrot.lane.b32.xlu0 %v2968, 94
    %v3015 = vpop.permute.xlu0 %3014
    %3016 = vrot.lane.b32.xlu0 %v2969, 94
    %v3017 = vpop.permute.xlu0 %3016
    %3018 = vrot.lane.b32.xlu0 %v2970, 94
    %v3019 = vpop.permute.xlu0 %3018
    %3020 = vrot.lane.b32.xlu0 %v2971, 94
    %v3021 = vpop.permute.xlu0 %3020
    %3022 = vrot.lane.b32.xlu0 %v2972, 94
    %v3023 = vpop.permute.xlu0 %3022
    %v3024 = vsel %vm616, %v2991, %v2993
    %v3025 = vsel %vm616, %v2993, %v2995
    %v3026 = vsel %vm616, %v2995, %v2997
    %v3027 = vsel %vm616, %v2997, %v2999
    %v3028 = vsel %vm616, %v2999, %v3001
    %v3029 = vsel %vm616, %v3001, %v3003
    %v3030 = vsel %vm616, %v3003, %v3005
    %v3031 = vsel %vm616, %v3005, %v3007
    %v3032 = vsel %vm616, %v3007, %v3009
    %v3033 = vsel %vm616, %v3009, %v3011
    %v3034 = vsel %vm616, %v3011, %v3013
    %v3035 = vsel %vm616, %v3013, %v3015
    %v3036 = vsel %vm616, %v3015, %v3017
    %v3037 = vsel %vm616, %v3017, %v3019
    %v3038 = vsel %vm616, %v3019, %v3021
    %v3039 = vsel %vm616, %v3021, %v3023
    %v3056 = vadd.f32 %v2936, %v3024
    %v3057 = vadd.f32 %v2937, %v3025
    %v3058 = vadd.f32 %v2938, %v3026
    %v3059 = vadd.f32 %v2939, %v3027
    %v3060 = vadd.f32 %v2940, %v3028
    %v3061 = vadd.f32 %v2941, %v3029
    %v3062 = vadd.f32 %v2942, %v3030
    %v3063 = vadd.f32 %v2943, %v3031
    %v3064 = vadd.f32 %v2944, %v3032
    %v3065 = vadd.f32 %v2945, %v3033
    %v3066 = vadd.f32 %v2946, %v3034
    %v3067 = vadd.f32 %v2947, %v3035
    %v3068 = vadd.f32 %v2948, %v3036
    %v3069 = vadd.f32 %v2949, %v3037
    %v3070 = vadd.f32 %v2950, %v3038
    %v3071 = vadd.f32 %v2951, %v3039
    %3072 = vset.pattern.permute.xlu0 22
    %3073 = vperm.xlu0 %3072, %v50
    %v3074 = vpop.permute.xlu0 %3073
    %v3076 = vmul.f32 %v3074, %v2659
    %v3077 = vmul.f32 %v3074, %v2660
    %v3078 = vmul.f32 %v3074, %v2661
    %v3079 = vmul.f32 %v3074, %v2662
    %v3080 = vmul.f32 %v3074, %v2663
    %v3081 = vmul.f32 %v3074, %v2664
    %v3082 = vmul.f32 %v3074, %v2665
    %v3083 = vmul.f32 %v3074, %v2666
    %v3084 = vmul.f32 %v3074, %v2667
    %v3085 = vmul.f32 %v3074, %v2668
    %v3086 = vmul.f32 %v3074, %v2669
    %v3087 = vmul.f32 %v3074, %v2670
    %v3088 = vmul.f32 %v3074, %v2671
    %v3089 = vmul.f32 %v3074, %v2672
    %v3090 = vmul.f32 %v3074, %v2673
    %v3091 = vmul.f32 %v3074, %v2674
    %v3092 = vmul.f32 %v3074, %v2675
    %3110 = vrot.lane.b32.xlu0 %v3076, 93
    %v3111 = vpop.permute.xlu0 %3110
    %3112 = vrot.lane.b32.xlu0 %v3077, 93
    %v3113 = vpop.permute.xlu0 %3112
    %3114 = vrot.lane.b32.xlu0 %v3078, 93
    %v3115 = vpop.permute.xlu0 %3114
    %3116 = vrot.lane.b32.xlu0 %v3079, 93
    %v3117 = vpop.permute.xlu0 %3116
    %3118 = vrot.lane.b32.xlu0 %v3080, 93
    %v3119 = vpop.permute.xlu0 %3118
    %3120 = vrot.lane.b32.xlu0 %v3081, 93
    %v3121 = vpop.permute.xlu0 %3120
    %3122 = vrot.lane.b32.xlu0 %v3082, 93
    %v3123 = vpop.permute.xlu0 %3122
    %3124 = vrot.lane.b32.xlu0 %v3083, 93
    %v3125 = vpop.permute.xlu0 %3124
    %3126 = vrot.lane.b32.xlu0 %v3084, 93
    %v3127 = vpop.permute.xlu0 %3126
    %3128 = vrot.lane.b32.xlu0 %v3085, 93
    %v3129 = vpop.permute.xlu0 %3128
    %3130 = vrot.lane.b32.xlu0 %v3086, 93
    %v3131 = vpop.permute.xlu0 %3130
    %3132 = vrot.lane.b32.xlu0 %v3087, 93
    %v3133 = vpop.permute.xlu0 %3132
    %3134 = vrot.lane.b32.xlu0 %v3088, 93
    %v3135 = vpop.permute.xlu0 %3134
    %3136 = vrot.lane.b32.xlu0 %v3089, 93
    %v3137 = vpop.permute.xlu0 %3136
    %3138 = vrot.lane.b32.xlu0 %v3090, 93
    %v3139 = vpop.permute.xlu0 %3138
    %3140 = vrot.lane.b32.xlu0 %v3091, 93
    %v3141 = vpop.permute.xlu0 %3140
    %3142 = vrot.lane.b32.xlu0 %v3092, 93
    %v3143 = vpop.permute.xlu0 %3142
    %v3144 = vsel %vm737, %v3111, %v3113
    %v3145 = vsel %vm737, %v3113, %v3115
    %v3146 = vsel %vm737, %v3115, %v3117
    %v3147 = vsel %vm737, %v3117, %v3119
    %v3148 = vsel %vm737, %v3119, %v3121
    %v3149 = vsel %vm737, %v3121, %v3123
    %v3150 = vsel %vm737, %v3123, %v3125
    %v3151 = vsel %vm737, %v3125, %v3127
    %v3152 = vsel %vm737, %v3127, %v3129
    %v3153 = vsel %vm737, %v3129, %v3131
    %v3154 = vsel %vm737, %v3131, %v3133
    %v3155 = vsel %vm737, %v3133, %v3135
    %v3156 = vsel %vm737, %v3135, %v3137
    %v3157 = vsel %vm737, %v3137, %v3139
    %v3158 = vsel %vm737, %v3139, %v3141
    %v3159 = vsel %vm737, %v3141, %v3143
    %v3176 = vadd.f32 %v3056, %v3144
    %v3177 = vadd.f32 %v3057, %v3145
    %v3178 = vadd.f32 %v3058, %v3146
    %v3179 = vadd.f32 %v3059, %v3147
    %v3180 = vadd.f32 %v3060, %v3148
    %v3181 = vadd.f32 %v3061, %v3149
    %v3182 = vadd.f32 %v3062, %v3150
    %v3183 = vadd.f32 %v3063, %v3151
    %v3184 = vadd.f32 %v3064, %v3152
    %v3185 = vadd.f32 %v3065, %v3153
    %v3186 = vadd.f32 %v3066, %v3154
    %v3187 = vadd.f32 %v3067, %v3155
    %v3188 = vadd.f32 %v3068, %v3156
    %v3189 = vadd.f32 %v3069, %v3157
    %v3190 = vadd.f32 %v3070, %v3158
    %v3191 = vadd.f32 %v3071, %v3159
    %3192 = vset.pattern.permute.xlu0 23
    %3193 = vperm.xlu0 %3192, %v50
    %v3194 = vpop.permute.xlu0 %3193
    %v3196 = vmul.f32 %v3194, %v2659
    %v3197 = vmul.f32 %v3194, %v2660
    %v3198 = vmul.f32 %v3194, %v2661
    %v3199 = vmul.f32 %v3194, %v2662
    %v3200 = vmul.f32 %v3194, %v2663
    %v3201 = vmul.f32 %v3194, %v2664
    %v3202 = vmul.f32 %v3194, %v2665
    %v3203 = vmul.f32 %v3194, %v2666
    %v3204 = vmul.f32 %v3194, %v2667
    %v3205 = vmul.f32 %v3194, %v2668
    %v3206 = vmul.f32 %v3194, %v2669
    %v3207 = vmul.f32 %v3194, %v2670
    %v3208 = vmul.f32 %v3194, %v2671
    %v3209 = vmul.f32 %v3194, %v2672
    %v3210 = vmul.f32 %v3194, %v2673
    %v3211 = vmul.f32 %v3194, %v2674
    %v3212 = vmul.f32 %v3194, %v2675
    %3230 = vrot.lane.b32.xlu0 %v3196, 92
    %v3231 = vpop.permute.xlu0 %3230
    %3232 = vrot.lane.b32.xlu0 %v3197, 92
    %v3233 = vpop.permute.xlu0 %3232
    %3234 = vrot.lane.b32.xlu0 %v3198, 92
    %v3235 = vpop.permute.xlu0 %3234
    %3236 = vrot.lane.b32.xlu0 %v3199, 92
    %v3237 = vpop.permute.xlu0 %3236
    %3238 = vrot.lane.b32.xlu0 %v3200, 92
    %v3239 = vpop.permute.xlu0 %3238
    %3240 = vrot.lane.b32.xlu0 %v3201, 92
    %v3241 = vpop.permute.xlu0 %3240
    %3242 = vrot.lane.b32.xlu0 %v3202, 92
    %v3243 = vpop.permute.xlu0 %3242
    %3244 = vrot.lane.b32.xlu0 %v3203, 92
    %v3245 = vpop.permute.xlu0 %3244
    %3246 = vrot.lane.b32.xlu0 %v3204, 92
    %v3247 = vpop.permute.xlu0 %3246
    %3248 = vrot.lane.b32.xlu0 %v3205, 92
    %v3249 = vpop.permute.xlu0 %3248
    %3250 = vrot.lane.b32.xlu0 %v3206, 92
    %v3251 = vpop.permute.xlu0 %3250
    %3252 = vrot.lane.b32.xlu0 %v3207, 92
    %v3253 = vpop.permute.xlu0 %3252
    %3254 = vrot.lane.b32.xlu0 %v3208, 92
    %v3255 = vpop.permute.xlu0 %3254
    %3256 = vrot.lane.b32.xlu0 %v3209, 92
    %v3257 = vpop.permute.xlu0 %3256
    %3258 = vrot.lane.b32.xlu0 %v3210, 92
    %v3259 = vpop.permute.xlu0 %3258
    %3260 = vrot.lane.b32.xlu0 %v3211, 92
    %v3261 = vpop.permute.xlu0 %3260
    %3262 = vrot.lane.b32.xlu0 %v3212, 92
    %v3263 = vpop.permute.xlu0 %3262
    %v3264 = vsel %vm858, %v3231, %v3233
    %v3265 = vsel %vm858, %v3233, %v3235
    %v3266 = vsel %vm858, %v3235, %v3237
    %v3267 = vsel %vm858, %v3237, %v3239
    %v3268 = vsel %vm858, %v3239, %v3241
    %v3269 = vsel %vm858, %v3241, %v3243
    %v3270 = vsel %vm858, %v3243, %v3245
    %v3271 = vsel %vm858, %v3245, %v3247
    %v3272 = vsel %vm858, %v3247, %v3249
    %v3273 = vsel %vm858, %v3249, %v3251
    %v3274 = vsel %vm858, %v3251, %v3253
    %v3275 = vsel %vm858, %v3253, %v3255
    %v3276 = vsel %vm858, %v3255, %v3257
    %v3277 = vsel %vm858, %v3257, %v3259
    %v3278 = vsel %vm858, %v3259, %v3261
    %v3279 = vsel %vm858, %v3261, %v3263
    %v3296 = vadd.f32 %v3176, %v3264
    %v3297 = vadd.f32 %v3177, %v3265
    %v3298 = vadd.f32 %v3178, %v3266
    %v3299 = vadd.f32 %v3179, %v3267
    %v3300 = vadd.f32 %v3180, %v3268
    %v3301 = vadd.f32 %v3181, %v3269
    %v3302 = vadd.f32 %v3182, %v3270
    %v3303 = vadd.f32 %v3183, %v3271
    %v3304 = vadd.f32 %v3184, %v3272
    %v3305 = vadd.f32 %v3185, %v3273
    %v3306 = vadd.f32 %v3186, %v3274
    %v3307 = vadd.f32 %v3187, %v3275
    %v3308 = vadd.f32 %v3188, %v3276
    %v3309 = vadd.f32 %v3189, %v3277
    %v3310 = vadd.f32 %v3190, %v3278
    %v3311 = vadd.f32 %v3191, %v3279
    %3312 = vset.pattern.permute.xlu0 24
    %3313 = vperm.xlu0 %3312, %v50
    %v3314 = vpop.permute.xlu0 %3313
    %v3316 = vmul.f32 %v3314, %v2659
    %v3317 = vmul.f32 %v3314, %v2660
    %v3318 = vmul.f32 %v3314, %v2661
    %v3319 = vmul.f32 %v3314, %v2662
    %v3320 = vmul.f32 %v3314, %v2663
    %v3321 = vmul.f32 %v3314, %v2664
    %v3322 = vmul.f32 %v3314, %v2665
    %v3323 = vmul.f32 %v3314, %v2666
    %v3324 = vmul.f32 %v3314, %v2667
    %v3325 = vmul.f32 %v3314, %v2668
    %v3326 = vmul.f32 %v3314, %v2669
    %v3327 = vmul.f32 %v3314, %v2670
    %v3328 = vmul.f32 %v3314, %v2671
    %v3329 = vmul.f32 %v3314, %v2672
    %v3330 = vmul.f32 %v3314, %v2673
    %v3331 = vmul.f32 %v3314, %v2674
    %v3332 = vmul.f32 %v3314, %v2675
    %3350 = vrot.lane.b32.xlu0 %v3316, 60
    %v3351 = vpop.permute.xlu0 %3350
    %3352 = vrot.lane.b32.xlu0 %v3317, 60
    %v3353 = vpop.permute.xlu0 %3352
    %3354 = vrot.lane.b32.xlu0 %v3318, 60
    %v3355 = vpop.permute.xlu0 %3354
    %3356 = vrot.lane.b32.xlu0 %v3319, 60
    %v3357 = vpop.permute.xlu0 %3356
    %3358 = vrot.lane.b32.xlu0 %v3320, 60
    %v3359 = vpop.permute.xlu0 %3358
    %3360 = vrot.lane.b32.xlu0 %v3321, 60
    %v3361 = vpop.permute.xlu0 %3360
    %3362 = vrot.lane.b32.xlu0 %v3322, 60
    %v3363 = vpop.permute.xlu0 %3362
    %3364 = vrot.lane.b32.xlu0 %v3323, 60
    %v3365 = vpop.permute.xlu0 %3364
    %3366 = vrot.lane.b32.xlu0 %v3324, 60
    %v3367 = vpop.permute.xlu0 %3366
    %3368 = vrot.lane.b32.xlu0 %v3325, 60
    %v3369 = vpop.permute.xlu0 %3368
    %3370 = vrot.lane.b32.xlu0 %v3326, 60
    %v3371 = vpop.permute.xlu0 %3370
    %3372 = vrot.lane.b32.xlu0 %v3327, 60
    %v3373 = vpop.permute.xlu0 %3372
    %3374 = vrot.lane.b32.xlu0 %v3328, 60
    %v3375 = vpop.permute.xlu0 %3374
    %3376 = vrot.lane.b32.xlu0 %v3329, 60
    %v3377 = vpop.permute.xlu0 %3376
    %3378 = vrot.lane.b32.xlu0 %v3330, 60
    %v3379 = vpop.permute.xlu0 %3378
    %3380 = vrot.lane.b32.xlu0 %v3331, 60
    %v3381 = vpop.permute.xlu0 %3380
    %3382 = vrot.lane.b32.xlu0 %v3332, 60
    %v3383 = vpop.permute.xlu0 %3382
    %v3384 = vsel %vm979, %v3351, %v3353
    %v3385 = vsel %vm979, %v3353, %v3355
    %v3386 = vsel %vm979, %v3355, %v3357
    %v3387 = vsel %vm979, %v3357, %v3359
    %v3388 = vsel %vm979, %v3359, %v3361
    %v3389 = vsel %vm979, %v3361, %v3363
    %v3390 = vsel %vm979, %v3363, %v3365
    %v3391 = vsel %vm979, %v3365, %v3367
    %v3392 = vsel %vm979, %v3367, %v3369
    %v3393 = vsel %vm979, %v3369, %v3371
    %v3394 = vsel %vm979, %v3371, %v3373
    %v3395 = vsel %vm979, %v3373, %v3375
    %v3396 = vsel %vm979, %v3375, %v3377
    %v3397 = vsel %vm979, %v3377, %v3379
    %v3398 = vsel %vm979, %v3379, %v3381
    %v3399 = vsel %vm979, %v3381, %v3383
    %v3416 = vadd.f32 %v3296, %v3384
    %v3417 = vadd.f32 %v3297, %v3385
    %v3418 = vadd.f32 %v3298, %v3386
    %v3419 = vadd.f32 %v3299, %v3387
    %v3420 = vadd.f32 %v3300, %v3388
    %v3421 = vadd.f32 %v3301, %v3389
    %v3422 = vadd.f32 %v3302, %v3390
    %v3423 = vadd.f32 %v3303, %v3391
    %v3424 = vadd.f32 %v3304, %v3392
    %v3425 = vadd.f32 %v3305, %v3393
    %v3426 = vadd.f32 %v3306, %v3394
    %v3427 = vadd.f32 %v3307, %v3395
    %v3428 = vadd.f32 %v3308, %v3396
    %v3429 = vadd.f32 %v3309, %v3397
    %v3430 = vadd.f32 %v3310, %v3398
    %v3431 = vadd.f32 %v3311, %v3399
    %3432 = vset.pattern.permute.xlu0 25
    %3433 = vperm.xlu0 %3432, %v50
    %v3434 = vpop.permute.xlu0 %3433
    %v3436 = vmul.f32 %v3434, %v2659
    %v3437 = vmul.f32 %v3434, %v2660
    %v3438 = vmul.f32 %v3434, %v2661
    %v3439 = vmul.f32 %v3434, %v2662
    %v3440 = vmul.f32 %v3434, %v2663
    %v3441 = vmul.f32 %v3434, %v2664
    %v3442 = vmul.f32 %v3434, %v2665
    %v3443 = vmul.f32 %v3434, %v2666
    %v3444 = vmul.f32 %v3434, %v2667
    %v3445 = vmul.f32 %v3434, %v2668
    %v3446 = vmul.f32 %v3434, %v2669
    %v3447 = vmul.f32 %v3434, %v2670
    %v3448 = vmul.f32 %v3434, %v2671
    %v3449 = vmul.f32 %v3434, %v2672
    %v3450 = vmul.f32 %v3434, %v2673
    %v3451 = vmul.f32 %v3434, %v2674
    %v3452 = vmul.f32 %v3434, %v2675
    %3470 = vrot.lane.b32.xlu0 %v3436, 59
    %v3471 = vpop.permute.xlu0 %3470
    %3472 = vrot.lane.b32.xlu0 %v3437, 59
    %v3473 = vpop.permute.xlu0 %3472
    %3474 = vrot.lane.b32.xlu0 %v3438, 59
    %v3475 = vpop.permute.xlu0 %3474
    %3476 = vrot.lane.b32.xlu0 %v3439, 59
    %v3477 = vpop.permute.xlu0 %3476
    %3478 = vrot.lane.b32.xlu0 %v3440, 59
    %v3479 = vpop.permute.xlu0 %3478
    %3480 = vrot.lane.b32.xlu0 %v3441, 59
    %v3481 = vpop.permute.xlu0 %3480
    %3482 = vrot.lane.b32.xlu0 %v3442, 59
    %v3483 = vpop.permute.xlu0 %3482
    %3484 = vrot.lane.b32.xlu0 %v3443, 59
    %v3485 = vpop.permute.xlu0 %3484
    %3486 = vrot.lane.b32.xlu0 %v3444, 59
    %v3487 = vpop.permute.xlu0 %3486
    %3488 = vrot.lane.b32.xlu0 %v3445, 59
    %v3489 = vpop.permute.xlu0 %3488
    %3490 = vrot.lane.b32.xlu0 %v3446, 59
    %v3491 = vpop.permute.xlu0 %3490
    %3492 = vrot.lane.b32.xlu0 %v3447, 59
    %v3493 = vpop.permute.xlu0 %3492
    %3494 = vrot.lane.b32.xlu0 %v3448, 59
    %v3495 = vpop.permute.xlu0 %3494
    %3496 = vrot.lane.b32.xlu0 %v3449, 59
    %v3497 = vpop.permute.xlu0 %3496
    %3498 = vrot.lane.b32.xlu0 %v3450, 59
    %v3499 = vpop.permute.xlu0 %3498
    %3500 = vrot.lane.b32.xlu0 %v3451, 59
    %v3501 = vpop.permute.xlu0 %3500
    %3502 = vrot.lane.b32.xlu0 %v3452, 59
    %v3503 = vpop.permute.xlu0 %3502
    %v3504 = vsel %vm1100, %v3471, %v3473
    %v3505 = vsel %vm1100, %v3473, %v3475
    %v3506 = vsel %vm1100, %v3475, %v3477
    %v3507 = vsel %vm1100, %v3477, %v3479
    %v3508 = vsel %vm1100, %v3479, %v3481
    %v3509 = vsel %vm1100, %v3481, %v3483
    %v3510 = vsel %vm1100, %v3483, %v3485
    %v3511 = vsel %vm1100, %v3485, %v3487
    %v3512 = vsel %vm1100, %v3487, %v3489
    %v3513 = vsel %vm1100, %v3489, %v3491
    %v3514 = vsel %vm1100, %v3491, %v3493
    %v3515 = vsel %vm1100, %v3493, %v3495
    %v3516 = vsel %vm1100, %v3495, %v3497
    %v3517 = vsel %vm1100, %v3497, %v3499
    %v3518 = vsel %vm1100, %v3499, %v3501
    %v3519 = vsel %vm1100, %v3501, %v3503
    %v3536 = vadd.f32 %v3416, %v3504
    %v3537 = vadd.f32 %v3417, %v3505
    %v3538 = vadd.f32 %v3418, %v3506
    %v3539 = vadd.f32 %v3419, %v3507
    %v3540 = vadd.f32 %v3420, %v3508
    %v3541 = vadd.f32 %v3421, %v3509
    %v3542 = vadd.f32 %v3422, %v3510
    %v3543 = vadd.f32 %v3423, %v3511
    %v3544 = vadd.f32 %v3424, %v3512
    %v3545 = vadd.f32 %v3425, %v3513
    %v3546 = vadd.f32 %v3426, %v3514
    %v3547 = vadd.f32 %v3427, %v3515
    %v3548 = vadd.f32 %v3428, %v3516
    %v3549 = vadd.f32 %v3429, %v3517
    %v3550 = vadd.f32 %v3430, %v3518
    %v3551 = vadd.f32 %v3431, %v3519
    %3552 = vset.pattern.permute.xlu0 26
    %3553 = vperm.xlu0 %3552, %v50
    %v3554 = vpop.permute.xlu0 %3553
    %v3556 = vmul.f32 %v3554, %v2659
    %v3557 = vmul.f32 %v3554, %v2660
    %v3558 = vmul.f32 %v3554, %v2661
    %v3559 = vmul.f32 %v3554, %v2662
    %v3560 = vmul.f32 %v3554, %v2663
    %v3561 = vmul.f32 %v3554, %v2664
    %v3562 = vmul.f32 %v3554, %v2665
    %v3563 = vmul.f32 %v3554, %v2666
    %v3564 = vmul.f32 %v3554, %v2667
    %v3565 = vmul.f32 %v3554, %v2668
    %v3566 = vmul.f32 %v3554, %v2669
    %v3567 = vmul.f32 %v3554, %v2670
    %v3568 = vmul.f32 %v3554, %v2671
    %v3569 = vmul.f32 %v3554, %v2672
    %v3570 = vmul.f32 %v3554, %v2673
    %v3571 = vmul.f32 %v3554, %v2674
    %v3572 = vmul.f32 %v3554, %v2675
    %3590 = vrot.lane.b32.xlu0 %v3556, 58
    %v3591 = vpop.permute.xlu0 %3590
    %3592 = vrot.lane.b32.xlu0 %v3557, 58
    %v3593 = vpop.permute.xlu0 %3592
    %3594 = vrot.lane.b32.xlu0 %v3558, 58
    %v3595 = vpop.permute.xlu0 %3594
    %3596 = vrot.lane.b32.xlu0 %v3559, 58
    %v3597 = vpop.permute.xlu0 %3596
    %3598 = vrot.lane.b32.xlu0 %v3560, 58
    %v3599 = vpop.permute.xlu0 %3598
    %3600 = vrot.lane.b32.xlu0 %v3561, 58
    %v3601 = vpop.permute.xlu0 %3600
    %3602 = vrot.lane.b32.xlu0 %v3562, 58
    %v3603 = vpop.permute.xlu0 %3602
    %3604 = vrot.lane.b32.xlu0 %v3563, 58
    %v3605 = vpop.permute.xlu0 %3604
    %3606 = vrot.lane.b32.xlu0 %v3564, 58
    %v3607 = vpop.permute.xlu0 %3606
    %3608 = vrot.lane.b32.xlu0 %v3565, 58
    %v3609 = vpop.permute.xlu0 %3608
    %3610 = vrot.lane.b32.xlu0 %v3566, 58
    %v3611 = vpop.permute.xlu0 %3610
    %3612 = vrot.lane.b32.xlu0 %v3567, 58
    %v3613 = vpop.permute.xlu0 %3612
    %3614 = vrot.lane.b32.xlu0 %v3568, 58
    %v3615 = vpop.permute.xlu0 %3614
    %3616 = vrot.lane.b32.xlu0 %v3569, 58
    %v3617 = vpop.permute.xlu0 %3616
    %3618 = vrot.lane.b32.xlu0 %v3570, 58
    %v3619 = vpop.permute.xlu0 %3618
    %3620 = vrot.lane.b32.xlu0 %v3571, 58
    %v3621 = vpop.permute.xlu0 %3620
    %3622 = vrot.lane.b32.xlu0 %v3572, 58
    %v3623 = vpop.permute.xlu0 %3622
    %v3624 = vsel %vm1221, %v3591, %v3593
    %v3625 = vsel %vm1221, %v3593, %v3595
    %v3626 = vsel %vm1221, %v3595, %v3597
    %v3627 = vsel %vm1221, %v3597, %v3599
    %v3628 = vsel %vm1221, %v3599, %v3601
    %v3629 = vsel %vm1221, %v3601, %v3603
    %v3630 = vsel %vm1221, %v3603, %v3605
    %v3631 = vsel %vm1221, %v3605, %v3607
    %v3632 = vsel %vm1221, %v3607, %v3609
    %v3633 = vsel %vm1221, %v3609, %v3611
    %v3634 = vsel %vm1221, %v3611, %v3613
    %v3635 = vsel %vm1221, %v3613, %v3615
    %v3636 = vsel %vm1221, %v3615, %v3617
    %v3637 = vsel %vm1221, %v3617, %v3619
    %v3638 = vsel %vm1221, %v3619, %v3621
    %v3639 = vsel %vm1221, %v3621, %v3623
    %v3656 = vadd.f32 %v3536, %v3624
    %v3657 = vadd.f32 %v3537, %v3625
    %v3658 = vadd.f32 %v3538, %v3626
    %v3659 = vadd.f32 %v3539, %v3627
    %v3660 = vadd.f32 %v3540, %v3628
    %v3661 = vadd.f32 %v3541, %v3629
    %v3662 = vadd.f32 %v3542, %v3630
    %v3663 = vadd.f32 %v3543, %v3631
    %v3664 = vadd.f32 %v3544, %v3632
    %v3665 = vadd.f32 %v3545, %v3633
    %v3666 = vadd.f32 %v3546, %v3634
    %v3667 = vadd.f32 %v3547, %v3635
    %v3668 = vadd.f32 %v3548, %v3636
    %v3669 = vadd.f32 %v3549, %v3637
    %v3670 = vadd.f32 %v3550, %v3638
    %v3671 = vadd.f32 %v3551, %v3639
    %s3672 = scalar_lea.vmem %s55, 3 [#allocation2]
    %v3673 = vld [vmem:[%s3672] ss:$4 sm:$0xff]
    %s3674 = scalar_lea.vmem %s55, 35 [#allocation2]
    %v3675 = vld [vmem:[%s3674] ss:$4 sm:$0xff]
    %s3676 = scalar_lea.vmem %s55, 67 [#allocation2]
    %v3677 = vld [vmem:[%s3676] ss:$4 sm:$0x1]
    %v3681 = vlaneseq
    %v3682 = vshrl.u32 %v3681, 7
    %v3683 = vsub.s32 0, %v3682
    %v3684 = vrot.slane %v3673, %v3683
    %v3685 = vlaneseq
    %v3686 = vshrl.u32 %v3685, 7
    %v3687 = vsub.s32 1, %v3686
    %v3688 = vrot.slane %v3673, %v3687
    %v3689 = vlaneseq
    %v3690 = vshrl.u32 %v3689, 7
    %v3691 = vsub.s32 2, %v3690
    %v3692 = vrot.slane %v3673, %v3691
    %v3693 = vlaneseq
    %v3694 = vshrl.u32 %v3693, 7
    %v3695 = vsub.s32 3, %v3694
    %v3696 = vrot.slane %v3673, %v3695
    %v3697 = vlaneseq
    %v3698 = vshrl.u32 %v3697, 7
    %v3699 = vsub.s32 4, %v3698
    %v3700 = vrot.slane %v3673, %v3699
    %v3701 = vlaneseq
    %v3702 = vshrl.u32 %v3701, 7
    %v3703 = vsub.s32 5, %v3702
    %v3704 = vrot.slane %v3673, %v3703
    %v3705 = vlaneseq
    %v3706 = vshrl.u32 %v3705, 7
    %v3707 = vsub.s32 6, %v3706
    %v3708 = vrot.slane %v3673, %v3707
    %v3709 = vlaneseq
    %v3710 = vshrl.u32 %v3709, 7
    %v3711 = vsub.s32 7, %v3710
    %v3712 = vrot.slane %v3673, %v3711
    %v3713 = vlaneseq
    %v3714 = vshrl.u32 %v3713, 7
    %v3715 = vsub.s32 0, %v3714
    %v3716 = vrot.slane %v3675, %v3715
    %v3717 = vlaneseq
    %v3718 = vshrl.u32 %v3717, 7
    %v3719 = vsub.s32 1, %v3718
    %v3720 = vrot.slane %v3675, %v3719
    %v3721 = vlaneseq
    %v3722 = vshrl.u32 %v3721, 7
    %v3723 = vsub.s32 2, %v3722
    %v3724 = vrot.slane %v3675, %v3723
    %v3725 = vlaneseq
    %v3726 = vshrl.u32 %v3725, 7
    %v3727 = vsub.s32 3, %v3726
    %v3728 = vrot.slane %v3675, %v3727
    %v3729 = vlaneseq
    %v3730 = vshrl.u32 %v3729, 7
    %v3731 = vsub.s32 4, %v3730
    %v3732 = vrot.slane %v3675, %v3731
    %v3733 = vlaneseq
    %v3734 = vshrl.u32 %v3733, 7
    %v3735 = vsub.s32 5, %v3734
    %v3736 = vrot.slane %v3675, %v3735
    %v3737 = vlaneseq
    %v3738 = vshrl.u32 %v3737, 7
    %v3739 = vsub.s32 6, %v3738
    %v3740 = vrot.slane %v3675, %v3739
    %v3741 = vlaneseq
    %v3742 = vshrl.u32 %v3741, 7
    %v3743 = vsub.s32 7, %v3742
    %v3744 = vrot.slane %v3675, %v3743
    %v3745 = vlaneseq
    %v3746 = vshrl.u32 %v3745, 7
    %v3747 = vsub.s32 0, %v3746
    %v3748 = vrot.slane %v3677, %v3747
    %s3766 = scalar_lea.vmem %s153, 3 [#allocation2]
    %v3767 = vld [vmem:[%s3766] ss:$4 sm:$0xff]
    %s3768 = scalar_lea.vmem %s153, 35 [#allocation2]
    %v3769 = vld [vmem:[%s3768] ss:$4 sm:$0xff]
    %s3770 = scalar_lea.vmem %s153, 67 [#allocation2]
    %v3771 = vld [vmem:[%s3770] ss:$4 sm:$0x1]
    %v3775 = vlaneseq
    %v3776 = vshrl.u32 %v3775, 7
    %v3777 = vsub.s32 0, %v3776
    %v3778 = vrot.slane %v3767, %v3777
    %v3779 = vlaneseq
    %v3780 = vshrl.u32 %v3779, 7
    %v3781 = vsub.s32 1, %v3780
    %v3782 = vrot.slane %v3767, %v3781
    %v3783 = vlaneseq
    %v3784 = vshrl.u32 %v3783, 7
    %v3785 = vsub.s32 2, %v3784
    %v3786 = vrot.slane %v3767, %v3785
    %v3787 = vlaneseq
    %v3788 = vshrl.u32 %v3787, 7
    %v3789 = vsub.s32 3, %v3788
    %v3790 = vrot.slane %v3767, %v3789
    %v3791 = vlaneseq
    %v3792 = vshrl.u32 %v3791, 7
    %v3793 = vsub.s32 4, %v3792
    %v3794 = vrot.slane %v3767, %v3793
    %v3795 = vlaneseq
    %v3796 = vshrl.u32 %v3795, 7
    %v3797 = vsub.s32 5, %v3796
    %v3798 = vrot.slane %v3767, %v3797
    %v3799 = vlaneseq
    %v3800 = vshrl.u32 %v3799, 7
    %v3801 = vsub.s32 6, %v3800
    %v3802 = vrot.slane %v3767, %v3801
    %v3803 = vlaneseq
    %v3804 = vshrl.u32 %v3803, 7
    %v3805 = vsub.s32 7, %v3804
    %v3806 = vrot.slane %v3767, %v3805
    %v3807 = vlaneseq
    %v3808 = vshrl.u32 %v3807, 7
    %v3809 = vsub.s32 0, %v3808
    %v3810 = vrot.slane %v3769, %v3809
    %v3811 = vlaneseq
    %v3812 = vshrl.u32 %v3811, 7
    %v3813 = vsub.s32 1, %v3812
    %v3814 = vrot.slane %v3769, %v3813
    %v3815 = vlaneseq
    %v3816 = vshrl.u32 %v3815, 7
    %v3817 = vsub.s32 2, %v3816
    %v3818 = vrot.slane %v3769, %v3817
    %v3819 = vlaneseq
    %v3820 = vshrl.u32 %v3819, 7
    %v3821 = vsub.s32 3, %v3820
    %v3822 = vrot.slane %v3769, %v3821
    %v3823 = vlaneseq
    %v3824 = vshrl.u32 %v3823, 7
    %v3825 = vsub.s32 4, %v3824
    %v3826 = vrot.slane %v3769, %v3825
    %v3827 = vlaneseq
    %v3828 = vshrl.u32 %v3827, 7
    %v3829 = vsub.s32 5, %v3828
    %v3830 = vrot.slane %v3769, %v3829
    %v3831 = vlaneseq
    %v3832 = vshrl.u32 %v3831, 7
    %v3833 = vsub.s32 6, %v3832
    %v3834 = vrot.slane %v3769, %v3833
    %v3835 = vlaneseq
    %v3836 = vshrl.u32 %v3835, 7
    %v3837 = vsub.s32 7, %v3836
    %v3838 = vrot.slane %v3769, %v3837
    %v3839 = vlaneseq
    %v3840 = vshrl.u32 %v3839, 7
    %v3841 = vsub.s32 0, %v3840
    %v3842 = vrot.slane %v3771, %v3841
    %v3860 = vsel %vm247, %v3684, %v3778
    %v3861 = vsel %vm247, %v3688, %v3782
    %v3862 = vsel %vm247, %v3692, %v3786
    %v3863 = vsel %vm247, %v3696, %v3790
    %v3864 = vsel %vm247, %v3700, %v3794
    %v3865 = vsel %vm247, %v3704, %v3798
    %v3866 = vsel %vm247, %v3708, %v3802
    %v3867 = vsel %vm247, %v3712, %v3806
    %v3868 = vsel %vm247, %v3716, %v3810
    %v3869 = vsel %vm247, %v3720, %v3814
    %v3870 = vsel %vm247, %v3724, %v3818
    %v3871 = vsel %vm247, %v3728, %v3822
    %v3872 = vsel %vm247, %v3732, %v3826
    %v3873 = vsel %vm247, %v3736, %v3830
    %v3874 = vsel %vm247, %v3740, %v3834
    %v3875 = vsel %vm247, %v3744, %v3838
    %v3876 = vsel %vm247, %v3748, %v3842
    %3877 = vset.pattern.permute.xlu0 27
    %3878 = vperm.xlu0 %3877, %v50
    %v3879 = vpop.permute.xlu0 %3878
    %v3881 = vmul.f32 %v3879, %v3860
    %v3882 = vmul.f32 %v3879, %v3861
    %v3883 = vmul.f32 %v3879, %v3862
    %v3884 = vmul.f32 %v3879, %v3863
    %v3885 = vmul.f32 %v3879, %v3864
    %v3886 = vmul.f32 %v3879, %v3865
    %v3887 = vmul.f32 %v3879, %v3866
    %v3888 = vmul.f32 %v3879, %v3867
    %v3889 = vmul.f32 %v3879, %v3868
    %v3890 = vmul.f32 %v3879, %v3869
    %v3891 = vmul.f32 %v3879, %v3870
    %v3892 = vmul.f32 %v3879, %v3871
    %v3893 = vmul.f32 %v3879, %v3872
    %v3894 = vmul.f32 %v3879, %v3873
    %v3895 = vmul.f32 %v3879, %v3874
    %v3896 = vmul.f32 %v3879, %v3875
    %v3897 = vadd.f32 %v3656, %v3881
    %v3898 = vadd.f32 %v3657, %v3882
    %v3899 = vadd.f32 %v3658, %v3883
    %v3900 = vadd.f32 %v3659, %v3884
    %v3901 = vadd.f32 %v3660, %v3885
    %v3902 = vadd.f32 %v3661, %v3886
    %v3903 = vadd.f32 %v3662, %v3887
    %v3904 = vadd.f32 %v3663, %v3888
    %v3905 = vadd.f32 %v3664, %v3889
    %v3906 = vadd.f32 %v3665, %v3890
    %v3907 = vadd.f32 %v3666, %v3891
    %v3908 = vadd.f32 %v3667, %v3892
    %v3909 = vadd.f32 %v3668, %v3893
    %v3910 = vadd.f32 %v3669, %v3894
    %v3911 = vadd.f32 %v3670, %v3895
    %v3912 = vadd.f32 %v3671, %v3896
    %3913 = vset.pattern.permute.xlu0 28
    %3914 = vperm.xlu0 %3913, %v50
    %v3915 = vpop.permute.xlu0 %3914
    %v3917 = vmul.f32 %v3915, %v3860
    %v3918 = vmul.f32 %v3915, %v3861
    %v3919 = vmul.f32 %v3915, %v3862
    %v3920 = vmul.f32 %v3915, %v3863
    %v3921 = vmul.f32 %v3915, %v3864
    %v3922 = vmul.f32 %v3915, %v3865
    %v3923 = vmul.f32 %v3915, %v3866
    %v3924 = vmul.f32 %v3915, %v3867
    %v3925 = vmul.f32 %v3915, %v3868
    %v3926 = vmul.f32 %v3915, %v3869
    %v3927 = vmul.f32 %v3915, %v3870
    %v3928 = vmul.f32 %v3915, %v3871
    %v3929 = vmul.f32 %v3915, %v3872
    %v3930 = vmul.f32 %v3915, %v3873
    %v3931 = vmul.f32 %v3915, %v3874
    %v3932 = vmul.f32 %v3915, %v3875
    %v3933 = vmul.f32 %v3915, %v3876
    %3951 = vrot.lane.b32.xlu0 %v3917, 127
    %v3952 = vpop.permute.xlu0 %3951
    %3953 = vrot.lane.b32.xlu0 %v3918, 127
    %v3954 = vpop.permute.xlu0 %3953
    %3955 = vrot.lane.b32.xlu0 %v3919, 127
    %v3956 = vpop.permute.xlu0 %3955
    %3957 = vrot.lane.b32.xlu0 %v3920, 127
    %v3958 = vpop.permute.xlu0 %3957
    %3959 = vrot.lane.b32.xlu0 %v3921, 127
    %v3960 = vpop.permute.xlu0 %3959
    %3961 = vrot.lane.b32.xlu0 %v3922, 127
    %v3962 = vpop.permute.xlu0 %3961
    %3963 = vrot.lane.b32.xlu0 %v3923, 127
    %v3964 = vpop.permute.xlu0 %3963
    %3965 = vrot.lane.b32.xlu0 %v3924, 127
    %v3966 = vpop.permute.xlu0 %3965
    %3967 = vrot.lane.b32.xlu0 %v3925, 127
    %v3968 = vpop.permute.xlu0 %3967
    %3969 = vrot.lane.b32.xlu0 %v3926, 127
    %v3970 = vpop.permute.xlu0 %3969
    %3971 = vrot.lane.b32.xlu0 %v3927, 127
    %v3972 = vpop.permute.xlu0 %3971
    %3973 = vrot.lane.b32.xlu0 %v3928, 127
    %v3974 = vpop.permute.xlu0 %3973
    %3975 = vrot.lane.b32.xlu0 %v3929, 127
    %v3976 = vpop.permute.xlu0 %3975
    %3977 = vrot.lane.b32.xlu0 %v3930, 127
    %v3978 = vpop.permute.xlu0 %3977
    %3979 = vrot.lane.b32.xlu0 %v3931, 127
    %v3980 = vpop.permute.xlu0 %3979
    %3981 = vrot.lane.b32.xlu0 %v3932, 127
    %v3982 = vpop.permute.xlu0 %3981
    %3983 = vrot.lane.b32.xlu0 %v3933, 127
    %v3984 = vpop.permute.xlu0 %3983
    %v3985 = vsel %vm374, %v3952, %v3954
    %v3986 = vsel %vm374, %v3954, %v3956
    %v3987 = vsel %vm374, %v3956, %v3958
    %v3988 = vsel %vm374, %v3958, %v3960
    %v3989 = vsel %vm374, %v3960, %v3962
    %v3990 = vsel %vm374, %v3962, %v3964
    %v3991 = vsel %vm374, %v3964, %v3966
    %v3992 = vsel %vm374, %v3966, %v3968
    %v3993 = vsel %vm374, %v3968, %v3970
    %v3994 = vsel %vm374, %v3970, %v3972
    %v3995 = vsel %vm374, %v3972, %v3974
    %v3996 = vsel %vm374, %v3974, %v3976
    %v3997 = vsel %vm374, %v3976, %v3978
    %v3998 = vsel %vm374, %v3978, %v3980
    %v3999 = vsel %vm374, %v3980, %v3982
    %v4000 = vsel %vm374, %v3982, %v3984
    %v4017 = vadd.f32 %v3897, %v3985
    %v4018 = vadd.f32 %v3898, %v3986
    %v4019 = vadd.f32 %v3899, %v3987
    %v4020 = vadd.f32 %v3900, %v3988
    %v4021 = vadd.f32 %v3901, %v3989
    %v4022 = vadd.f32 %v3902, %v3990
    %v4023 = vadd.f32 %v3903, %v3991
    %v4024 = vadd.f32 %v3904, %v3992
    %v4025 = vadd.f32 %v3905, %v3993
    %v4026 = vadd.f32 %v3906, %v3994
    %v4027 = vadd.f32 %v3907, %v3995
    %v4028 = vadd.f32 %v3908, %v3996
    %v4029 = vadd.f32 %v3909, %v3997
    %v4030 = vadd.f32 %v3910, %v3998
    %v4031 = vadd.f32 %v3911, %v3999
    %v4032 = vadd.f32 %v3912, %v4000
    %4033 = vset.pattern.permute.xlu0 29
    %4034 = vperm.xlu0 %4033, %v50
    %v4035 = vpop.permute.xlu0 %4034
    %v4037 = vmul.f32 %v4035, %v3860
    %v4038 = vmul.f32 %v4035, %v3861
    %v4039 = vmul.f32 %v4035, %v3862
    %v4040 = vmul.f32 %v4035, %v3863
    %v4041 = vmul.f32 %v4035, %v3864
    %v4042 = vmul.f32 %v4035, %v3865
    %v4043 = vmul.f32 %v4035, %v3866
    %v4044 = vmul.f32 %v4035, %v3867
    %v4045 = vmul.f32 %v4035, %v3868
    %v4046 = vmul.f32 %v4035, %v3869
    %v4047 = vmul.f32 %v4035, %v3870
    %v4048 = vmul.f32 %v4035, %v3871
    %v4049 = vmul.f32 %v4035, %v3872
    %v4050 = vmul.f32 %v4035, %v3873
    %v4051 = vmul.f32 %v4035, %v3874
    %v4052 = vmul.f32 %v4035, %v3875
    %v4053 = vmul.f32 %v4035, %v3876
    %4071 = vrot.lane.b32.xlu0 %v4037, 126
    %v4072 = vpop.permute.xlu0 %4071
    %4073 = vrot.lane.b32.xlu0 %v4038, 126
    %v4074 = vpop.permute.xlu0 %4073
    %4075 = vrot.lane.b32.xlu0 %v4039, 126
    %v4076 = vpop.permute.xlu0 %4075
    %4077 = vrot.lane.b32.xlu0 %v4040, 126
    %v4078 = vpop.permute.xlu0 %4077
    %4079 = vrot.lane.b32.xlu0 %v4041, 126
    %v4080 = vpop.permute.xlu0 %4079
    %4081 = vrot.lane.b32.xlu0 %v4042, 126
    %v4082 = vpop.permute.xlu0 %4081
    %4083 = vrot.lane.b32.xlu0 %v4043, 126
    %v4084 = vpop.permute.xlu0 %4083
    %4085 = vrot.lane.b32.xlu0 %v4044, 126
    %v4086 = vpop.permute.xlu0 %4085
    %4087 = vrot.lane.b32.xlu0 %v4045, 126
    %v4088 = vpop.permute.xlu0 %4087
    %4089 = vrot.lane.b32.xlu0 %v4046, 126
    %v4090 = vpop.permute.xlu0 %4089
    %4091 = vrot.lane.b32.xlu0 %v4047, 126
    %v4092 = vpop.permute.xlu0 %4091
    %4093 = vrot.lane.b32.xlu0 %v4048, 126
    %v4094 = vpop.permute.xlu0 %4093
    %4095 = vrot.lane.b32.xlu0 %v4049, 126
    %v4096 = vpop.permute.xlu0 %4095
    %4097 = vrot.lane.b32.xlu0 %v4050, 126
    %v4098 = vpop.permute.xlu0 %4097
    %4099 = vrot.lane.b32.xlu0 %v4051, 126
    %v4100 = vpop.permute.xlu0 %4099
    %4101 = vrot.lane.b32.xlu0 %v4052, 126
    %v4102 = vpop.permute.xlu0 %4101
    %4103 = vrot.lane.b32.xlu0 %v4053, 126
    %v4104 = vpop.permute.xlu0 %4103
    %v4105 = vsel %vm495, %v4072, %v4074
    %v4106 = vsel %vm495, %v4074, %v4076
    %v4107 = vsel %vm495, %v4076, %v4078
    %v4108 = vsel %vm495, %v4078, %v4080
    %v4109 = vsel %vm495, %v4080, %v4082
    %v4110 = vsel %vm495, %v4082, %v4084
    %v4111 = vsel %vm495, %v4084, %v4086
    %v4112 = vsel %vm495, %v4086, %v4088
    %v4113 = vsel %vm495, %v4088, %v4090
    %v4114 = vsel %vm495, %v4090, %v4092
    %v4115 = vsel %vm495, %v4092, %v4094
    %v4116 = vsel %vm495, %v4094, %v4096
    %v4117 = vsel %vm495, %v4096, %v4098
    %v4118 = vsel %vm495, %v4098, %v4100
    %v4119 = vsel %vm495, %v4100, %v4102
    %v4120 = vsel %vm495, %v4102, %v4104
    %v4137 = vadd.f32 %v4017, %v4105
    %v4138 = vadd.f32 %v4018, %v4106
    %v4139 = vadd.f32 %v4019, %v4107
    %v4140 = vadd.f32 %v4020, %v4108
    %v4141 = vadd.f32 %v4021, %v4109
    %v4142 = vadd.f32 %v4022, %v4110
    %v4143 = vadd.f32 %v4023, %v4111
    %v4144 = vadd.f32 %v4024, %v4112
    %v4145 = vadd.f32 %v4025, %v4113
    %v4146 = vadd.f32 %v4026, %v4114
    %v4147 = vadd.f32 %v4027, %v4115
    %v4148 = vadd.f32 %v4028, %v4116
    %v4149 = vadd.f32 %v4029, %v4117
    %v4150 = vadd.f32 %v4030, %v4118
    %v4151 = vadd.f32 %v4031, %v4119
    %v4152 = vadd.f32 %v4032, %v4120
    %4153 = vset.pattern.permute.xlu0 30
    %4154 = vperm.xlu0 %4153, %v50
    %v4155 = vpop.permute.xlu0 %4154
    %v4157 = vmul.f32 %v4155, %v3860
    %v4158 = vmul.f32 %v4155, %v3861
    %v4159 = vmul.f32 %v4155, %v3862
    %v4160 = vmul.f32 %v4155, %v3863
    %v4161 = vmul.f32 %v4155, %v3864
    %v4162 = vmul.f32 %v4155, %v3865
    %v4163 = vmul.f32 %v4155, %v3866
    %v4164 = vmul.f32 %v4155, %v3867
    %v4165 = vmul.f32 %v4155, %v3868
    %v4166 = vmul.f32 %v4155, %v3869
    %v4167 = vmul.f32 %v4155, %v3870
    %v4168 = vmul.f32 %v4155, %v3871
    %v4169 = vmul.f32 %v4155, %v3872
    %v4170 = vmul.f32 %v4155, %v3873
    %v4171 = vmul.f32 %v4155, %v3874
    %v4172 = vmul.f32 %v4155, %v3875
    %v4173 = vmul.f32 %v4155, %v3876
    %4191 = vrot.lane.b32.xlu0 %v4157, 94
    %v4192 = vpop.permute.xlu0 %4191
    %4193 = vrot.lane.b32.xlu0 %v4158, 94
    %v4194 = vpop.permute.xlu0 %4193
    %4195 = vrot.lane.b32.xlu0 %v4159, 94
    %v4196 = vpop.permute.xlu0 %4195
    %4197 = vrot.lane.b32.xlu0 %v4160, 94
    %v4198 = vpop.permute.xlu0 %4197
    %4199 = vrot.lane.b32.xlu0 %v4161, 94
    %v4200 = vpop.permute.xlu0 %4199
    %4201 = vrot.lane.b32.xlu0 %v4162, 94
    %v4202 = vpop.permute.xlu0 %4201
    %4203 = vrot.lane.b32.xlu0 %v4163, 94
    %v4204 = vpop.permute.xlu0 %4203
    %4205 = vrot.lane.b32.xlu0 %v4164, 94
    %v4206 = vpop.permute.xlu0 %4205
    %4207 = vrot.lane.b32.xlu0 %v4165, 94
    %v4208 = vpop.permute.xlu0 %4207
    %4209 = vrot.lane.b32.xlu0 %v4166, 94
    %v4210 = vpop.permute.xlu0 %4209
    %4211 = vrot.lane.b32.xlu0 %v4167, 94
    %v4212 = vpop.permute.xlu0 %4211
    %4213 = vrot.lane.b32.xlu0 %v4168, 94
    %v4214 = vpop.permute.xlu0 %4213
    %4215 = vrot.lane.b32.xlu0 %v4169, 94
    %v4216 = vpop.permute.xlu0 %4215
    %4217 = vrot.lane.b32.xlu0 %v4170, 94
    %v4218 = vpop.permute.xlu0 %4217
    %4219 = vrot.lane.b32.xlu0 %v4171, 94
    %v4220 = vpop.permute.xlu0 %4219
    %4221 = vrot.lane.b32.xlu0 %v4172, 94
    %v4222 = vpop.permute.xlu0 %4221
    %4223 = vrot.lane.b32.xlu0 %v4173, 94
    %v4224 = vpop.permute.xlu0 %4223
    %v4225 = vsel %vm616, %v4192, %v4194
    %v4226 = vsel %vm616, %v4194, %v4196
    %v4227 = vsel %vm616, %v4196, %v4198
    %v4228 = vsel %vm616, %v4198, %v4200
    %v4229 = vsel %vm616, %v4200, %v4202
    %v4230 = vsel %vm616, %v4202, %v4204
    %v4231 = vsel %vm616, %v4204, %v4206
    %v4232 = vsel %vm616, %v4206, %v4208
    %v4233 = vsel %vm616, %v4208, %v4210
    %v4234 = vsel %vm616, %v4210, %v4212
    %v4235 = vsel %vm616, %v4212, %v4214
    %v4236 = vsel %vm616, %v4214, %v4216
    %v4237 = vsel %vm616, %v4216, %v4218
    %v4238 = vsel %vm616, %v4218, %v4220
    %v4239 = vsel %vm616, %v4220, %v4222
    %v4240 = vsel %vm616, %v4222, %v4224
    %v4257 = vadd.f32 %v4137, %v4225
    %v4258 = vadd.f32 %v4138, %v4226
    %v4259 = vadd.f32 %v4139, %v4227
    %v4260 = vadd.f32 %v4140, %v4228
    %v4261 = vadd.f32 %v4141, %v4229
    %v4262 = vadd.f32 %v4142, %v4230
    %v4263 = vadd.f32 %v4143, %v4231
    %v4264 = vadd.f32 %v4144, %v4232
    %v4265 = vadd.f32 %v4145, %v4233
    %v4266 = vadd.f32 %v4146, %v4234
    %v4267 = vadd.f32 %v4147, %v4235
    %v4268 = vadd.f32 %v4148, %v4236
    %v4269 = vadd.f32 %v4149, %v4237
    %v4270 = vadd.f32 %v4150, %v4238
    %v4271 = vadd.f32 %v4151, %v4239
    %v4272 = vadd.f32 %v4152, %v4240
    %4273 = vset.pattern.permute.xlu0 31
    %4274 = vperm.xlu0 %4273, %v50
    %v4275 = vpop.permute.xlu0 %4274
    %v4277 = vmul.f32 %v4275, %v3860
    %v4278 = vmul.f32 %v4275, %v3861
    %v4279 = vmul.f32 %v4275, %v3862
    %v4280 = vmul.f32 %v4275, %v3863
    %v4281 = vmul.f32 %v4275, %v3864
    %v4282 = vmul.f32 %v4275, %v3865
    %v4283 = vmul.f32 %v4275, %v3866
    %v4284 = vmul.f32 %v4275, %v3867
    %v4285 = vmul.f32 %v4275, %v3868
    %v4286 = vmul.f32 %v4275, %v3869
    %v4287 = vmul.f32 %v4275, %v3870
    %v4288 = vmul.f32 %v4275, %v3871
    %v4289 = vmul.f32 %v4275, %v3872
    %v4290 = vmul.f32 %v4275, %v3873
    %v4291 = vmul.f32 %v4275, %v3874
    %v4292 = vmul.f32 %v4275, %v3875
    %v4293 = vmul.f32 %v4275, %v3876
    %4311 = vrot.lane.b32.xlu0 %v4277, 93
    %v4312 = vpop.permute.xlu0 %4311
    %4313 = vrot.lane.b32.xlu0 %v4278, 93
    %v4314 = vpop.permute.xlu0 %4313
    %4315 = vrot.lane.b32.xlu0 %v4279, 93
    %v4316 = vpop.permute.xlu0 %4315
    %4317 = vrot.lane.b32.xlu0 %v4280, 93
    %v4318 = vpop.permute.xlu0 %4317
    %4319 = vrot.lane.b32.xlu0 %v4281, 93
    %v4320 = vpop.permute.xlu0 %4319
    %4321 = vrot.lane.b32.xlu0 %v4282, 93
    %v4322 = vpop.permute.xlu0 %4321
    %4323 = vrot.lane.b32.xlu0 %v4283, 93
    %v4324 = vpop.permute.xlu0 %4323
    %4325 = vrot.lane.b32.xlu0 %v4284, 93
    %v4326 = vpop.permute.xlu0 %4325
    %4327 = vrot.lane.b32.xlu0 %v4285, 93
    %v4328 = vpop.permute.xlu0 %4327
    %4329 = vrot.lane.b32.xlu0 %v4286, 93
    %v4330 = vpop.permute.xlu0 %4329
    %4331 = vrot.lane.b32.xlu0 %v4287, 93
    %v4332 = vpop.permute.xlu0 %4331
    %4333 = vrot.lane.b32.xlu0 %v4288, 93
    %v4334 = vpop.permute.xlu0 %4333
    %4335 = vrot.lane.b32.xlu0 %v4289, 93
    %v4336 = vpop.permute.xlu0 %4335
    %4337 = vrot.lane.b32.xlu0 %v4290, 93
    %v4338 = vpop.permute.xlu0 %4337
    %4339 = vrot.lane.b32.xlu0 %v4291, 93
    %v4340 = vpop.permute.xlu0 %4339
    %4341 = vrot.lane.b32.xlu0 %v4292, 93
    %v4342 = vpop.permute.xlu0 %4341
    %4343 = vrot.lane.b32.xlu0 %v4293, 93
    %v4344 = vpop.permute.xlu0 %4343
    %v4345 = vsel %vm737, %v4312, %v4314
    %v4346 = vsel %vm737, %v4314, %v4316
    %v4347 = vsel %vm737, %v4316, %v4318
    %v4348 = vsel %vm737, %v4318, %v4320
    %v4349 = vsel %vm737, %v4320, %v4322
    %v4350 = vsel %vm737, %v4322, %v4324
    %v4351 = vsel %vm737, %v4324, %v4326
    %v4352 = vsel %vm737, %v4326, %v4328
    %v4353 = vsel %vm737, %v4328, %v4330
    %v4354 = vsel %vm737, %v4330, %v4332
    %v4355 = vsel %vm737, %v4332, %v4334
    %v4356 = vsel %vm737, %v4334, %v4336
    %v4357 = vsel %vm737, %v4336, %v4338
    %v4358 = vsel %vm737, %v4338, %v4340
    %v4359 = vsel %vm737, %v4340, %v4342
    %v4360 = vsel %vm737, %v4342, %v4344
    %v4377 = vadd.f32 %v4257, %v4345
    %v4378 = vadd.f32 %v4258, %v4346
    %v4379 = vadd.f32 %v4259, %v4347
    %v4380 = vadd.f32 %v4260, %v4348
    %v4381 = vadd.f32 %v4261, %v4349
    %v4382 = vadd.f32 %v4262, %v4350
    %v4383 = vadd.f32 %v4263, %v4351
    %v4384 = vadd.f32 %v4264, %v4352
    %v4385 = vadd.f32 %v4265, %v4353
    %v4386 = vadd.f32 %v4266, %v4354
    %v4387 = vadd.f32 %v4267, %v4355
    %v4388 = vadd.f32 %v4268, %v4356
    %v4389 = vadd.f32 %v4269, %v4357
    %v4390 = vadd.f32 %v4270, %v4358
    %v4391 = vadd.f32 %v4271, %v4359
    %v4392 = vadd.f32 %v4272, %v4360
    %4393 = vset.pattern.permute.xlu0 32
    %4394 = vperm.xlu0 %4393, %v50
    %v4395 = vpop.permute.xlu0 %4394
    %v4397 = vmul.f32 %v4395, %v3860
    %v4398 = vmul.f32 %v4395, %v3861
    %v4399 = vmul.f32 %v4395, %v3862
    %v4400 = vmul.f32 %v4395, %v3863
    %v4401 = vmul.f32 %v4395, %v3864
    %v4402 = vmul.f32 %v4395, %v3865
    %v4403 = vmul.f32 %v4395, %v3866
    %v4404 = vmul.f32 %v4395, %v3867
    %v4405 = vmul.f32 %v4395, %v3868
    %v4406 = vmul.f32 %v4395, %v3869
    %v4407 = vmul.f32 %v4395, %v3870
    %v4408 = vmul.f32 %v4395, %v3871
    %v4409 = vmul.f32 %v4395, %v3872
    %v4410 = vmul.f32 %v4395, %v3873
    %v4411 = vmul.f32 %v4395, %v3874
    %v4412 = vmul.f32 %v4395, %v3875
    %v4413 = vmul.f32 %v4395, %v3876
    %4431 = vrot.lane.b32.xlu0 %v4397, 92
    %v4432 = vpop.permute.xlu0 %4431
    %4433 = vrot.lane.b32.xlu0 %v4398, 92
    %v4434 = vpop.permute.xlu0 %4433
    %4435 = vrot.lane.b32.xlu0 %v4399, 92
    %v4436 = vpop.permute.xlu0 %4435
    %4437 = vrot.lane.b32.xlu0 %v4400, 92
    %v4438 = vpop.permute.xlu0 %4437
    %4439 = vrot.lane.b32.xlu0 %v4401, 92
    %v4440 = vpop.permute.xlu0 %4439
    %4441 = vrot.lane.b32.xlu0 %v4402, 92
    %v4442 = vpop.permute.xlu0 %4441
    %4443 = vrot.lane.b32.xlu0 %v4403, 92
    %v4444 = vpop.permute.xlu0 %4443
    %4445 = vrot.lane.b32.xlu0 %v4404, 92
    %v4446 = vpop.permute.xlu0 %4445
    %4447 = vrot.lane.b32.xlu0 %v4405, 92
    %v4448 = vpop.permute.xlu0 %4447
    %4449 = vrot.lane.b32.xlu0 %v4406, 92
    %v4450 = vpop.permute.xlu0 %4449
    %4451 = vrot.lane.b32.xlu0 %v4407, 92
    %v4452 = vpop.permute.xlu0 %4451
    %4453 = vrot.lane.b32.xlu0 %v4408, 92
    %v4454 = vpop.permute.xlu0 %4453
    %4455 = vrot.lane.b32.xlu0 %v4409, 92
    %v4456 = vpop.permute.xlu0 %4455
    %4457 = vrot.lane.b32.xlu0 %v4410, 92
    %v4458 = vpop.permute.xlu0 %4457
    %4459 = vrot.lane.b32.xlu0 %v4411, 92
    %v4460 = vpop.permute.xlu0 %4459
    %4461 = vrot.lane.b32.xlu0 %v4412, 92
    %v4462 = vpop.permute.xlu0 %4461
    %4463 = vrot.lane.b32.xlu0 %v4413, 92
    %v4464 = vpop.permute.xlu0 %4463
    %v4465 = vsel %vm858, %v4432, %v4434
    %v4466 = vsel %vm858, %v4434, %v4436
    %v4467 = vsel %vm858, %v4436, %v4438
    %v4468 = vsel %vm858, %v4438, %v4440
    %v4469 = vsel %vm858, %v4440, %v4442
    %v4470 = vsel %vm858, %v4442, %v4444
    %v4471 = vsel %vm858, %v4444, %v4446
    %v4472 = vsel %vm858, %v4446, %v4448
    %v4473 = vsel %vm858, %v4448, %v4450
    %v4474 = vsel %vm858, %v4450, %v4452
    %v4475 = vsel %vm858, %v4452, %v4454
    %v4476 = vsel %vm858, %v4454, %v4456
    %v4477 = vsel %vm858, %v4456, %v4458
    %v4478 = vsel %vm858, %v4458, %v4460
    %v4479 = vsel %vm858, %v4460, %v4462
    %v4480 = vsel %vm858, %v4462, %v4464
    %v4497 = vadd.f32 %v4377, %v4465
    %v4498 = vadd.f32 %v4378, %v4466
    %v4499 = vadd.f32 %v4379, %v4467
    %v4500 = vadd.f32 %v4380, %v4468
    %v4501 = vadd.f32 %v4381, %v4469
    %v4502 = vadd.f32 %v4382, %v4470
    %v4503 = vadd.f32 %v4383, %v4471
    %v4504 = vadd.f32 %v4384, %v4472
    %v4505 = vadd.f32 %v4385, %v4473
    %v4506 = vadd.f32 %v4386, %v4474
    %v4507 = vadd.f32 %v4387, %v4475
    %v4508 = vadd.f32 %v4388, %v4476
    %v4509 = vadd.f32 %v4389, %v4477
    %v4510 = vadd.f32 %v4390, %v4478
    %v4511 = vadd.f32 %v4391, %v4479
    %v4512 = vadd.f32 %v4392, %v4480
    %4513 = vset.pattern.permute.xlu0 33
    %4514 = vperm.xlu0 %4513, %v50
    %v4515 = vpop.permute.xlu0 %4514
    %v4517 = vmul.f32 %v4515, %v3860
    %v4518 = vmul.f32 %v4515, %v3861
    %v4519 = vmul.f32 %v4515, %v3862
    %v4520 = vmul.f32 %v4515, %v3863
    %v4521 = vmul.f32 %v4515, %v3864
    %v4522 = vmul.f32 %v4515, %v3865
    %v4523 = vmul.f32 %v4515, %v3866
    %v4524 = vmul.f32 %v4515, %v3867
    %v4525 = vmul.f32 %v4515, %v3868
    %v4526 = vmul.f32 %v4515, %v3869
    %v4527 = vmul.f32 %v4515, %v3870
    %v4528 = vmul.f32 %v4515, %v3871
    %v4529 = vmul.f32 %v4515, %v3872
    %v4530 = vmul.f32 %v4515, %v3873
    %v4531 = vmul.f32 %v4515, %v3874
    %v4532 = vmul.f32 %v4515, %v3875
    %v4533 = vmul.f32 %v4515, %v3876
    %4551 = vrot.lane.b32.xlu0 %v4517, 60
    %v4552 = vpop.permute.xlu0 %4551
    %4553 = vrot.lane.b32.xlu0 %v4518, 60
    %v4554 = vpop.permute.xlu0 %4553
    %4555 = vrot.lane.b32.xlu0 %v4519, 60
    %v4556 = vpop.permute.xlu0 %4555
    %4557 = vrot.lane.b32.xlu0 %v4520, 60
    %v4558 = vpop.permute.xlu0 %4557
    %4559 = vrot.lane.b32.xlu0 %v4521, 60
    %v4560 = vpop.permute.xlu0 %4559
    %4561 = vrot.lane.b32.xlu0 %v4522, 60
    %v4562 = vpop.permute.xlu0 %4561
    %4563 = vrot.lane.b32.xlu0 %v4523, 60
    %v4564 = vpop.permute.xlu0 %4563
    %4565 = vrot.lane.b32.xlu0 %v4524, 60
    %v4566 = vpop.permute.xlu0 %4565
    %4567 = vrot.lane.b32.xlu0 %v4525, 60
    %v4568 = vpop.permute.xlu0 %4567
    %4569 = vrot.lane.b32.xlu0 %v4526, 60
    %v4570 = vpop.permute.xlu0 %4569
    %4571 = vrot.lane.b32.xlu0 %v4527, 60
    %v4572 = vpop.permute.xlu0 %4571
    %4573 = vrot.lane.b32.xlu0 %v4528, 60
    %v4574 = vpop.permute.xlu0 %4573
    %4575 = vrot.lane.b32.xlu0 %v4529, 60
    %v4576 = vpop.permute.xlu0 %4575
    %4577 = vrot.lane.b32.xlu0 %v4530, 60
    %v4578 = vpop.permute.xlu0 %4577
    %4579 = vrot.lane.b32.xlu0 %v4531, 60
    %v4580 = vpop.permute.xlu0 %4579
    %4581 = vrot.lane.b32.xlu0 %v4532, 60
    %v4582 = vpop.permute.xlu0 %4581
    %4583 = vrot.lane.b32.xlu0 %v4533, 60
    %v4584 = vpop.permute.xlu0 %4583
    %v4585 = vsel %vm979, %v4552, %v4554
    %v4586 = vsel %vm979, %v4554, %v4556
    %v4587 = vsel %vm979, %v4556, %v4558
    %v4588 = vsel %vm979, %v4558, %v4560
    %v4589 = vsel %vm979, %v4560, %v4562
    %v4590 = vsel %vm979, %v4562, %v4564
    %v4591 = vsel %vm979, %v4564, %v4566
    %v4592 = vsel %vm979, %v4566, %v4568
    %v4593 = vsel %vm979, %v4568, %v4570
    %v4594 = vsel %vm979, %v4570, %v4572
    %v4595 = vsel %vm979, %v4572, %v4574
    %v4596 = vsel %vm979, %v4574, %v4576
    %v4597 = vsel %vm979, %v4576, %v4578
    %v4598 = vsel %vm979, %v4578, %v4580
    %v4599 = vsel %vm979, %v4580, %v4582
    %v4600 = vsel %vm979, %v4582, %v4584
    %v4617 = vadd.f32 %v4497, %v4585
    %v4618 = vadd.f32 %v4498, %v4586
    %v4619 = vadd.f32 %v4499, %v4587
    %v4620 = vadd.f32 %v4500, %v4588
    %v4621 = vadd.f32 %v4501, %v4589
    %v4622 = vadd.f32 %v4502, %v4590
    %v4623 = vadd.f32 %v4503, %v4591
    %v4624 = vadd.f32 %v4504, %v4592
    %v4625 = vadd.f32 %v4505, %v4593
    %v4626 = vadd.f32 %v4506, %v4594
    %v4627 = vadd.f32 %v4507, %v4595
    %v4628 = vadd.f32 %v4508, %v4596
    %v4629 = vadd.f32 %v4509, %v4597
    %v4630 = vadd.f32 %v4510, %v4598
    %v4631 = vadd.f32 %v4511, %v4599
    %v4632 = vadd.f32 %v4512, %v4600
    %4633 = vset.pattern.permute.xlu0 34
    %4634 = vperm.xlu0 %4633, %v50
    %v4635 = vpop.permute.xlu0 %4634
    %v4637 = vmul.f32 %v4635, %v3860
    %v4638 = vmul.f32 %v4635, %v3861
    %v4639 = vmul.f32 %v4635, %v3862
    %v4640 = vmul.f32 %v4635, %v3863
    %v4641 = vmul.f32 %v4635, %v3864
    %v4642 = vmul.f32 %v4635, %v3865
    %v4643 = vmul.f32 %v4635, %v3866
    %v4644 = vmul.f32 %v4635, %v3867
    %v4645 = vmul.f32 %v4635, %v3868
    %v4646 = vmul.f32 %v4635, %v3869
    %v4647 = vmul.f32 %v4635, %v3870
    %v4648 = vmul.f32 %v4635, %v3871
    %v4649 = vmul.f32 %v4635, %v3872
    %v4650 = vmul.f32 %v4635, %v3873
    %v4651 = vmul.f32 %v4635, %v3874
    %v4652 = vmul.f32 %v4635, %v3875
    %v4653 = vmul.f32 %v4635, %v3876
    %4671 = vrot.lane.b32.xlu0 %v4637, 59
    %v4672 = vpop.permute.xlu0 %4671
    %4673 = vrot.lane.b32.xlu0 %v4638, 59
    %v4674 = vpop.permute.xlu0 %4673
    %4675 = vrot.lane.b32.xlu0 %v4639, 59
    %v4676 = vpop.permute.xlu0 %4675
    %4677 = vrot.lane.b32.xlu0 %v4640, 59
    %v4678 = vpop.permute.xlu0 %4677
    %4679 = vrot.lane.b32.xlu0 %v4641, 59
    %v4680 = vpop.permute.xlu0 %4679
    %4681 = vrot.lane.b32.xlu0 %v4642, 59
    %v4682 = vpop.permute.xlu0 %4681
    %4683 = vrot.lane.b32.xlu0 %v4643, 59
    %v4684 = vpop.permute.xlu0 %4683
    %4685 = vrot.lane.b32.xlu0 %v4644, 59
    %v4686 = vpop.permute.xlu0 %4685
    %4687 = vrot.lane.b32.xlu0 %v4645, 59
    %v4688 = vpop.permute.xlu0 %4687
    %4689 = vrot.lane.b32.xlu0 %v4646, 59
    %v4690 = vpop.permute.xlu0 %4689
    %4691 = vrot.lane.b32.xlu0 %v4647, 59
    %v4692 = vpop.permute.xlu0 %4691
    %4693 = vrot.lane.b32.xlu0 %v4648, 59
    %v4694 = vpop.permute.xlu0 %4693
    %4695 = vrot.lane.b32.xlu0 %v4649, 59
    %v4696 = vpop.permute.xlu0 %4695
    %4697 = vrot.lane.b32.xlu0 %v4650, 59
    %v4698 = vpop.permute.xlu0 %4697
    %4699 = vrot.lane.b32.xlu0 %v4651, 59
    %v4700 = vpop.permute.xlu0 %4699
    %4701 = vrot.lane.b32.xlu0 %v4652, 59
    %v4702 = vpop.permute.xlu0 %4701
    %4703 = vrot.lane.b32.xlu0 %v4653, 59
    %v4704 = vpop.permute.xlu0 %4703
    %v4705 = vsel %vm1100, %v4672, %v4674
    %v4706 = vsel %vm1100, %v4674, %v4676
    %v4707 = vsel %vm1100, %v4676, %v4678
    %v4708 = vsel %vm1100, %v4678, %v4680
    %v4709 = vsel %vm1100, %v4680, %v4682
    %v4710 = vsel %vm1100, %v4682, %v4684
    %v4711 = vsel %vm1100, %v4684, %v4686
    %v4712 = vsel %vm1100, %v4686, %v4688
    %v4713 = vsel %vm1100, %v4688, %v4690
    %v4714 = vsel %vm1100, %v4690, %v4692
    %v4715 = vsel %vm1100, %v4692, %v4694
    %v4716 = vsel %vm1100, %v4694, %v4696
    %v4717 = vsel %vm1100, %v4696, %v4698
    %v4718 = vsel %vm1100, %v4698, %v4700
    %v4719 = vsel %vm1100, %v4700, %v4702
    %v4720 = vsel %vm1100, %v4702, %v4704
    %v4737 = vadd.f32 %v4617, %v4705
    %v4738 = vadd.f32 %v4618, %v4706
    %v4739 = vadd.f32 %v4619, %v4707
    %v4740 = vadd.f32 %v4620, %v4708
    %v4741 = vadd.f32 %v4621, %v4709
    %v4742 = vadd.f32 %v4622, %v4710
    %v4743 = vadd.f32 %v4623, %v4711
    %v4744 = vadd.f32 %v4624, %v4712
    %v4745 = vadd.f32 %v4625, %v4713
    %v4746 = vadd.f32 %v4626, %v4714
    %v4747 = vadd.f32 %v4627, %v4715
    %v4748 = vadd.f32 %v4628, %v4716
    %v4749 = vadd.f32 %v4629, %v4717
    %v4750 = vadd.f32 %v4630, %v4718
    %v4751 = vadd.f32 %v4631, %v4719
    %v4752 = vadd.f32 %v4632, %v4720
    %4753 = vset.pattern.permute.xlu0 35
    %4754 = vperm.xlu0 %4753, %v50
    %v4755 = vpop.permute.xlu0 %4754
    %v4757 = vmul.f32 %v4755, %v3860
    %v4758 = vmul.f32 %v4755, %v3861
    %v4759 = vmul.f32 %v4755, %v3862
    %v4760 = vmul.f32 %v4755, %v3863
    %v4761 = vmul.f32 %v4755, %v3864
    %v4762 = vmul.f32 %v4755, %v3865
    %v4763 = vmul.f32 %v4755, %v3866
    %v4764 = vmul.f32 %v4755, %v3867
    %v4765 = vmul.f32 %v4755, %v3868
    %v4766 = vmul.f32 %v4755, %v3869
    %v4767 = vmul.f32 %v4755, %v3870
    %v4768 = vmul.f32 %v4755, %v3871
    %v4769 = vmul.f32 %v4755, %v3872
    %v4770 = vmul.f32 %v4755, %v3873
    %v4771 = vmul.f32 %v4755, %v3874
    %v4772 = vmul.f32 %v4755, %v3875
    %v4773 = vmul.f32 %v4755, %v3876
    %4791 = vrot.lane.b32.xlu0 %v4757, 58
    %v4792 = vpop.permute.xlu0 %4791
    %4793 = vrot.lane.b32.xlu0 %v4758, 58
    %v4794 = vpop.permute.xlu0 %4793
    %4795 = vrot.lane.b32.xlu0 %v4759, 58
    %v4796 = vpop.permute.xlu0 %4795
    %4797 = vrot.lane.b32.xlu0 %v4760, 58
    %v4798 = vpop.permute.xlu0 %4797
    %4799 = vrot.lane.b32.xlu0 %v4761, 58
    %v4800 = vpop.permute.xlu0 %4799
    %4801 = vrot.lane.b32.xlu0 %v4762, 58
    %v4802 = vpop.permute.xlu0 %4801
    %4803 = vrot.lane.b32.xlu0 %v4763, 58
    %v4804 = vpop.permute.xlu0 %4803
    %4805 = vrot.lane.b32.xlu0 %v4764, 58
    %v4806 = vpop.permute.xlu0 %4805
    %4807 = vrot.lane.b32.xlu0 %v4765, 58
    %v4808 = vpop.permute.xlu0 %4807
    %4809 = vrot.lane.b32.xlu0 %v4766, 58
    %v4810 = vpop.permute.xlu0 %4809
    %4811 = vrot.lane.b32.xlu0 %v4767, 58
    %v4812 = vpop.permute.xlu0 %4811
    %4813 = vrot.lane.b32.xlu0 %v4768, 58
    %v4814 = vpop.permute.xlu0 %4813
    %4815 = vrot.lane.b32.xlu0 %v4769, 58
    %v4816 = vpop.permute.xlu0 %4815
    %4817 = vrot.lane.b32.xlu0 %v4770, 58
    %v4818 = vpop.permute.xlu0 %4817
    %4819 = vrot.lane.b32.xlu0 %v4771, 58
    %v4820 = vpop.permute.xlu0 %4819
    %4821 = vrot.lane.b32.xlu0 %v4772, 58
    %v4822 = vpop.permute.xlu0 %4821
    %4823 = vrot.lane.b32.xlu0 %v4773, 58
    %v4824 = vpop.permute.xlu0 %4823
    %v4825 = vsel %vm1221, %v4792, %v4794
    %v4826 = vsel %vm1221, %v4794, %v4796
    %v4827 = vsel %vm1221, %v4796, %v4798
    %v4828 = vsel %vm1221, %v4798, %v4800
    %v4829 = vsel %vm1221, %v4800, %v4802
    %v4830 = vsel %vm1221, %v4802, %v4804
    %v4831 = vsel %vm1221, %v4804, %v4806
    %v4832 = vsel %vm1221, %v4806, %v4808
    %v4833 = vsel %vm1221, %v4808, %v4810
    %v4834 = vsel %vm1221, %v4810, %v4812
    %v4835 = vsel %vm1221, %v4812, %v4814
    %v4836 = vsel %vm1221, %v4814, %v4816
    %v4837 = vsel %vm1221, %v4816, %v4818
    %v4838 = vsel %vm1221, %v4818, %v4820
    %v4839 = vsel %vm1221, %v4820, %v4822
    %v4840 = vsel %vm1221, %v4822, %v4824
    %v4857 = vadd.f32 %v4737, %v4825
    %v4858 = vadd.f32 %v4738, %v4826
    %v4859 = vadd.f32 %v4739, %v4827
    %v4860 = vadd.f32 %v4740, %v4828
    %v4861 = vadd.f32 %v4741, %v4829
    %v4862 = vadd.f32 %v4742, %v4830
    %v4863 = vadd.f32 %v4743, %v4831
    %v4864 = vadd.f32 %v4744, %v4832
    %v4865 = vadd.f32 %v4745, %v4833
    %v4866 = vadd.f32 %v4746, %v4834
    %v4867 = vadd.f32 %v4747, %v4835
    %v4868 = vadd.f32 %v4748, %v4836
    %v4869 = vadd.f32 %v4749, %v4837
    %v4870 = vadd.f32 %v4750, %v4838
    %v4871 = vadd.f32 %v4751, %v4839
    %v4872 = vadd.f32 %v4752, %v4840
    %v4873 = vld [vmem:[#allocation7] sm:$0xff]
    %4875 = vset.pattern.permute.xlu0 0
    %4876 = vperm.xlu0 %4875, %v4873
    %v4877 = vpop.permute.xlu0 %4876
    %v4879 = vadd.f32 %v4857, %v4877
    %v4880 = vadd.f32 %v4858, %v4877
    %v4881 = vadd.f32 %v4859, %v4877
    %v4882 = vadd.f32 %v4860, %v4877
    %v4883 = vadd.f32 %v4861, %v4877
    %v4884 = vadd.f32 %v4862, %v4877
    %v4885 = vadd.f32 %v4863, %v4877
    %v4886 = vadd.f32 %v4864, %v4877
    %v4887 = vadd.f32 %v4865, %v4877
    %v4888 = vadd.f32 %v4866, %v4877
    %v4889 = vadd.f32 %v4867, %v4877
    %v4890 = vadd.f32 %v4868, %v4877
    %v4891 = vadd.f32 %v4869, %v4877
    %v4892 = vadd.f32 %v4870, %v4877
    %v4893 = vadd.f32 %v4871, %v4877
    %v4894 = vadd.f32 %v4872, %v4877
    %4895 = vst [vmem:[#allocation8] sm:$0xff] %v4879
    %4896 = vst [vmem:[#allocation8 + $0x8] sm:$0xff] %v4880
    %4897 = vst [vmem:[#allocation8 + $0x10] sm:$0xff] %v4881
    %4898 = vst [vmem:[#allocation8 + $0x18] sm:$0xff] %v4882
    %4899 = vst [vmem:[#allocation8 + $0x20] sm:$0xff] %v4883
    %4900 = vst [vmem:[#allocation8 + $0x28] sm:$0xff] %v4884
    %4901 = vst [vmem:[#allocation8 + $0x30] sm:$0xff] %v4885
    %4902 = vst [vmem:[#allocation8 + $0x38] sm:$0xff] %v4886
    %4903 = vst [vmem:[#allocation8 + $0x40] sm:$0xff] %v4887
    %4904 = vst [vmem:[#allocation8 + $0x48] sm:$0xff] %v4888
    %4905 = vst [vmem:[#allocation8 + $0x50] sm:$0xff] %v4889
    %4906 = vst [vmem:[#allocation8 + $0x58] sm:$0xff] %v4890
    %4907 = vst [vmem:[#allocation8 + $0x60] sm:$0xff] %v4891
    %4908 = vst [vmem:[#allocation8 + $0x68] sm:$0xff] %v4892
    %4909 = vst [vmem:[#allocation8 + $0x70] sm:$0xff] %v4893
    %4910 = vst [vmem:[#allocation8 + $0x78] sm:$0xff] %v4894
    // Predicated region
    $region26: #{tpu_custom_call.1} parent=1 // pred_check
      _
    $region27: #{tpu_custom_call.1} parent=1 // pred_check_branch
      %4912 = sbr.rel (0) target = $region29
    $region28: #{tpu_custom_call.1} parent=1 // pred_region
      %s4914 = ssub.s32 2048, 2048
      %4915 = vsyncadd [#allocation4], %s4914
      %s4917 = sshll.u32 [#allocation8], 4
      %s4918 = int_to_ptr.vmem [resolvable:$true] %s4917
      %4920 = dma.vmem_to_hbm [thread:$0]  %s4918, 2048, %s3, [#allocation4]
    $region29: #{tpu_custom_call.1} parent=1 // pred_fallthru
      _
    // Predicated region
    $region30: #{tpu_custom_call.1} parent=1 // pred_check
      _
    $region31: #{tpu_custom_call.1} parent=1 // pred_check_branch
      %4922 = sbr.rel (0) target = $region33
    $region32: #{tpu_custom_call.1} parent=1 // pred_region
      %4923 = dma.done [#allocation4], 2048
    $region33: #{tpu_custom_call.1} parent=1 // pred_fallthru
      _
    %4924 = vsyncpa [#allocation3], 1
    %4925 = vsyncpa [#allocation6], 1
    %4926 = vsyncpa [#allocation4], 1

</llo_original>
